<compile_context>
chip_gen: v6e
topology: v6e:2x2x1
jax: 0.10.0
libtpu: 0.0.40
codegen_flags: <defaults>
</compile_context>

<pallas_src>
import math

import jax
import jax.numpy as jnp
from jax import lax
from jax.experimental import pallas as pl
from jax.experimental.pallas import tpu as pltpu

# ----------------------------- config (small demo shapes) -----------------------------
BS = 2          # batch
S = 8           # seq length (decoder and encoder use the same seq here)
D = 32          # num_hiddens (d_model), also q/k/v size
H = 4           # num_heads
DH = D // H     # per-head dim
FFN_H = 64      # ffn_num_hiddens
LN_EPS = 1e-5
N = BS * S      # flattened (batch*seq) rows


# ----------------------------------- Pallas kernel ------------------------------------
def decoder_block_kernel(
    # inputs (all whole-array VMEM refs; no grid)
    enc_vl_ref,                    # (BS, 1) int32
    x_ref, enc_ref,                # (N, D) each
    wqkv1_ref, wo1_ref,            # (D, 3D), (D, D)   self-attention
    wq2_ref, wkv2_ref, wo2_ref,    # (D, D), (D, 2D), (D, D)   cross-attention
    wf1_ref, wf2_ref,              # (D, FFN_H), (FFN_H, D)    FFN
    vec_ref,                       # (8, FFN_H) stacked small params
    # output
    out_ref,                       # (N, D)
):
    Xf = x_ref[...]                # (N, D)
    ENCf = enc_ref[...]            # (N, D)

    # unpack the stacked small params
    vp = vec_ref[...]              # (8, FFN_H)
    g1, b1 = vp[0:1, :D], vp[1:2, :D]
    g2, b2 = vp[2:3, :D], vp[3:4, :D]
    g3, b3 = vp[4:5, :D], vp[5:6, :D]
    bf2 = vp[6:7, :D]
    bf1 = vp[7:8, :]

    inv_sqrt_dh = 1.0 / math.sqrt(DH)

    # ----- masks (head-batch index = h*BS + b) -----
    rows = lax.broadcasted_iota(jnp.int32, (S, S), 0)
    cols = lax.broadcasted_iota(jnp.int32, (S, S), 1)
    causal_mask = (cols <= rows)[None, :, :]                   # (1, S, S)

    enc_vl_rep = jnp.tile(enc_vl_ref[...], (H, 1))             # (H*BS, 1)
    col_hb = lax.broadcasted_iota(jnp.int32, (H * BS, S), 1)   # (H*BS, S)
    cross_mask = (col_hb < enc_vl_rep)[:, None, :]             # (H*BS, 1, S)

    # ----- helpers -----
    def split_heads(mat, col0):
        """mat: (N, >=col0+D) -> (H*BS, S, DH), head-major batch index h*BS+b."""
        heads = [
            mat[:, col0 + h * DH: col0 + (h + 1) * DH].reshape(BS, S, DH)
            for h in range(H)
        ]
        return jnp.concatenate(heads, axis=0)

    def attention(qh, kh, vh, mask):
        """qh/kh/vh: (H*BS, S, DH); mask broadcastable to (H*BS, S, S)."""
        s = jnp.einsum('bqd,bkd->bqk', qh, kh,
                       preferred_element_type=jnp.float32)     # (H*BS, S, S)
        s = jnp.where(mask, s, -1e6)
        m = jnp.max(s, axis=-1, keepdims=True)
        e = jnp.exp(s - m)
        denom = jnp.sum(e, axis=-1, keepdims=True)
        p = e * pl.reciprocal(denom, approx=True)              # EUP, not VALU divide
        return jnp.einsum('bqk,bkd->bqd', p, vh,
                          preferred_element_type=jnp.float32)  # (H*BS, S, DH)

    def merge_heads_project(o3, wo_ref):
        """(H*BS, S, DH) -> concat_heads @ W_o as head-batched matmul + sum."""
        o = o3.reshape(H, N, DH)                               # (H, N, DH)
        wo3 = wo_ref[...].reshape(H, DH, D)                    # (H, DH, D)
        proj = jnp.einsum('hnd,hdk->hnk', o, wo3,
                          preferred_element_type=jnp.float32)  # (H, N, D)
        return jnp.sum(proj, axis=0)                           # (N, D)

    def layer_norm(x, g, beta):
        mu = jnp.mean(x, axis=-1, keepdims=True)
        var = jnp.mean((x - mu) ** 2, axis=-1, keepdims=True)
        return (x - mu) * lax.rsqrt(var + LN_EPS) * g + beta

    # ----- 1) masked (causal) multi-head self-attention + AddNorm -----
    qkv1 = jnp.dot(Xf, wqkv1_ref[...], preferred_element_type=jnp.float32)  # (N, 3D)
    qh1 = split_heads(qkv1, 0) * inv_sqrt_dh
    kh1 = split_heads(qkv1, D)
    vh1 = split_heads(qkv1, 2 * D)
    att1 = merge_heads_project(attention(qh1, kh1, vh1, causal_mask), wo1_ref)
    Y = layer_norm(Xf + att1, g1, b1)

    # ----- 2) encoder-decoder cross-attention + AddNorm -----
    q2 = jnp.dot(Y, wq2_ref[...], preferred_element_type=jnp.float32)       # (N, D)
    kv2 = jnp.dot(ENCf, wkv2_ref[...], preferred_element_type=jnp.float32)  # (N, 2D)
    qh2 = split_heads(q2, 0) * inv_sqrt_dh
    kh2 = split_heads(kv2, 0)
    vh2 = split_heads(kv2, D)
    att2 = merge_heads_project(attention(qh2, kh2, vh2, cross_mask), wo2_ref)
    Z = layer_norm(Y + att2, g2, b2)

    # ----- 3) position-wise FFN + AddNorm -----
    h1 = jnp.maximum(
        jnp.dot(Z, wf1_ref[...], preferred_element_type=jnp.float32) + bf1, 0.0
    )
    ffn = jnp.dot(h1, wf2_ref[...], preferred_element_type=jnp.float32) + bf2
    out_ref[...] = layer_norm(Z + ffn, g3, b3)


# ----------------------------------- wrapper -------------------------------------------
def transformer_decoder_block(X, enc_outputs, enc_valid_lens, params):
    """X, enc_outputs: (BS, S, D) float32; enc_valid_lens: (BS,) int32."""
    # parameter repacking (small, one-off): fused QKV / KV weights + stacked vectors
    w_qkv1 = jnp.concatenate(
        [params["wq1"], params["wk1"], params["wv1"]], axis=1)   # (D, 3D)
    w_kv2 = jnp.concatenate([params["wk2"], params["wv2"]], axis=1)  # (D, 2D)

    def pad_to_ffn(v):
        v = v.reshape(-1)
        return jnp.pad(v, (0, FFN_H - v.shape[0]))

    vec_params = jnp.stack([
        pad_to_ffn(params["g1"]), pad_to_ffn(params["b1"]),
        pad_to_ffn(params["g2"]), pad_to_ffn(params["b2"]),
        pad_to_ffn(params["g3"]), pad_to_ffn(params["b3"]),
        pad_to_ffn(params["bf2"]), params["bf1"].reshape(-1),
    ]).astype(jnp.float32)                                       # (8, FFN_H)

    Xf = X.reshape(N, D)
    ENCf = enc_outputs.reshape(N, D)
    enc_vl = enc_valid_lens.reshape(BS, 1).astype(jnp.int32)

    inputs = [enc_vl, Xf, ENCf,
              w_qkv1, params["wo1"],
              params["wq2"], w_kv2, params["wo2"],
              params["wf1"], params["wf2"],
              vec_params]

    vmem = pl.BlockSpec(memory_space=pltpu.MemorySpace.VMEM)
    fn = pl.pallas_call(
        decoder_block_kernel,
        out_shape=jax.ShapeDtypeStruct((N, D), jnp.float32),
        in_specs=[vmem] * len(inputs),
        out_specs=vmem,
    )
    return fn(*inputs).reshape(BS, S, D)


# ----------------------------------- pure-JAX reference --------------------------------
def ref_block_single(x, enc, enc_len, params):
    """Per-batch reference (same math as the PyTorch forward, dropout=0)."""
    inv_sqrt_dh = 1.0 / math.sqrt(DH)
    rows = jnp.arange(S)[:, None]
    cols = jnp.arange(S)[None, :]
    causal_mask = cols <= rows
    cross_mask = jnp.broadcast_to(cols < enc_len, (S, S))

    def mha(q_in, kv_in, wq, wk, wv, wo, mask):
        q, k, v = q_in @ wq, kv_in @ wk, kv_in @ wv
        outs = []
        for h in range(H):
            sl = slice(h * DH, (h + 1) * DH)
            s = (q[:, sl] @ k[:, sl].T) * inv_sqrt_dh
            s = jnp.where(mask, s, -1e6)
            p = jax.nn.softmax(s, axis=-1)
            outs.append(p @ v[:, sl])
        return jnp.concatenate(outs, axis=-1) @ wo

    def layer_norm(x_, g, beta):
        mu = jnp.mean(x_, axis=-1, keepdims=True)
        var = jnp.mean((x_ - mu) ** 2, axis=-1, keepdims=True)
        return (x_ - mu) / jnp.sqrt(var + LN_EPS) * g + beta

    att1 = mha(x, x, params["wq1"], params["wk1"], params["wv1"], params["wo1"], causal_mask)
    Y = layer_norm(x + att1, params["g1"], params["b1"])
    att2 = mha(Y, enc, params["wq2"], params["wk2"], params["wv2"], params["wo2"], cross_mask)
    Z = layer_norm(Y + att2, params["g2"], params["b2"])
    h1 = jnp.maximum(Z @ params["wf1"] + params["bf1"], 0.0)
    ffn = h1 @ params["wf2"] + params["bf2"]
    return layer_norm(Z + ffn, params["g3"], params["b3"])


# ----------------------------------- main -----------------------------------------------
if __name__ == "__main__":
    key = jax.random.PRNGKey(0)
    ks = jax.random.split(key, 24)

    def nrm(k, shape, scale=0.1):
        return (scale * jax.random.normal(k, shape)).astype(jnp.float32)

    params = {
        # self-attention (Linear weights stored as (in, out), no bias — use_bias=False)
        "wq1": nrm(ks[0], (D, D)), "wk1": nrm(ks[1], (D, D)),
        "wv1": nrm(ks[2], (D, D)), "wo1": nrm(ks[3], (D, D)),
        "g1": (1.0 + 0.01 * jax.random.normal(ks[4], (1, D))).astype(jnp.float32),
        "b1": nrm(ks[5], (1, D), 0.01),
        # cross-attention
        "wq2": nrm(ks[6], (D, D)), "wk2": nrm(ks[7], (D, D)),
        "wv2": nrm(ks[8], (D, D)), "wo2": nrm(ks[9], (D, D)),
        "g2": (1.0 + 0.01 * jax.random.normal(ks[10], (1, D))).astype(jnp.float32),
        "b2": nrm(ks[11], (1, D), 0.01),
        # position-wise FFN (with bias, as nn.Linear default)
        "wf1": nrm(ks[12], (D, FFN_H)), "bf1": nrm(ks[13], (1, FFN_H), 0.01),
        "wf2": nrm(ks[14], (FFN_H, D)), "bf2": nrm(ks[15], (1, D), 0.01),
        "g3": (1.0 + 0.01 * jax.random.normal(ks[16], (1, D))).astype(jnp.float32),
        "b3": nrm(ks[17], (1, D), 0.01),
    }

    X = jax.random.normal(ks[18], (BS, S, D), dtype=jnp.float32)
    enc_outputs = jax.random.normal(ks[19], (BS, S, D), dtype=jnp.float32)
    enc_valid_lens = jnp.array([8, 5], dtype=jnp.int32)

    out = transformer_decoder_block(X, enc_outputs, enc_valid_lens, params)
    out = jax.block_until_ready(out)

    # sanity check against a pure-JAX reference of the same math
    # (tolerance is relaxed slightly because the kernel normalises the softmax
    #  with the EUP approximate reciprocal).
    ref = jnp.stack(
        [ref_block_single(X[b], enc_outputs[b], enc_valid_lens[b], params) for b in range(BS)]
    )
    assert out.shape == (BS, S, D)
    err = float(jnp.max(jnp.abs(out - ref)))
    assert jnp.allclose(out, ref, atol=5e-3, rtol=5e-3), f"mismatch vs reference (max |err|={err})"

    print("KERNEL_OK")
</pallas_src>

<mosaic_0001>
module attributes {stable_mosaic.version = 11 : i64} {
  func.func @decoder_block_kernel(%arg0: memref<2x1xi32, #tpu.memory_space<vmem>>, %arg1: memref<16x32xf32, #tpu.memory_space<vmem>>, %arg2: memref<16x32xf32, #tpu.memory_space<vmem>>, %arg3: memref<32x96xf32, #tpu.memory_space<vmem>>, %arg4: memref<32x32xf32, #tpu.memory_space<vmem>>, %arg5: memref<32x32xf32, #tpu.memory_space<vmem>>, %arg6: memref<32x64xf32, #tpu.memory_space<vmem>>, %arg7: memref<32x32xf32, #tpu.memory_space<vmem>>, %arg8: memref<32x64xf32, #tpu.memory_space<vmem>>, %arg9: memref<64x32xf32, #tpu.memory_space<vmem>>, %arg10: memref<8x64xf32, #tpu.memory_space<vmem>>, %arg11: memref<16x32xf32, #tpu.memory_space<vmem>>) attributes {dimension_semantics = [], scalar_prefetch = 0 : i64, scratch_operands = 0 : i64, tpu.core_type = #tpu.core_type<tc>} {
    %c0 = arith.constant 0 : index
    %c0_0 = arith.constant 0 : index
    %0 = vector.load %arg1[%c0, %c0_0] : memref<16x32xf32, #tpu.memory_space<vmem>>, vector<16x32xf32>
    %c0_1 = arith.constant 0 : index
    %c0_2 = arith.constant 0 : index
    %1 = vector.load %arg2[%c0_1, %c0_2] : memref<16x32xf32, #tpu.memory_space<vmem>>, vector<16x32xf32>
    %c0_3 = arith.constant 0 : index
    %c0_4 = arith.constant 0 : index
    %2 = vector.load %arg10[%c0_3, %c0_4] : memref<8x64xf32, #tpu.memory_space<vmem>>, vector<8x64xf32>
    %3 = vector.extract_strided_slice %2 {offsets = [0, 0], sizes = [1, 32], strides = [1, 1]} : vector<8x64xf32> to vector<1x32xf32>
    %4 = vector.extract_strided_slice %2 {offsets = [1, 0], sizes = [1, 32], strides = [1, 1]} : vector<8x64xf32> to vector<1x32xf32>
    %5 = vector.extract_strided_slice %2 {offsets = [2, 0], sizes = [1, 32], strides = [1, 1]} : vector<8x64xf32> to vector<1x32xf32>
    %6 = vector.extract_strided_slice %2 {offsets = [3, 0], sizes = [1, 32], strides = [1, 1]} : vector<8x64xf32> to vector<1x32xf32>
    %7 = vector.extract_strided_slice %2 {offsets = [4, 0], sizes = [1, 32], strides = [1, 1]} : vector<8x64xf32> to vector<1x32xf32>
    %8 = vector.extract_strided_slice %2 {offsets = [5, 0], sizes = [1, 32], strides = [1, 1]} : vector<8x64xf32> to vector<1x32xf32>
    %9 = vector.extract_strided_slice %2 {offsets = [6, 0], sizes = [1, 32], strides = [1, 1]} : vector<8x64xf32> to vector<1x32xf32>
    %10 = vector.extract_strided_slice %2 {offsets = [7, 0], sizes = [1, 64], strides = [1, 1]} : vector<8x64xf32> to vector<1x64xf32>
    %11 = tpu.iota {dimensions = array<i32: 0>} : vector<8x8xi32>
    %12 = tpu.iota {dimensions = array<i32: 1>} : vector<8x8xi32>
    %13 = arith.cmpi sle, %12, %11 : vector<8x8xi32>
    %14 = vector.shape_cast %13 : vector<8x8xi1> to vector<1x8x8xi1>
    %c0_5 = arith.constant 0 : index
    %c0_6 = arith.constant 0 : index
    %15 = vector.load %arg0[%c0_5, %c0_6] : memref<2x1xi32, #tpu.memory_space<vmem>>, vector<2x1xi32>
    %16 = tpu.concatenate %15, %15, %15, %15 in 0 : vector<2x1xi32>, vector<2x1xi32>, vector<2x1xi32>, vector<2x1xi32> -> vector<8x1xi32>
    %17 = tpu.iota {dimensions = array<i32: 1>} : vector<8x8xi32>
    %18 = vector.broadcast %16 : vector<8x1xi32> to vector<8x8xi32>
    %19 = arith.cmpi slt, %17, %18 : vector<8x8xi32>
    %20 = vector.shape_cast %19 : vector<8x8xi1> to vector<8x1x8xi1>
    %c0_7 = arith.constant 0 : index
    %c0_8 = arith.constant 0 : index
    %21 = vector.load %arg3[%c0_7, %c0_8] : memref<32x96xf32, #tpu.memory_space<vmem>>, vector<32x96xf32>
    %cst = arith.constant dense<0.000000e+00> : vector<16x96xf32>
    %22 = tpu.matmul %0, %21, %cst {dimension_numbers = #tpu.dot_dimension_numbers<[1], [0], [0], [1], [0, 0, 1, 1], [], []>} : vector<16x32xf32>, vector<32x96xf32>, vector<16x96xf32> -> vector<16x96xf32>
    %23 = vector.extract_strided_slice %22 {offsets = [0, 0], sizes = [16, 8], strides = [1, 1]} : vector<16x96xf32> to vector<16x8xf32>
    %24 = vector.shape_cast %23 : vector<16x8xf32> to vector<2x8x8xf32>
    %25 = vector.extract_strided_slice %22 {offsets = [0, 8], sizes = [16, 8], strides = [1, 1]} : vector<16x96xf32> to vector<16x8xf32>
    %26 = vector.shape_cast %25 : vector<16x8xf32> to vector<2x8x8xf32>
    %27 = vector.extract_strided_slice %22 {offsets = [0, 16], sizes = [16, 8], strides = [1, 1]} : vector<16x96xf32> to vector<16x8xf32>
    %28 = vector.shape_cast %27 : vector<16x8xf32> to vector<2x8x8xf32>
    %29 = vector.extract_strided_slice %22 {offsets = [0, 24], sizes = [16, 8], strides = [1, 1]} : vector<16x96xf32> to vector<16x8xf32>
    %30 = vector.shape_cast %29 : vector<16x8xf32> to vector<2x8x8xf32>
    %31 = tpu.concatenate %24, %26, %28, %30 in 0 : vector<2x8x8xf32>, vector<2x8x8xf32>, vector<2x8x8xf32>, vector<2x8x8xf32> -> vector<8x8x8xf32>
    %cst_9 = arith.constant 0.353553385 : f32
    %32 = vector.broadcast %cst_9 : f32 to vector<8x8x8xf32>
    %33 = arith.mulf %31, %32 : vector<8x8x8xf32>
    %34 = vector.extract_strided_slice %22 {offsets = [0, 32], sizes = [16, 8], strides = [1, 1]} : vector<16x96xf32> to vector<16x8xf32>
    %35 = vector.shape_cast %34 : vector<16x8xf32> to vector<2x8x8xf32>
    %36 = vector.extract_strided_slice %22 {offsets = [0, 40], sizes = [16, 8], strides = [1, 1]} : vector<16x96xf32> to vector<16x8xf32>
    %37 = vector.shape_cast %36 : vector<16x8xf32> to vector<2x8x8xf32>
    %38 = vector.extract_strided_slice %22 {offsets = [0, 48], sizes = [16, 8], strides = [1, 1]} : vector<16x96xf32> to vector<16x8xf32>
    %39 = vector.shape_cast %38 : vector<16x8xf32> to vector<2x8x8xf32>
    %40 = vector.extract_strided_slice %22 {offsets = [0, 56], sizes = [16, 8], strides = [1, 1]} : vector<16x96xf32> to vector<16x8xf32>
    %41 = vector.shape_cast %40 : vector<16x8xf32> to vector<2x8x8xf32>
    %42 = tpu.concatenate %35, %37, %39, %41 in 0 : vector<2x8x8xf32>, vector<2x8x8xf32>, vector<2x8x8xf32>, vector<2x8x8xf32> -> vector<8x8x8xf32>
    %43 = vector.extract_strided_slice %22 {offsets = [0, 64], sizes = [16, 8], strides = [1, 1]} : vector<16x96xf32> to vector<16x8xf32>
    %44 = vector.shape_cast %43 : vector<16x8xf32> to vector<2x8x8xf32>
    %45 = vector.extract_strided_slice %22 {offsets = [0, 72], sizes = [16, 8], strides = [1, 1]} : vector<16x96xf32> to vector<16x8xf32>
    %46 = vector.shape_cast %45 : vector<16x8xf32> to vector<2x8x8xf32>
    %47 = vector.extract_strided_slice %22 {offsets = [0, 80], sizes = [16, 8], strides = [1, 1]} : vector<16x96xf32> to vector<16x8xf32>
    %48 = vector.shape_cast %47 : vector<16x8xf32> to vector<2x8x8xf32>
    %49 = vector.extract_strided_slice %22 {offsets = [0, 88], sizes = [16, 8], strides = [1, 1]} : vector<16x96xf32> to vector<16x8xf32>
    %50 = vector.shape_cast %49 : vector<16x8xf32> to vector<2x8x8xf32>
    %51 = tpu.concatenate %44, %46, %48, %50 in 0 : vector<2x8x8xf32>, vector<2x8x8xf32>, vector<2x8x8xf32>, vector<2x8x8xf32> -> vector<8x8x8xf32>
    "tpu.trace_start"() <{level = 10 : i32, message = "bqd,bkd->bqk"}> : () -> ()
    %cst_10 = arith.constant dense<0.000000e+00> : vector<8x8x8xf32>
    %52 = tpu.matmul %33, %42, %cst_10 {dimension_numbers = #tpu.dot_dimension_numbers<[2], [2], [1], [1], [0, 0, 0, 1, 1, 1], [0], [0]>} : vector<8x8x8xf32>, vector<8x8x8xf32>, vector<8x8x8xf32> -> vector<8x8x8xf32>
    %cst_11 = arith.constant -1.000000e+06 : f32
    "tpu.trace_stop"() : () -> ()
    %53 = vector.shape_cast %14 : vector<1x8x8xi1> to vector<1x8x8xi1>
    %54 = vector.broadcast %53 : vector<1x8x8xi1> to vector<8x8x8xi1>
    %55 = vector.broadcast %cst_11 : f32 to vector<8x8x8xf32>
    %56 = arith.select %54, %52, %55 : vector<8x8x8xi1>, vector<8x8x8xf32>
    %cst_12 = arith.constant dense<0xFF800000> : vector<8x8xf32>
    %57 = vector.multi_reduction <maximumf>, %56, %cst_12 [2] : vector<8x8x8xf32> to vector<8x8xf32>
    %58 = vector.shape_cast %57 : vector<8x8xf32> to vector<8x8x1xf32>
    %59 = vector.broadcast %58 : vector<8x8x1xf32> to vector<8x8x8xf32>
    %60 = arith.subf %56, %59 : vector<8x8x8xf32>
    %61 = math.exp %60 : vector<8x8x8xf32>
    %cst_13 = arith.constant dense<0.000000e+00> : vector<8x8xf32>
    %62 = vector.multi_reduction <add>, %61, %cst_13 [2] : vector<8x8x8xf32> to vector<8x8xf32>
    %63 = vector.shape_cast %62 : vector<8x8xf32> to vector<8x8x1xf32>
    %64 = tpu.reciprocal %63 {approx = true} : vector<8x8x1xf32> -> vector<8x8x1xf32>
    %65 = vector.broadcast %64 : vector<8x8x1xf32> to vector<8x8x8xf32>
    %66 = arith.mulf %61, %65 : vector<8x8x8xf32>
    "tpu.trace_start"() <{level = 10 : i32, message = "bqk,bkd->bqd"}> : () -> ()
    %cst_14 = arith.constant dense<0.000000e+00> : vector<8x8x8xf32>
    %67 = tpu.matmul %66, %51, %cst_14 {dimension_numbers = #tpu.dot_dimension_numbers<[2], [1], [1], [2], [0, 0, 0, 1, 1, 2], [0], [0]>} : vector<8x8x8xf32>, vector<8x8x8xf32>, vector<8x8x8xf32> -> vector<8x8x8xf32>
    "tpu.trace_stop"() : () -> ()
    %68 = vector.shape_cast %67 : vector<8x8x8xf32> to vector<4x16x8xf32>
    %c0_15 = arith.constant 0 : index
    %c0_16 = arith.constant 0 : index
    %69 = vector.load %arg4[%c0_15, %c0_16] : memref<32x32xf32, #tpu.memory_space<vmem>>, vector<32x32xf32>
    %70 = vector.shape_cast %69 : vector<32x32xf32> to vector<4x8x32xf32>
    "tpu.trace_start"() <{level = 10 : i32, message = "hnd,hdk->hnk"}> : () -> ()
    %cst_17 = arith.constant dense<0.000000e+00> : vector<4x16x32xf32>
    %71 = tpu.matmul %68, %70, %cst_17 {dimension_numbers = #tpu.dot_dimension_numbers<[2], [1], [1], [2], [0, 0, 0, 1, 1, 2], [0], [0]>} : vector<4x16x8xf32>, vector<4x8x32xf32>, vector<4x16x32xf32> -> vector<4x16x32xf32>
    "tpu.trace_stop"() : () -> ()
    %cst_18 = arith.constant dense<0.000000e+00> : vector<16x32xf32>
    %72 = vector.multi_reduction <add>, %71, %cst_18 [0] : vector<4x16x32xf32> to vector<16x32xf32>
    %73 = arith.addf %0, %72 : vector<16x32xf32>
    %cst_19 = arith.constant dense<0.000000e+00> : vector<16xf32>
    %74 = vector.multi_reduction <add>, %73, %cst_19 [1] : vector<16x32xf32> to vector<16xf32>
    %75 = vector.shape_cast %74 : vector<16xf32> to vector<16x1xf32>
    %cst_20 = arith.constant 3.200000e+01 : f32
    %76 = vector.broadcast %cst_20 : f32 to vector<16x1xf32>
    %77 = arith.divf %75, %76 : vector<16x1xf32>
    %78 = vector.broadcast %77 : vector<16x1xf32> to vector<16x32xf32>
    %79 = arith.subf %73, %78 : vector<16x32xf32>
    %80 = arith.mulf %79, %79 : vector<16x32xf32>
    %cst_21 = arith.constant dense<0.000000e+00> : vector<16xf32>
    %81 = vector.multi_reduction <add>, %80, %cst_21 [1] : vector<16x32xf32> to vector<16xf32>
    %82 = vector.shape_cast %81 : vector<16xf32> to vector<16x1xf32>
    %cst_22 = arith.constant 3.200000e+01 : f32
    %83 = vector.broadcast %cst_22 : f32 to vector<16x1xf32>
    %84 = arith.divf %82, %83 : vector<16x1xf32>
    %85 = vector.broadcast %77 : vector<16x1xf32> to vector<16x32xf32>
    %86 = arith.subf %73, %85 : vector<16x32xf32>
    %cst_23 = arith.constant 9.99999974E-6 : f32
    %87 = vector.broadcast %cst_23 : f32 to vector<16x1xf32>
    %88 = arith.addf %84, %87 : vector<16x1xf32>
    %89 = math.rsqrt %88 : vector<16x1xf32>
    %90 = vector.broadcast %89 : vector<16x1xf32> to vector<16x32xf32>
    %91 = arith.mulf %86, %90 : vector<16x32xf32>
    %92 = vector.broadcast %3 : vector<1x32xf32> to vector<16x32xf32>
    %93 = arith.mulf %91, %92 : vector<16x32xf32>
    %94 = vector.broadcast %4 : vector<1x32xf32> to vector<16x32xf32>
    %95 = arith.addf %93, %94 : vector<16x32xf32>
    %c0_24 = arith.constant 0 : index
    %c0_25 = arith.constant 0 : index
    %96 = vector.load %arg5[%c0_24, %c0_25] : memref<32x32xf32, #tpu.memory_space<vmem>>, vector<32x32xf32>
    %cst_26 = arith.constant dense<0.000000e+00> : vector<16x32xf32>
    %97 = tpu.matmul %95, %96, %cst_26 {dimension_numbers = #tpu.dot_dimension_numbers<[1], [0], [0], [1], [0, 0, 1, 1], [], []>} : vector<16x32xf32>, vector<32x32xf32>, vector<16x32xf32> -> vector<16x32xf32>
    %c0_27 = arith.constant 0 : index
    %c0_28 = arith.constant 0 : index
    %98 = vector.load %arg6[%c0_27, %c0_28] : memref<32x64xf32, #tpu.memory_space<vmem>>, vector<32x64xf32>
    %cst_29 = arith.constant dense<0.000000e+00> : vector<16x64xf32>
    %99 = tpu.matmul %1, %98, %cst_29 {dimension_numbers = #tpu.dot_dimension_numbers<[1], [0], [0], [1], [0, 0, 1, 1], [], []>} : vector<16x32xf32>, vector<32x64xf32>, vector<16x64xf32> -> vector<16x64xf32>
    %100 = vector.extract_strided_slice %97 {offsets = [0, 0], sizes = [16, 8], strides = [1, 1]} : vector<16x32xf32> to vector<16x8xf32>
    %101 = vector.shape_cast %100 : vector<16x8xf32> to vector<2x8x8xf32>
    %102 = vector.extract_strided_slice %97 {offsets = [0, 8], sizes = [16, 8], strides = [1, 1]} : vector<16x32xf32> to vector<16x8xf32>
    %103 = vector.shape_cast %102 : vector<16x8xf32> to vector<2x8x8xf32>
    %104 = vector.extract_strided_slice %97 {offsets = [0, 16], sizes = [16, 8], strides = [1, 1]} : vector<16x32xf32> to vector<16x8xf32>
    %105 = vector.shape_cast %104 : vector<16x8xf32> to vector<2x8x8xf32>
    %106 = vector.extract_strided_slice %97 {offsets = [0, 24], sizes = [16, 8], strides = [1, 1]} : vector<16x32xf32> to vector<16x8xf32>
    %107 = vector.shape_cast %106 : vector<16x8xf32> to vector<2x8x8xf32>
    %108 = tpu.concatenate %101, %103, %105, %107 in 0 : vector<2x8x8xf32>, vector<2x8x8xf32>, vector<2x8x8xf32>, vector<2x8x8xf32> -> vector<8x8x8xf32>
    %cst_30 = arith.constant 0.353553385 : f32
    %109 = vector.broadcast %cst_30 : f32 to vector<8x8x8xf32>
    %110 = arith.mulf %108, %109 : vector<8x8x8xf32>
    %111 = vector.extract_strided_slice %99 {offsets = [0, 0], sizes = [16, 8], strides = [1, 1]} : vector<16x64xf32> to vector<16x8xf32>
    %112 = vector.shape_cast %111 : vector<16x8xf32> to vector<2x8x8xf32>
    %113 = vector.extract_strided_slice %99 {offsets = [0, 8], sizes = [16, 8], strides = [1, 1]} : vector<16x64xf32> to vector<16x8xf32>
    %114 = vector.shape_cast %113 : vector<16x8xf32> to vector<2x8x8xf32>
    %115 = vector.extract_strided_slice %99 {offsets = [0, 16], sizes = [16, 8], strides = [1, 1]} : vector<16x64xf32> to vector<16x8xf32>
    %116 = vector.shape_cast %115 : vector<16x8xf32> to vector<2x8x8xf32>
    %117 = vector.extract_strided_slice %99 {offsets = [0, 24], sizes = [16, 8], strides = [1, 1]} : vector<16x64xf32> to vector<16x8xf32>
    %118 = vector.shape_cast %117 : vector<16x8xf32> to vector<2x8x8xf32>
    %119 = tpu.concatenate %112, %114, %116, %118 in 0 : vector<2x8x8xf32>, vector<2x8x8xf32>, vector<2x8x8xf32>, vector<2x8x8xf32> -> vector<8x8x8xf32>
    %120 = vector.extract_strided_slice %99 {offsets = [0, 32], sizes = [16, 8], strides = [1, 1]} : vector<16x64xf32> to vector<16x8xf32>
    %121 = vector.shape_cast %120 : vector<16x8xf32> to vector<2x8x8xf32>
    %122 = vector.extract_strided_slice %99 {offsets = [0, 40], sizes = [16, 8], strides = [1, 1]} : vector<16x64xf32> to vector<16x8xf32>
    %123 = vector.shape_cast %122 : vector<16x8xf32> to vector<2x8x8xf32>
    %124 = vector.extract_strided_slice %99 {offsets = [0, 48], sizes = [16, 8], strides = [1, 1]} : vector<16x64xf32> to vector<16x8xf32>
    %125 = vector.shape_cast %124 : vector<16x8xf32> to vector<2x8x8xf32>
    %126 = vector.extract_strided_slice %99 {offsets = [0, 56], sizes = [16, 8], strides = [1, 1]} : vector<16x64xf32> to vector<16x8xf32>
    %127 = vector.shape_cast %126 : vector<16x8xf32> to vector<2x8x8xf32>
    %128 = tpu.concatenate %121, %123, %125, %127 in 0 : vector<2x8x8xf32>, vector<2x8x8xf32>, vector<2x8x8xf32>, vector<2x8x8xf32> -> vector<8x8x8xf32>
    "tpu.trace_start"() <{level = 10 : i32, message = "bqd,bkd->bqk"}> : () -> ()
    %cst_31 = arith.constant dense<0.000000e+00> : vector<8x8x8xf32>
    %129 = tpu.matmul %110, %119, %cst_31 {dimension_numbers = #tpu.dot_dimension_numbers<[2], [2], [1], [1], [0, 0, 0, 1, 1, 1], [0], [0]>} : vector<8x8x8xf32>, vector<8x8x8xf32>, vector<8x8x8xf32> -> vector<8x8x8xf32>
    %cst_32 = arith.constant -1.000000e+06 : f32
    "tpu.trace_stop"() : () -> ()
    %130 = vector.shape_cast %20 : vector<8x1x8xi1> to vector<8x1x8xi1>
    %131 = vector.broadcast %130 : vector<8x1x8xi1> to vector<8x8x8xi1>
    %132 = vector.broadcast %cst_32 : f32 to vector<8x8x8xf32>
    %133 = arith.select %131, %129, %132 : vector<8x8x8xi1>, vector<8x8x8xf32>
    %cst_33 = arith.constant dense<0xFF800000> : vector<8x8xf32>
    %134 = vector.multi_reduction <maximumf>, %133, %cst_33 [2] : vector<8x8x8xf32> to vector<8x8xf32>
    %135 = vector.shape_cast %134 : vector<8x8xf32> to vector<8x8x1xf32>
    %136 = vector.broadcast %135 : vector<8x8x1xf32> to vector<8x8x8xf32>
    %137 = arith.subf %133, %136 : vector<8x8x8xf32>
    %138 = math.exp %137 : vector<8x8x8xf32>
    %cst_34 = arith.constant dense<0.000000e+00> : vector<8x8xf32>
    %139 = vector.multi_reduction <add>, %138, %cst_34 [2] : vector<8x8x8xf32> to vector<8x8xf32>
    %140 = vector.shape_cast %139 : vector<8x8xf32> to vector<8x8x1xf32>
    %141 = tpu.reciprocal %140 {approx = true} : vector<8x8x1xf32> -> vector<8x8x1xf32>
    %142 = vector.broadcast %141 : vector<8x8x1xf32> to vector<8x8x8xf32>
    %143 = arith.mulf %138, %142 : vector<8x8x8xf32>
    "tpu.trace_start"() <{level = 10 : i32, message = "bqk,bkd->bqd"}> : () -> ()
    %cst_35 = arith.constant dense<0.000000e+00> : vector<8x8x8xf32>
    %144 = tpu.matmul %143, %128, %cst_35 {dimension_numbers = #tpu.dot_dimension_numbers<[2], [1], [1], [2], [0, 0, 0, 1, 1, 2], [0], [0]>} : vector<8x8x8xf32>, vector<8x8x8xf32>, vector<8x8x8xf32> -> vector<8x8x8xf32>
    "tpu.trace_stop"() : () -> ()
    %145 = vector.shape_cast %144 : vector<8x8x8xf32> to vector<4x16x8xf32>
    %c0_36 = arith.constant 0 : index
    %c0_37 = arith.constant 0 : index
    %146 = vector.load %arg7[%c0_36, %c0_37] : memref<32x32xf32, #tpu.memory_space<vmem>>, vector<32x32xf32>
    %147 = vector.shape_cast %146 : vector<32x32xf32> to vector<4x8x32xf32>
    "tpu.trace_start"() <{level = 10 : i32, message = "hnd,hdk->hnk"}> : () -> ()
    %cst_38 = arith.constant dense<0.000000e+00> : vector<4x16x32xf32>
    %148 = tpu.matmul %145, %147, %cst_38 {dimension_numbers = #tpu.dot_dimension_numbers<[2], [1], [1], [2], [0, 0, 0, 1, 1, 2], [0], [0]>} : vector<4x16x8xf32>, vector<4x8x32xf32>, vector<4x16x32xf32> -> vector<4x16x32xf32>
    "tpu.trace_stop"() : () -> ()
    %cst_39 = arith.constant dense<0.000000e+00> : vector<16x32xf32>
    %149 = vector.multi_reduction <add>, %148, %cst_39 [0] : vector<4x16x32xf32> to vector<16x32xf32>
    %150 = arith.addf %95, %149 : vector<16x32xf32>
    %cst_40 = arith.constant dense<0.000000e+00> : vector<16xf32>
    %151 = vector.multi_reduction <add>, %150, %cst_40 [1] : vector<16x32xf32> to vector<16xf32>
    %152 = vector.shape_cast %151 : vector<16xf32> to vector<16x1xf32>
    %cst_41 = arith.constant 3.200000e+01 : f32
    %153 = vector.broadcast %cst_41 : f32 to vector<16x1xf32>
    %154 = arith.divf %152, %153 : vector<16x1xf32>
    %155 = vector.broadcast %154 : vector<16x1xf32> to vector<16x32xf32>
    %156 = arith.subf %150, %155 : vector<16x32xf32>
    %157 = arith.mulf %156, %156 : vector<16x32xf32>
    %cst_42 = arith.constant dense<0.000000e+00> : vector<16xf32>
    %158 = vector.multi_reduction <add>, %157, %cst_42 [1] : vector<16x32xf32> to vector<16xf32>
    %159 = vector.shape_cast %158 : vector<16xf32> to vector<16x1xf32>
    %cst_43 = arith.constant 3.200000e+01 : f32
    %160 = vector.broadcast %cst_43 : f32 to vector<16x1xf32>
    %161 = arith.divf %159, %160 : vector<16x1xf32>
    %162 = vector.broadcast %154 : vector<16x1xf32> to vector<16x32xf32>
    %163 = arith.subf %150, %162 : vector<16x32xf32>
    %cst_44 = arith.constant 9.99999974E-6 : f32
    %164 = vector.broadcast %cst_44 : f32 to vector<16x1xf32>
    %165 = arith.addf %161, %164 : vector<16x1xf32>
    %166 = math.rsqrt %165 : vector<16x1xf32>
    %167 = vector.broadcast %166 : vector<16x1xf32> to vector<16x32xf32>
    %168 = arith.mulf %163, %167 : vector<16x32xf32>
    %169 = vector.broadcast %5 : vector<1x32xf32> to vector<16x32xf32>
    %170 = arith.mulf %168, %169 : vector<16x32xf32>
    %171 = vector.broadcast %6 : vector<1x32xf32> to vector<16x32xf32>
    %172 = arith.addf %170, %171 : vector<16x32xf32>
    %c0_45 = arith.constant 0 : index
    %c0_46 = arith.constant 0 : index
    %173 = vector.load %arg8[%c0_45, %c0_46] : memref<32x64xf32, #tpu.memory_space<vmem>>, vector<32x64xf32>
    %cst_47 = arith.constant dense<0.000000e+00> : vector<16x64xf32>
    %174 = tpu.matmul %172, %173, %cst_47 {dimension_numbers = #tpu.dot_dimension_numbers<[1], [0], [0], [1], [0, 0, 1, 1], [], []>} : vector<16x32xf32>, vector<32x64xf32>, vector<16x64xf32> -> vector<16x64xf32>
    %175 = vector.broadcast %10 : vector<1x64xf32> to vector<16x64xf32>
    %176 = arith.addf %174, %175 : vector<16x64xf32>
    %cst_48 = arith.constant 0.000000e+00 : f32
    %177 = vector.broadcast %cst_48 : f32 to vector<16x64xf32>
    %178 = arith.maximumf %176, %177 : vector<16x64xf32>
    %c0_49 = arith.constant 0 : index
    %c0_50 = arith.constant 0 : index
    %179 = vector.load %arg9[%c0_49, %c0_50] : memref<64x32xf32, #tpu.memory_space<vmem>>, vector<64x32xf32>
    %cst_51 = arith.constant dense<0.000000e+00> : vector<16x32xf32>
    %180 = tpu.matmul %178, %179, %cst_51 {dimension_numbers = #tpu.dot_dimension_numbers<[1], [0], [0], [1], [0, 0, 1, 1], [], []>} : vector<16x64xf32>, vector<64x32xf32>, vector<16x32xf32> -> vector<16x32xf32>
    %181 = vector.broadcast %9 : vector<1x32xf32> to vector<16x32xf32>
    %182 = arith.addf %180, %181 : vector<16x32xf32>
    %183 = arith.addf %172, %182 : vector<16x32xf32>
    %cst_52 = arith.constant dense<0.000000e+00> : vector<16xf32>
    %184 = vector.multi_reduction <add>, %183, %cst_52 [1] : vector<16x32xf32> to vector<16xf32>
    %185 = vector.shape_cast %184 : vector<16xf32> to vector<16x1xf32>
    %cst_53 = arith.constant 3.200000e+01 : f32
    %186 = vector.broadcast %cst_53 : f32 to vector<16x1xf32>
    %187 = arith.divf %185, %186 : vector<16x1xf32>
    %188 = vector.broadcast %187 : vector<16x1xf32> to vector<16x32xf32>
    %189 = arith.subf %183, %188 : vector<16x32xf32>
    %190 = arith.mulf %189, %189 : vector<16x32xf32>
    %cst_54 = arith.constant dense<0.000000e+00> : vector<16xf32>
    %191 = vector.multi_reduction <add>, %190, %cst_54 [1] : vector<16x32xf32> to vector<16xf32>
    %192 = vector.shape_cast %191 : vector<16xf32> to vector<16x1xf32>
    %cst_55 = arith.constant 3.200000e+01 : f32
    %193 = vector.broadcast %cst_55 : f32 to vector<16x1xf32>
    %194 = arith.divf %192, %193 : vector<16x1xf32>
    %195 = vector.broadcast %187 : vector<16x1xf32> to vector<16x32xf32>
    %196 = arith.subf %183, %195 : vector<16x32xf32>
    %cst_56 = arith.constant 9.99999974E-6 : f32
    %197 = vector.broadcast %cst_56 : f32 to vector<16x1xf32>
    %198 = arith.addf %194, %197 : vector<16x1xf32>
    %199 = math.rsqrt %198 : vector<16x1xf32>
    %200 = vector.broadcast %199 : vector<16x1xf32> to vector<16x32xf32>
    %201 = arith.mulf %196, %200 : vector<16x32xf32>
    %202 = vector.broadcast %7 : vector<1x32xf32> to vector<16x32xf32>
    %203 = arith.mulf %201, %202 : vector<16x32xf32>
    %204 = vector.broadcast %8 : vector<1x32xf32> to vector<16x32xf32>
    %205 = arith.addf %203, %204 : vector<16x32xf32>
    %c0_57 = arith.constant 0 : index
    %c0_58 = arith.constant 0 : index
    %206 = vector.load %arg11[%c0_57, %c0_58] : memref<16x32xf32, #tpu.memory_space<vmem>>, vector<16x32xf32>
    tpu.vector_store %arg11[%c0_57, %c0_58], %205 {strides = array<i32>} : memref<16x32xf32, #tpu.memory_space<vmem>>, vector<16x32xf32>,
    return
  }
}

</mosaic_0001>

<llo_original>
// kernel: tpu_custom_call.1
$region0: #{tpu_custom_call.1}
  #allocation0 [shape = 'u32[]', space=smem, size = 0x4, offset = 0x4, fixed_abs, tag = 'smem constant byte address 0x4 - core index']
  #allocation1 [shape = 'u32[144,128]{1,0:T(1,128)}', space=vmem, size = 0x12000, scoped, tag = 'internal scratch']
  %s0 = inlined_call_operand.vmem [shape: s32[2,1], index: 0, kind: input, shape index: {}]
  %s1 = inlined_call_operand.hbm [shape: f32[16,32], index: 1, kind: input, shape index: {}]
  %s2 = inlined_call_operand.hbm [shape: f32[16,32], index: 2, kind: input, shape index: {}]
  %s3 = inlined_call_operand.vmem [shape: f32[32,96], index: 3, kind: input, shape index: {}]
  %s4 = inlined_call_operand.vmem [shape: f32[32,32], index: 4, kind: input, shape index: {}]
  %s5 = inlined_call_operand.vmem [shape: f32[32,32], index: 5, kind: input, shape index: {}]
  %s6 = inlined_call_operand.hbm [shape: f32[32,64], index: 6, kind: input, shape index: {}]
  %s7 = inlined_call_operand.hbm [shape: f32[32,32], index: 7, kind: input, shape index: {}]
  %s8 = inlined_call_operand.hbm [shape: f32[32,64], index: 8, kind: input, shape index: {}]
  %s9 = inlined_call_operand.vmem [shape: f32[64,32], index: 9, kind: input, shape index: {}]
  %s10 = inlined_call_operand.vmem [shape: f32[8,64], index: 10, kind: input, shape index: {}]
  %s11 = inlined_call_operand.hbm [shape: f32[16,32], index: 11, kind: output, shape index: {}]
  %s12 = sld [smem:[#allocation0]]
  $region74: #{tpu_custom_call.1} parent=0
    _
  %s14 = ssub.s32 1, %s12
  %s15 = scalar_select 0, %s14, %s12
  $region1: #{tpu_custom_call.1} parent=0
    #allocation2 [shape = 'u8[8192]{0}', space=vmem, size = 0x2000, scoped, tag = 'input window, operand 1, single buffered']
    #allocation3 [shape = 's32[1]{0}', space=sflag, size = 0x4, scoped, tag = 'scoped memory for tpu_custom_call.1']
    #allocation4 [shape = 's32[1]{0}', space=sflag, size = 0x4, scoped, tag = 'scoped memory for tpu_custom_call.1']
    #allocation5 [shape = 'u8[8192]{0}', space=vmem, size = 0x2000, scoped, tag = 'input window, operand 2, single buffered']
    #allocation6 [shape = 's32[1]{0}', space=sflag, size = 0x4, scoped, tag = 'scoped memory for tpu_custom_call.1']
    #allocation7 [shape = 'u8[16384]{0}', space=vmem, size = 0x4000, scoped, tag = 'input window, operand 6, single buffered']
    #allocation8 [shape = 'u8[16384]{0}', space=vmem, size = 0x4000, scoped, tag = 'input window, operand 7, single buffered']
    #allocation9 [shape = 's32[1]{0}', space=sflag, size = 0x4, scoped, tag = 'scoped memory for tpu_custom_call.1']
    #allocation10 [shape = 'u8[16384]{0}', space=vmem, size = 0x4000, scoped, tag = 'input window, operand 8, single buffered']
    #allocation11 [shape = 'u8[8192]{0}', space=vmem, size = 0x2000, scoped, tag = 'output window, operand 0, single buffered']
    %16 = vsyncpa [#allocation3], 0
    %17 = vsyncpa [#allocation6], 0
    %18 = vsyncpa [#allocation9], 0
    %19 = vsyncpa [#allocation4], 0
    // Predicated region
    $region2: #{tpu_custom_call.1} parent=1 // pred_check
      _
    $region3: #{tpu_custom_call.1} parent=1 // pred_check_branch
      %21 = sbr.rel (0) target = $region5
    $region4: #{tpu_custom_call.1} parent=1 // pred_region
      _
    $region5: #{tpu_custom_call.1} parent=1 // pred_fallthru
      _
    // Predicated region
    $region6: #{tpu_custom_call.1} parent=1 // pred_check
      _
    $region7: #{tpu_custom_call.1} parent=1 // pred_check_branch
      %23 = sbr.rel (0) target = $region9
    $region8: #{tpu_custom_call.1} parent=1 // pred_region
      %s25 = ssub.s32 256, 256
      %26 = vsyncadd [#allocation3], %s25
      %s27 = sshll.u32 [#allocation2], 4
      %s28 = int_to_ptr.vmem [resolvable:$true] %s27
      %33 = dma.hbm_to_vmem [thread:$0]  %s1, 256, %s28, [#allocation3], 128, 128, 8
    $region9: #{tpu_custom_call.1} parent=1 // pred_fallthru
      _
    // Predicated region
    $region10: #{tpu_custom_call.1} parent=1 // pred_check
      _
    $region11: #{tpu_custom_call.1} parent=1 // pred_check_branch
      %35 = sbr.rel (0) target = $region13
    $region12: #{tpu_custom_call.1} parent=1 // pred_region
      %s37 = ssub.s32 256, 256
      %38 = vsyncadd [#allocation6], %s37
      %s39 = sshll.u32 [#allocation5], 4
      %s40 = int_to_ptr.vmem [resolvable:$true] %s39
      %45 = dma.hbm_to_vmem [thread:$0]  %s2, 256, %s40, [#allocation6], 128, 128, 8
    $region13: #{tpu_custom_call.1} parent=1 // pred_fallthru
      _
    // Predicated region
    $region14: #{tpu_custom_call.1} parent=1 // pred_check
      _
    $region15: #{tpu_custom_call.1} parent=1 // pred_check_branch
      %47 = sbr.rel (0) target = $region17
    $region16: #{tpu_custom_call.1} parent=1 // pred_region
      _
    $region17: #{tpu_custom_call.1} parent=1 // pred_fallthru
      _
    // Predicated region
    $region18: #{tpu_custom_call.1} parent=1 // pred_check
      _
    $region19: #{tpu_custom_call.1} parent=1 // pred_check_branch
      %49 = sbr.rel (0) target = $region21
    $region20: #{tpu_custom_call.1} parent=1 // pred_region
      _
    $region21: #{tpu_custom_call.1} parent=1 // pred_fallthru
      _
    // Predicated region
    $region22: #{tpu_custom_call.1} parent=1 // pred_check
      _
    $region23: #{tpu_custom_call.1} parent=1 // pred_check_branch
      %51 = sbr.rel (0) target = $region25
    $region24: #{tpu_custom_call.1} parent=1 // pred_region
      _
    $region25: #{tpu_custom_call.1} parent=1 // pred_fallthru
      _
    // Predicated region
    $region26: #{tpu_custom_call.1} parent=1 // pred_check
      _
    $region27: #{tpu_custom_call.1} parent=1 // pred_check_branch
      %53 = sbr.rel (0) target = $region29
    $region28: #{tpu_custom_call.1} parent=1 // pred_region
      %s55 = ssub.s32 512, 512
      %56 = vsyncadd [#allocation6], %s55
      %s57 = sshll.u32 [#allocation7], 4
      %s58 = int_to_ptr.vmem [resolvable:$true] %s57
      %63 = dma.hbm_to_vmem [thread:$0]  %s6, 512, %s58, [#allocation6], 128, 128, 8
    $region29: #{tpu_custom_call.1} parent=1 // pred_fallthru
      _
    // Predicated region
    $region30: #{tpu_custom_call.1} parent=1 // pred_check
      _
    $region31: #{tpu_custom_call.1} parent=1 // pred_check_branch
      %65 = sbr.rel (0) target = $region33
    $region32: #{tpu_custom_call.1} parent=1 // pred_region
      %s67 = ssub.s32 512, 512
      %68 = vsyncadd [#allocation9], %s67
      %s69 = sshll.u32 [#allocation8], 4
      %s70 = int_to_ptr.vmem [resolvable:$true] %s69
      %75 = dma.hbm_to_vmem [thread:$0]  %s7, 512, %s70, [#allocation9], 128, 128, 8
    $region33: #{tpu_custom_call.1} parent=1 // pred_fallthru
      _
    // Predicated region
    $region34: #{tpu_custom_call.1} parent=1 // pred_check
      _
    $region35: #{tpu_custom_call.1} parent=1 // pred_check_branch
      %77 = sbr.rel (0) target = $region37
    $region36: #{tpu_custom_call.1} parent=1 // pred_region
      %s79 = ssub.s32 512, 512
      %80 = vsyncadd [#allocation9], %s79
      %s81 = sshll.u32 [#allocation10], 4
      %s82 = int_to_ptr.vmem [resolvable:$true] %s81
      %87 = dma.hbm_to_vmem [thread:$0]  %s8, 512, %s82, [#allocation9], 128, 128, 8
    $region37: #{tpu_custom_call.1} parent=1 // pred_fallthru
      _
    // Predicated region
    $region38: #{tpu_custom_call.1} parent=1 // pred_check
      _
    $region39: #{tpu_custom_call.1} parent=1 // pred_check_branch
      %89 = sbr.rel (0) target = $region41
    $region40: #{tpu_custom_call.1} parent=1 // pred_region
      _
    $region41: #{tpu_custom_call.1} parent=1 // pred_fallthru
      _
    // Predicated region
    $region42: #{tpu_custom_call.1} parent=1 // pred_check
      _
    $region43: #{tpu_custom_call.1} parent=1 // pred_check_branch
      %91 = sbr.rel (0) target = $region45
    $region44: #{tpu_custom_call.1} parent=1 // pred_region
      _
    $region45: #{tpu_custom_call.1} parent=1 // pred_fallthru
      _
    // Predicated region
    $region46: #{tpu_custom_call.1} parent=1 // pred_check
      _
    $region47: #{tpu_custom_call.1} parent=1 // pred_check_branch
      %93 = sbr.rel (0) target = $region49
    $region48: #{tpu_custom_call.1} parent=1 // pred_region
      %94 = dma.done [#allocation3], 256
    $region49: #{tpu_custom_call.1} parent=1 // pred_fallthru
      _
    // Predicated region
    $region50: #{tpu_custom_call.1} parent=1 // pred_check
      _
    $region51: #{tpu_custom_call.1} parent=1 // pred_check_branch
      %96 = sbr.rel (0) target = $region53
    $region52: #{tpu_custom_call.1} parent=1 // pred_region
      %97 = dma.done [#allocation6], 256
    $region53: #{tpu_custom_call.1} parent=1 // pred_fallthru
      _
    // Predicated region
    $region54: #{tpu_custom_call.1} parent=1 // pred_check
      _
    $region55: #{tpu_custom_call.1} parent=1 // pred_check_branch
      %99 = sbr.rel (0) target = $region57
    $region56: #{tpu_custom_call.1} parent=1 // pred_region
      %100 = dma.done [#allocation6], 512
    $region57: #{tpu_custom_call.1} parent=1 // pred_fallthru
      _
    // Predicated region
    $region58: #{tpu_custom_call.1} parent=1 // pred_check
      _
    $region59: #{tpu_custom_call.1} parent=1 // pred_check_branch
      %102 = sbr.rel (0) target = $region61
    $region60: #{tpu_custom_call.1} parent=1 // pred_region
      %103 = dma.done [#allocation9], 512
    $region61: #{tpu_custom_call.1} parent=1 // pred_fallthru
      _
    // Predicated region
    $region62: #{tpu_custom_call.1} parent=1 // pred_check
      _
    $region63: #{tpu_custom_call.1} parent=1 // pred_check_branch
      %105 = sbr.rel (0) target = $region65
    $region64: #{tpu_custom_call.1} parent=1 // pred_region
      %106 = dma.done [#allocation9], 512
    $region65: #{tpu_custom_call.1} parent=1 // pred_fallthru
      _
    %v107 = vld [vmem:[#allocation2] sm:$0xff]
    %v108 = vld [vmem:[#allocation2 + $0x8] sm:$0xff]
    %v109 = vld [vmem:[#allocation5] sm:$0xff]
    %v110 = vld [vmem:[#allocation5 + $0x8] sm:$0xff]
    %v111 = vld [vmem:[%s10] sm:$0xff]
    %v112 = vlaneseq
    %v113 = vshrl.u32 %v112, 7
    %v114 = vlaneseq
    %v115 = vand.u32 %v114, 127
    %vm116 = vcmp.le.s32.totalorder %v115, %v113
    %v117 = vld [vmem:[%s0] sm:$0x3]
    %v118 = vrot.slane %v117, 6
    %v119 = vrot.slane %v117, 4
    %v120 = vrot.slane %v117, 2
    %vm121 = vcmask 1041408
    %v122 = vsel %vm121, %v117, %v118
    %vm123 = vcmask 1043456
    %v124 = vsel %vm123, %v122, %v119
    %vm125 = vcmask 1045504
    %v126 = vsel %vm125, %v124, %v120
    %127 = vset.pattern.permute.xlu0 0
    %128 = vperm.xlu0 %127, %v126
    %v129 = vpop.permute.xlu0 %128
    %vm130 = vcmp.lt.s32.totalorder %v115, %v129
    %v131 = vsel %vm130, 1, 0
    %v132 = vcombine.high %v131, %v131
    %v134 = vunpack.c.l.s4 1966171168
    %v135 = vunpack.c.0.s8 %v134
    %v136 = vlaneseq
    %v137 = vshrl.u32 %v136, 7
    %v138 = vsub.s32 %v135, %v137
    %v139 = vrot.slane %v131, %v138
    %v141 = vunpack.c.l.s4 1966171168
    %v142 = vunpack.c.0.s8 %v141
    %v143 = vlaneseq
    %v144 = vshrl.u32 %v143, 7
    %v145 = vsub.s32 %v142, %v144
    %v146 = vrot.slane %v132, %v145
    %v147 = vcombine.high %v139, %v139
    %v148 = vcombine.high %v146, %v146
    %v150 = vunpack.c.l.s4 1966171168
    %v151 = vunpack.c.0.s8 %v150
    %v152 = vlaneseq
    %v153 = vshrl.u32 %v152, 7
    %v154 = vsub.s32 %v151, %v153
    %v155 = vrot.slane %v139, %v154
    %v157 = vunpack.c.l.s4 1966171168
    %v158 = vunpack.c.0.s8 %v157
    %v159 = vlaneseq
    %v160 = vshrl.u32 %v159, 7
    %v161 = vsub.s32 %v158, %v160
    %v162 = vrot.slane %v146, %v161
    %v164 = vunpack.c.l.s4 1966171168
    %v165 = vunpack.c.0.s8 %v164
    %v166 = vlaneseq
    %v167 = vshrl.u32 %v166, 7
    %v168 = vsub.s32 %v165, %v167
    %v169 = vrot.slane %v147, %v168
    %v171 = vunpack.c.l.s4 1966171168
    %v172 = vunpack.c.0.s8 %v171
    %v173 = vlaneseq
    %v174 = vshrl.u32 %v173, 7
    %v175 = vsub.s32 %v172, %v174
    %v176 = vrot.slane %v148, %v175
    %v177 = vcombine.high %v155, %v155
    %v178 = vcombine.high %v162, %v162
    %v179 = vcombine.high %v169, %v169
    %v180 = vcombine.high %v176, %v176
    %vm181 = vcmp.ne.s32.totalorder %v155, 0
    %vm182 = vcmp.ne.s32.totalorder %v169, 0
    %vm183 = vcmp.ne.s32.totalorder %v177, 0
    %vm184 = vcmp.ne.s32.totalorder %v179, 0
    %vm185 = vcmp.ne.s32.totalorder %v162, 0
    %vm186 = vcmp.ne.s32.totalorder %v176, 0
    %vm187 = vcmp.ne.s32.totalorder %v178, 0
    %vm188 = vcmp.ne.s32.totalorder %v180, 0
    %v189 = vld [vmem:[%s3] sm:$0xff]
    %v190 = vld [vmem:[%s3 + $0x8] sm:$0xff]
    %v191 = vld [vmem:[%s3 + $0x10] sm:$0xff]
    %v192 = vld [vmem:[%s3 + $0x18] sm:$0xff]
    %vm193 = vcmask 261120
    %v195 = vsel %vm193, %v107, 0
    %v198 = vsel %vm193, %v108, 0
    %200 = vmatprep.subr.mxu0 0.0
    %201 = vmatpush1.msra.mxu0 0.0
    %202 = vmatprep.subr.mxu0 0.0
    %203 = vmatpush1.msra.mxu0 0.0
    %204 = vmatprep.subr.mxu0 0.0
    %205 = vmatpush1.msra.mxu0 0.0
    %206 = vmatprep.subr.mxu0 0.0
    %207 = vmatpush1.msra.mxu0 0.0
    %208 = vmatprep.subr.mxu0 0.0
    %209 = vmatpush1.msra.mxu0 0.0
    %210 = vmatprep.subr.mxu0 0.0
    %211 = vmatpush1.msra.mxu0 0.0
    %212 = vmatprep.subr.mxu0 0.0
    %213 = vmatpush1.msra.mxu0 0.0
    %214 = vmatprep.subr.mxu0 0.0
    %215 = vmatpush1.msra.mxu0 0.0
    %216 = vmatprep.subr.mxu0 0.0
    %217 = vmatpush1.msra.mxu0 0.0
    %218 = vmatprep.subr.mxu0 0.0
    %219 = vmatpush1.msra.mxu0 0.0
    %220 = vmatprep.subr.mxu0 0.0
    %221 = vmatpush1.msra.mxu0 0.0
    %222 = vmatprep.subr.mxu0 0.0
    %223 = vmatpush1.msra.mxu0 0.0
    %224 = vmatprep.subr.mxu0 0.0
    %225 = vmatpush1.msra.mxu0 %v192
    %226 = vmatprep.subr.mxu0 0.0
    %227 = vmatpush1.msra.mxu0 %v191
    %228 = vmatprep.subr.mxu0 0.0
    %229 = vmatpush1.msra.mxu0 %v190
    %230 = vmatprep.subr.mxu0 0.0
    %231 = vmatpush1.msra.mxu0 %v189
    %232 = vmatprep.subr.mxu0 0.0
    %233 = vmatpush2.msra.mxu0 0.0
    %234 = vmatprep.subr.mxu0 0.0
    %235 = vmatpush2.msra.mxu0 0.0
    %236 = vmatprep.subr.mxu0 0.0
    %237 = vmatpush2.msra.mxu0 0.0
    %238 = vmatprep.subr.mxu0 0.0
    %239 = vmatpush2.msra.mxu0 0.0
    %240 = vmatprep.subr.mxu0 0.0
    %241 = vmatpush2.msra.mxu0 0.0
    %242 = vmatprep.subr.mxu0 0.0
    %243 = vmatpush2.msra.mxu0 0.0
    %244 = vmatprep.subr.mxu0 0.0
    %245 = vmatpush2.msra.mxu0 0.0
    %246 = vmatprep.subr.mxu0 0.0
    %247 = vmatpush2.msra.mxu0 0.0
    %248 = vmatprep.subr.mxu0 0.0
    %249 = vmatpush2.msra.mxu0 0.0
    %250 = vmatprep.subr.mxu0 0.0
    %251 = vmatpush2.msra.mxu0 0.0
    %252 = vmatprep.subr.mxu0 0.0
    %253 = vmatpush2.msra.mxu0 0.0
    %254 = vmatprep.subr.mxu0 0.0
    %255 = vmatpush2.msra.mxu0 0.0
    %256 = vmatprep.subr.mxu0 0.0
    %257 = vmatpush2.msra.mxu0 0.0
    %258 = vmatprep.subr.mxu0 0.0
    %259 = vmatpush2.msra.mxu0 0.0
    %260 = vmatprep.subr.mxu0 0.0
    %261 = vmatpush2.msra.mxu0 0.0
    %262 = vmatprep.subr.mxu0 0.0
    %263 = vmatpush2.msra.mxu0 0.0
    %264 = vmatprep.mubr.f32.mxu0 0.0
    %265 = vmatmul.mubr.f32.gmra.mxu0 %v195
    %v266 = vpop.f32.mrf.mxu0
    %v267 = vadd.f32 0.0, %v266
    %v268 = vpop.f32.mrf.mxu0
    %269 = vmatprep.mubr.f32.mxu0 0.0
    %270 = vmatmul.mubr.f32.gmra.mxu0 %v198
    %v271 = vpop.f32.mrf.mxu0
    %v272 = vadd.f32 0.0, %v271
    %v273 = vpop.f32.mrf.mxu0
    %274 = vdwg.mxu0
    %277 = vrot.lane.b32.xlu0 %v267, 120
    %v278 = vpop.permute.xlu0 %277
    %279 = vrot.lane.b32.xlu0 %v272, 120
    %v280 = vpop.permute.xlu0 %279
    %283 = vrot.lane.b32.xlu0 %v267, 112
    %v284 = vpop.permute.xlu0 %283
    %285 = vrot.lane.b32.xlu0 %v272, 112
    %v286 = vpop.permute.xlu0 %285
    %289 = vrot.lane.b32.xlu0 %v267, 104
    %v290 = vpop.permute.xlu0 %289
    %291 = vrot.lane.b32.xlu0 %v272, 104
    %v292 = vpop.permute.xlu0 %291
    %v295 = vmul.f32 %v267, 0.35355338
    %v296 = vmul.f32 %v272, 0.35355338
    %v297 = vmul.f32 %v278, 0.35355338
    %v298 = vmul.f32 %v280, 0.35355338
    %v299 = vmul.f32 %v284, 0.35355338
    %v300 = vmul.f32 %v286, 0.35355338
    %v301 = vmul.f32 %v290, 0.35355338
    %v302 = vmul.f32 %v292, 0.35355338
    %303 = vrot.lane.b32.xlu0 %v267, 96
    %v304 = vpop.permute.xlu0 %303
    %vm305 = vcmask 64512
    %v307 = vsel %vm305, %v295, 0
    %v309 = vsel %vm305, %v304, 0
    %311 = vmatprep.subr.mxu0 0.0
    %312 = vmatpush1.xpose.msra.mxu0 0.0
    %313 = vmatprep.subr.mxu0 0.0
    %314 = vmatpush1.xpose.msra.mxu0 0.0
    %315 = vmatprep.subr.mxu0 0.0
    %316 = vmatpush1.xpose.msra.mxu0 0.0
    %317 = vmatprep.subr.mxu0 0.0
    %318 = vmatpush1.xpose.msra.mxu0 0.0
    %319 = vmatprep.subr.mxu0 0.0
    %320 = vmatpush1.xpose.msra.mxu0 0.0
    %321 = vmatprep.subr.mxu0 0.0
    %322 = vmatpush1.xpose.msra.mxu0 0.0
    %323 = vmatprep.subr.mxu0 0.0
    %324 = vmatpush1.xpose.msra.mxu0 0.0
    %325 = vmatprep.subr.mxu0 0.0
    %326 = vmatpush1.xpose.msra.mxu0 0.0
    %327 = vmatprep.subr.mxu0 0.0
    %328 = vmatpush1.xpose.msra.mxu0 0.0
    %329 = vmatprep.subr.mxu0 0.0
    %330 = vmatpush1.xpose.msra.mxu0 0.0
    %331 = vmatprep.subr.mxu0 0.0
    %332 = vmatpush1.xpose.msra.mxu0 0.0
    %333 = vmatprep.subr.mxu0 0.0
    %334 = vmatpush1.xpose.msra.mxu0 0.0
    %335 = vmatprep.subr.mxu0 0.0
    %336 = vmatpush1.xpose.msra.mxu0 0.0
    %337 = vmatprep.subr.mxu0 0.0
    %338 = vmatpush1.xpose.msra.mxu0 0.0
    %339 = vmatprep.subr.mxu0 0.0
    %340 = vmatpush1.xpose.msra.mxu0 0.0
    %341 = vmatprep.subr.mxu0 0.0
    %342 = vmatpush1.xpose.msra.mxu0 %v309
    %343 = vmatprep.subr.mxu0 0.0
    %344 = vmatpush2.xpose.msra.mxu0 0.0
    %345 = vmatprep.subr.mxu0 0.0
    %346 = vmatpush2.xpose.msra.mxu0 0.0
    %347 = vmatprep.subr.mxu0 0.0
    %348 = vmatpush2.xpose.msra.mxu0 0.0
    %349 = vmatprep.subr.mxu0 0.0
    %350 = vmatpush2.xpose.msra.mxu0 0.0
    %351 = vmatprep.subr.mxu0 0.0
    %352 = vmatpush2.xpose.msra.mxu0 0.0
    %353 = vmatprep.subr.mxu0 0.0
    %354 = vmatpush2.xpose.msra.mxu0 0.0
    %355 = vmatprep.subr.mxu0 0.0
    %356 = vmatpush2.xpose.msra.mxu0 0.0
    %357 = vmatprep.subr.mxu0 0.0
    %358 = vmatpush2.xpose.msra.mxu0 0.0
    %359 = vmatprep.subr.mxu0 0.0
    %360 = vmatpush2.xpose.msra.mxu0 0.0
    %361 = vmatprep.subr.mxu0 0.0
    %362 = vmatpush2.xpose.msra.mxu0 0.0
    %363 = vmatprep.subr.mxu0 0.0
    %364 = vmatpush2.xpose.msra.mxu0 0.0
    %365 = vmatprep.subr.mxu0 0.0
    %366 = vmatpush2.xpose.msra.mxu0 0.0
    %367 = vmatprep.subr.mxu0 0.0
    %368 = vmatpush2.xpose.msra.mxu0 0.0
    %369 = vmatprep.subr.mxu0 0.0
    %370 = vmatpush2.xpose.msra.mxu0 0.0
    %371 = vmatprep.subr.mxu0 0.0
    %372 = vmatpush2.xpose.msra.mxu0 0.0
    %373 = vmatprep.subr.mxu0 0.0
    %374 = vmatpush2.xpose.msra.mxu0 0.0
    %375 = vmatprep.mubr.f32.mxu0 0.0
    %376 = vmatmul.mubr.f32.gmra.mxu0 %v307
    %v377 = vpop.f32.mrf.mxu0
    %v378 = vadd.f32 0.0, %v377
    %v379 = vpop.f32.mrf.mxu0
    %380 = vdwg.mxu0
    %381 = vrot.lane.b32.xlu0 %v272, 96
    %v382 = vpop.permute.xlu0 %381
    %v384 = vsel %vm305, %v296, 0
    %v386 = vsel %vm305, %v382, 0
    %388 = vmatprep.subr.mxu0 0.0
    %389 = vmatpush1.xpose.msra.mxu0 0.0
    %390 = vmatprep.subr.mxu0 0.0
    %391 = vmatpush1.xpose.msra.mxu0 0.0
    %392 = vmatprep.subr.mxu0 0.0
    %393 = vmatpush1.xpose.msra.mxu0 0.0
    %394 = vmatprep.subr.mxu0 0.0
    %395 = vmatpush1.xpose.msra.mxu0 0.0
    %396 = vmatprep.subr.mxu0 0.0
    %397 = vmatpush1.xpose.msra.mxu0 0.0
    %398 = vmatprep.subr.mxu0 0.0
    %399 = vmatpush1.xpose.msra.mxu0 0.0
    %400 = vmatprep.subr.mxu0 0.0
    %401 = vmatpush1.xpose.msra.mxu0 0.0
    %402 = vmatprep.subr.mxu0 0.0
    %403 = vmatpush1.xpose.msra.mxu0 0.0
    %404 = vmatprep.subr.mxu0 0.0
    %405 = vmatpush1.xpose.msra.mxu0 0.0
    %406 = vmatprep.subr.mxu0 0.0
    %407 = vmatpush1.xpose.msra.mxu0 0.0
    %408 = vmatprep.subr.mxu0 0.0
    %409 = vmatpush1.xpose.msra.mxu0 0.0
    %410 = vmatprep.subr.mxu0 0.0
    %411 = vmatpush1.xpose.msra.mxu0 0.0
    %412 = vmatprep.subr.mxu0 0.0
    %413 = vmatpush1.xpose.msra.mxu0 0.0
    %414 = vmatprep.subr.mxu0 0.0
    %415 = vmatpush1.xpose.msra.mxu0 0.0
    %416 = vmatprep.subr.mxu0 0.0
    %417 = vmatpush1.xpose.msra.mxu0 0.0
    %418 = vmatprep.subr.mxu0 0.0
    %419 = vmatpush1.xpose.msra.mxu0 %v386
    %420 = vmatprep.subr.mxu0 0.0
    %421 = vmatpush2.xpose.msra.mxu0 0.0
    %422 = vmatprep.subr.mxu0 0.0
    %423 = vmatpush2.xpose.msra.mxu0 0.0
    %424 = vmatprep.subr.mxu0 0.0
    %425 = vmatpush2.xpose.msra.mxu0 0.0
    %426 = vmatprep.subr.mxu0 0.0
    %427 = vmatpush2.xpose.msra.mxu0 0.0
    %428 = vmatprep.subr.mxu0 0.0
    %429 = vmatpush2.xpose.msra.mxu0 0.0
    %430 = vmatprep.subr.mxu0 0.0
    %431 = vmatpush2.xpose.msra.mxu0 0.0
    %432 = vmatprep.subr.mxu0 0.0
    %433 = vmatpush2.xpose.msra.mxu0 0.0
    %434 = vmatprep.subr.mxu0 0.0
    %435 = vmatpush2.xpose.msra.mxu0 0.0
    %436 = vmatprep.subr.mxu0 0.0
    %437 = vmatpush2.xpose.msra.mxu0 0.0
    %438 = vmatprep.subr.mxu0 0.0
    %439 = vmatpush2.xpose.msra.mxu0 0.0
    %440 = vmatprep.subr.mxu0 0.0
    %441 = vmatpush2.xpose.msra.mxu0 0.0
    %442 = vmatprep.subr.mxu0 0.0
    %443 = vmatpush2.xpose.msra.mxu0 0.0
    %444 = vmatprep.subr.mxu0 0.0
    %445 = vmatpush2.xpose.msra.mxu0 0.0
    %446 = vmatprep.subr.mxu0 0.0
    %447 = vmatpush2.xpose.msra.mxu0 0.0
    %448 = vmatprep.subr.mxu0 0.0
    %449 = vmatpush2.xpose.msra.mxu0 0.0
    %450 = vmatprep.subr.mxu0 0.0
    %451 = vmatpush2.xpose.msra.mxu0 0.0
    %452 = vmatprep.mubr.f32.mxu0 0.0
    %453 = vmatmul.mubr.f32.gmra.mxu0 %v384
    %v454 = vpop.f32.mrf.mxu0
    %v455 = vadd.f32 0.0, %v454
    %v456 = vpop.f32.mrf.mxu0
    %457 = vdwg.mxu0
    %458 = vrot.lane.b32.xlu0 %v278, 96
    %v459 = vpop.permute.xlu0 %458
    %v461 = vsel %vm305, %v297, 0
    %v463 = vsel %vm305, %v459, 0
    %465 = vmatprep.subr.mxu0 0.0
    %466 = vmatpush1.xpose.msra.mxu0 0.0
    %467 = vmatprep.subr.mxu0 0.0
    %468 = vmatpush1.xpose.msra.mxu0 0.0
    %469 = vmatprep.subr.mxu0 0.0
    %470 = vmatpush1.xpose.msra.mxu0 0.0
    %471 = vmatprep.subr.mxu0 0.0
    %472 = vmatpush1.xpose.msra.mxu0 0.0
    %473 = vmatprep.subr.mxu0 0.0
    %474 = vmatpush1.xpose.msra.mxu0 0.0
    %475 = vmatprep.subr.mxu0 0.0
    %476 = vmatpush1.xpose.msra.mxu0 0.0
    %477 = vmatprep.subr.mxu0 0.0
    %478 = vmatpush1.xpose.msra.mxu0 0.0
    %479 = vmatprep.subr.mxu0 0.0
    %480 = vmatpush1.xpose.msra.mxu0 0.0
    %481 = vmatprep.subr.mxu0 0.0
    %482 = vmatpush1.xpose.msra.mxu0 0.0
    %483 = vmatprep.subr.mxu0 0.0
    %484 = vmatpush1.xpose.msra.mxu0 0.0
    %485 = vmatprep.subr.mxu0 0.0
    %486 = vmatpush1.xpose.msra.mxu0 0.0
    %487 = vmatprep.subr.mxu0 0.0
    %488 = vmatpush1.xpose.msra.mxu0 0.0
    %489 = vmatprep.subr.mxu0 0.0
    %490 = vmatpush1.xpose.msra.mxu0 0.0
    %491 = vmatprep.subr.mxu0 0.0
    %492 = vmatpush1.xpose.msra.mxu0 0.0
    %493 = vmatprep.subr.mxu0 0.0
    %494 = vmatpush1.xpose.msra.mxu0 0.0
    %495 = vmatprep.subr.mxu0 0.0
    %496 = vmatpush1.xpose.msra.mxu0 %v463
    %497 = vmatprep.subr.mxu0 0.0
    %498 = vmatpush2.xpose.msra.mxu0 0.0
    %499 = vmatprep.subr.mxu0 0.0
    %500 = vmatpush2.xpose.msra.mxu0 0.0
    %501 = vmatprep.subr.mxu0 0.0
    %502 = vmatpush2.xpose.msra.mxu0 0.0
    %503 = vmatprep.subr.mxu0 0.0
    %504 = vmatpush2.xpose.msra.mxu0 0.0
    %505 = vmatprep.subr.mxu0 0.0
    %506 = vmatpush2.xpose.msra.mxu0 0.0
    %507 = vmatprep.subr.mxu0 0.0
    %508 = vmatpush2.xpose.msra.mxu0 0.0
    %509 = vmatprep.subr.mxu0 0.0
    %510 = vmatpush2.xpose.msra.mxu0 0.0
    %511 = vmatprep.subr.mxu0 0.0
    %512 = vmatpush2.xpose.msra.mxu0 0.0
    %513 = vmatprep.subr.mxu0 0.0
    %514 = vmatpush2.xpose.msra.mxu0 0.0
    %515 = vmatprep.subr.mxu0 0.0
    %516 = vmatpush2.xpose.msra.mxu0 0.0
    %517 = vmatprep.subr.mxu0 0.0
    %518 = vmatpush2.xpose.msra.mxu0 0.0
    %519 = vmatprep.subr.mxu0 0.0
    %520 = vmatpush2.xpose.msra.mxu0 0.0
    %521 = vmatprep.subr.mxu0 0.0
    %522 = vmatpush2.xpose.msra.mxu0 0.0
    %523 = vmatprep.subr.mxu0 0.0
    %524 = vmatpush2.xpose.msra.mxu0 0.0
    %525 = vmatprep.subr.mxu0 0.0
    %526 = vmatpush2.xpose.msra.mxu0 0.0
    %527 = vmatprep.subr.mxu0 0.0
    %528 = vmatpush2.xpose.msra.mxu0 0.0
    %529 = vmatprep.mubr.f32.mxu0 0.0
    %530 = vmatmul.mubr.f32.gmra.mxu0 %v461
    %v531 = vpop.f32.mrf.mxu0
    %v532 = vadd.f32 0.0, %v531
    %v533 = vpop.f32.mrf.mxu0
    %534 = vdwg.mxu0
    %535 = vrot.lane.b32.xlu0 %v280, 96
    %v536 = vpop.permute.xlu0 %535
    %v538 = vsel %vm305, %v298, 0
    %v540 = vsel %vm305, %v536, 0
    %542 = vmatprep.subr.mxu0 0.0
    %543 = vmatpush1.xpose.msra.mxu0 0.0
    %544 = vmatprep.subr.mxu0 0.0
    %545 = vmatpush1.xpose.msra.mxu0 0.0
    %546 = vmatprep.subr.mxu0 0.0
    %547 = vmatpush1.xpose.msra.mxu0 0.0
    %548 = vmatprep.subr.mxu0 0.0
    %549 = vmatpush1.xpose.msra.mxu0 0.0
    %550 = vmatprep.subr.mxu0 0.0
    %551 = vmatpush1.xpose.msra.mxu0 0.0
    %552 = vmatprep.subr.mxu0 0.0
    %553 = vmatpush1.xpose.msra.mxu0 0.0
    %554 = vmatprep.subr.mxu0 0.0
    %555 = vmatpush1.xpose.msra.mxu0 0.0
    %556 = vmatprep.subr.mxu0 0.0
    %557 = vmatpush1.xpose.msra.mxu0 0.0
    %558 = vmatprep.subr.mxu0 0.0
    %559 = vmatpush1.xpose.msra.mxu0 0.0
    %560 = vmatprep.subr.mxu0 0.0
    %561 = vmatpush1.xpose.msra.mxu0 0.0
    %562 = vmatprep.subr.mxu0 0.0
    %563 = vmatpush1.xpose.msra.mxu0 0.0
    %564 = vmatprep.subr.mxu0 0.0
    %565 = vmatpush1.xpose.msra.mxu0 0.0
    %566 = vmatprep.subr.mxu0 0.0
    %567 = vmatpush1.xpose.msra.mxu0 0.0
    %568 = vmatprep.subr.mxu0 0.0
    %569 = vmatpush1.xpose.msra.mxu0 0.0
    %570 = vmatprep.subr.mxu0 0.0
    %571 = vmatpush1.xpose.msra.mxu0 0.0
    %572 = vmatprep.subr.mxu0 0.0
    %573 = vmatpush1.xpose.msra.mxu0 %v540
    %574 = vmatprep.subr.mxu0 0.0
    %575 = vmatpush2.xpose.msra.mxu0 0.0
    %576 = vmatprep.subr.mxu0 0.0
    %577 = vmatpush2.xpose.msra.mxu0 0.0
    %578 = vmatprep.subr.mxu0 0.0
    %579 = vmatpush2.xpose.msra.mxu0 0.0
    %580 = vmatprep.subr.mxu0 0.0
    %581 = vmatpush2.xpose.msra.mxu0 0.0
    %582 = vmatprep.subr.mxu0 0.0
    %583 = vmatpush2.xpose.msra.mxu0 0.0
    %584 = vmatprep.subr.mxu0 0.0
    %585 = vmatpush2.xpose.msra.mxu0 0.0
    %586 = vmatprep.subr.mxu0 0.0
    %587 = vmatpush2.xpose.msra.mxu0 0.0
    %588 = vmatprep.subr.mxu0 0.0
    %589 = vmatpush2.xpose.msra.mxu0 0.0
    %590 = vmatprep.subr.mxu0 0.0
    %591 = vmatpush2.xpose.msra.mxu0 0.0
    %592 = vmatprep.subr.mxu0 0.0
    %593 = vmatpush2.xpose.msra.mxu0 0.0
    %594 = vmatprep.subr.mxu0 0.0
    %595 = vmatpush2.xpose.msra.mxu0 0.0
    %596 = vmatprep.subr.mxu0 0.0
    %597 = vmatpush2.xpose.msra.mxu0 0.0
    %598 = vmatprep.subr.mxu0 0.0
    %599 = vmatpush2.xpose.msra.mxu0 0.0
    %600 = vmatprep.subr.mxu0 0.0
    %601 = vmatpush2.xpose.msra.mxu0 0.0
    %602 = vmatprep.subr.mxu0 0.0
    %603 = vmatpush2.xpose.msra.mxu0 0.0
    %604 = vmatprep.subr.mxu0 0.0
    %605 = vmatpush2.xpose.msra.mxu0 0.0
    %606 = vmatprep.mubr.f32.mxu0 0.0
    %607 = vmatmul.mubr.f32.gmra.mxu0 %v538
    %v608 = vpop.f32.mrf.mxu0
    %v609 = vadd.f32 0.0, %v608
    %v610 = vpop.f32.mrf.mxu0
    %611 = vdwg.mxu0
    %612 = vrot.lane.b32.xlu0 %v284, 96
    %v613 = vpop.permute.xlu0 %612
    %v615 = vsel %vm305, %v299, 0
    %v617 = vsel %vm305, %v613, 0
    %619 = vmatprep.subr.mxu0 0.0
    %620 = vmatpush1.xpose.msra.mxu0 0.0
    %621 = vmatprep.subr.mxu0 0.0
    %622 = vmatpush1.xpose.msra.mxu0 0.0
    %623 = vmatprep.subr.mxu0 0.0
    %624 = vmatpush1.xpose.msra.mxu0 0.0
    %625 = vmatprep.subr.mxu0 0.0
    %626 = vmatpush1.xpose.msra.mxu0 0.0
    %627 = vmatprep.subr.mxu0 0.0
    %628 = vmatpush1.xpose.msra.mxu0 0.0
    %629 = vmatprep.subr.mxu0 0.0
    %630 = vmatpush1.xpose.msra.mxu0 0.0
    %631 = vmatprep.subr.mxu0 0.0
    %632 = vmatpush1.xpose.msra.mxu0 0.0
    %633 = vmatprep.subr.mxu0 0.0
    %634 = vmatpush1.xpose.msra.mxu0 0.0
    %635 = vmatprep.subr.mxu0 0.0
    %636 = vmatpush1.xpose.msra.mxu0 0.0
    %637 = vmatprep.subr.mxu0 0.0
    %638 = vmatpush1.xpose.msra.mxu0 0.0
    %639 = vmatprep.subr.mxu0 0.0
    %640 = vmatpush1.xpose.msra.mxu0 0.0
    %641 = vmatprep.subr.mxu0 0.0
    %642 = vmatpush1.xpose.msra.mxu0 0.0
    %643 = vmatprep.subr.mxu0 0.0
    %644 = vmatpush1.xpose.msra.mxu0 0.0
    %645 = vmatprep.subr.mxu0 0.0
    %646 = vmatpush1.xpose.msra.mxu0 0.0
    %647 = vmatprep.subr.mxu0 0.0
    %648 = vmatpush1.xpose.msra.mxu0 0.0
    %649 = vmatprep.subr.mxu0 0.0
    %650 = vmatpush1.xpose.msra.mxu0 %v617
    %651 = vmatprep.subr.mxu0 0.0
    %652 = vmatpush2.xpose.msra.mxu0 0.0
    %653 = vmatprep.subr.mxu0 0.0
    %654 = vmatpush2.xpose.msra.mxu0 0.0
    %655 = vmatprep.subr.mxu0 0.0
    %656 = vmatpush2.xpose.msra.mxu0 0.0
    %657 = vmatprep.subr.mxu0 0.0
    %658 = vmatpush2.xpose.msra.mxu0 0.0
    %659 = vmatprep.subr.mxu0 0.0
    %660 = vmatpush2.xpose.msra.mxu0 0.0
    %661 = vmatprep.subr.mxu0 0.0
    %662 = vmatpush2.xpose.msra.mxu0 0.0
    %663 = vmatprep.subr.mxu0 0.0
    %664 = vmatpush2.xpose.msra.mxu0 0.0
    %665 = vmatprep.subr.mxu0 0.0
    %666 = vmatpush2.xpose.msra.mxu0 0.0
    %667 = vmatprep.subr.mxu0 0.0
    %668 = vmatpush2.xpose.msra.mxu0 0.0
    %669 = vmatprep.subr.mxu0 0.0
    %670 = vmatpush2.xpose.msra.mxu0 0.0
    %671 = vmatprep.subr.mxu0 0.0
    %672 = vmatpush2.xpose.msra.mxu0 0.0
    %673 = vmatprep.subr.mxu0 0.0
    %674 = vmatpush2.xpose.msra.mxu0 0.0
    %675 = vmatprep.subr.mxu0 0.0
    %676 = vmatpush2.xpose.msra.mxu0 0.0
    %677 = vmatprep.subr.mxu0 0.0
    %678 = vmatpush2.xpose.msra.mxu0 0.0
    %679 = vmatprep.subr.mxu0 0.0
    %680 = vmatpush2.xpose.msra.mxu0 0.0
    %681 = vmatprep.subr.mxu0 0.0
    %682 = vmatpush2.xpose.msra.mxu0 0.0
    %683 = vmatprep.mubr.f32.mxu0 0.0
    %684 = vmatmul.mubr.f32.gmra.mxu0 %v615
    %v685 = vpop.f32.mrf.mxu0
    %v686 = vadd.f32 0.0, %v685
    %v687 = vpop.f32.mrf.mxu0
    %688 = vdwg.mxu0
    %689 = vrot.lane.b32.xlu0 %v286, 96
    %v690 = vpop.permute.xlu0 %689
    %v692 = vsel %vm305, %v300, 0
    %v694 = vsel %vm305, %v690, 0
    %696 = vmatprep.subr.mxu0 0.0
    %697 = vmatpush1.xpose.msra.mxu0 0.0
    %698 = vmatprep.subr.mxu0 0.0
    %699 = vmatpush1.xpose.msra.mxu0 0.0
    %700 = vmatprep.subr.mxu0 0.0
    %701 = vmatpush1.xpose.msra.mxu0 0.0
    %702 = vmatprep.subr.mxu0 0.0
    %703 = vmatpush1.xpose.msra.mxu0 0.0
    %704 = vmatprep.subr.mxu0 0.0
    %705 = vmatpush1.xpose.msra.mxu0 0.0
    %706 = vmatprep.subr.mxu0 0.0
    %707 = vmatpush1.xpose.msra.mxu0 0.0
    %708 = vmatprep.subr.mxu0 0.0
    %709 = vmatpush1.xpose.msra.mxu0 0.0
    %710 = vmatprep.subr.mxu0 0.0
    %711 = vmatpush1.xpose.msra.mxu0 0.0
    %712 = vmatprep.subr.mxu0 0.0
    %713 = vmatpush1.xpose.msra.mxu0 0.0
    %714 = vmatprep.subr.mxu0 0.0
    %715 = vmatpush1.xpose.msra.mxu0 0.0
    %716 = vmatprep.subr.mxu0 0.0
    %717 = vmatpush1.xpose.msra.mxu0 0.0
    %718 = vmatprep.subr.mxu0 0.0
    %719 = vmatpush1.xpose.msra.mxu0 0.0
    %720 = vmatprep.subr.mxu0 0.0
    %721 = vmatpush1.xpose.msra.mxu0 0.0
    %722 = vmatprep.subr.mxu0 0.0
    %723 = vmatpush1.xpose.msra.mxu0 0.0
    %724 = vmatprep.subr.mxu0 0.0
    %725 = vmatpush1.xpose.msra.mxu0 0.0
    %726 = vmatprep.subr.mxu0 0.0
    %727 = vmatpush1.xpose.msra.mxu0 %v694
    %728 = vmatprep.subr.mxu0 0.0
    %729 = vmatpush2.xpose.msra.mxu0 0.0
    %730 = vmatprep.subr.mxu0 0.0
    %731 = vmatpush2.xpose.msra.mxu0 0.0
    %732 = vmatprep.subr.mxu0 0.0
    %733 = vmatpush2.xpose.msra.mxu0 0.0
    %734 = vmatprep.subr.mxu0 0.0
    %735 = vmatpush2.xpose.msra.mxu0 0.0
    %736 = vmatprep.subr.mxu0 0.0
    %737 = vmatpush2.xpose.msra.mxu0 0.0
    %738 = vmatprep.subr.mxu0 0.0
    %739 = vmatpush2.xpose.msra.mxu0 0.0
    %740 = vmatprep.subr.mxu0 0.0
    %741 = vmatpush2.xpose.msra.mxu0 0.0
    %742 = vmatprep.subr.mxu0 0.0
    %743 = vmatpush2.xpose.msra.mxu0 0.0
    %744 = vmatprep.subr.mxu0 0.0
    %745 = vmatpush2.xpose.msra.mxu0 0.0
    %746 = vmatprep.subr.mxu0 0.0
    %747 = vmatpush2.xpose.msra.mxu0 0.0
    %748 = vmatprep.subr.mxu0 0.0
    %749 = vmatpush2.xpose.msra.mxu0 0.0
    %750 = vmatprep.subr.mxu0 0.0
    %751 = vmatpush2.xpose.msra.mxu0 0.0
    %752 = vmatprep.subr.mxu0 0.0
    %753 = vmatpush2.xpose.msra.mxu0 0.0
    %754 = vmatprep.subr.mxu0 0.0
    %755 = vmatpush2.xpose.msra.mxu0 0.0
    %756 = vmatprep.subr.mxu0 0.0
    %757 = vmatpush2.xpose.msra.mxu0 0.0
    %758 = vmatprep.subr.mxu0 0.0
    %759 = vmatpush2.xpose.msra.mxu0 0.0
    %760 = vmatprep.mubr.f32.mxu0 0.0
    %761 = vmatmul.mubr.f32.gmra.mxu0 %v692
    %v762 = vpop.f32.mrf.mxu0
    %v763 = vadd.f32 0.0, %v762
    %v764 = vpop.f32.mrf.mxu0
    %765 = vdwg.mxu0
    %766 = vrot.lane.b32.xlu0 %v290, 96
    %v767 = vpop.permute.xlu0 %766
    %v769 = vsel %vm305, %v301, 0
    %v771 = vsel %vm305, %v767, 0
    %773 = vmatprep.subr.mxu0 0.0
    %774 = vmatpush1.xpose.msra.mxu0 0.0
    %775 = vmatprep.subr.mxu0 0.0
    %776 = vmatpush1.xpose.msra.mxu0 0.0
    %777 = vmatprep.subr.mxu0 0.0
    %778 = vmatpush1.xpose.msra.mxu0 0.0
    %779 = vmatprep.subr.mxu0 0.0
    %780 = vmatpush1.xpose.msra.mxu0 0.0
    %781 = vmatprep.subr.mxu0 0.0
    %782 = vmatpush1.xpose.msra.mxu0 0.0
    %783 = vmatprep.subr.mxu0 0.0
    %784 = vmatpush1.xpose.msra.mxu0 0.0
    %785 = vmatprep.subr.mxu0 0.0
    %786 = vmatpush1.xpose.msra.mxu0 0.0
    %787 = vmatprep.subr.mxu0 0.0
    %788 = vmatpush1.xpose.msra.mxu0 0.0
    %789 = vmatprep.subr.mxu0 0.0
    %790 = vmatpush1.xpose.msra.mxu0 0.0
    %791 = vmatprep.subr.mxu0 0.0
    %792 = vmatpush1.xpose.msra.mxu0 0.0
    %793 = vmatprep.subr.mxu0 0.0
    %794 = vmatpush1.xpose.msra.mxu0 0.0
    %795 = vmatprep.subr.mxu0 0.0
    %796 = vmatpush1.xpose.msra.mxu0 0.0
    %797 = vmatprep.subr.mxu0 0.0
    %798 = vmatpush1.xpose.msra.mxu0 0.0
    %799 = vmatprep.subr.mxu0 0.0
    %800 = vmatpush1.xpose.msra.mxu0 0.0
    %801 = vmatprep.subr.mxu0 0.0
    %802 = vmatpush1.xpose.msra.mxu0 0.0
    %803 = vmatprep.subr.mxu0 0.0
    %804 = vmatpush1.xpose.msra.mxu0 %v771
    %805 = vmatprep.subr.mxu0 0.0
    %806 = vmatpush2.xpose.msra.mxu0 0.0
    %807 = vmatprep.subr.mxu0 0.0
    %808 = vmatpush2.xpose.msra.mxu0 0.0
    %809 = vmatprep.subr.mxu0 0.0
    %810 = vmatpush2.xpose.msra.mxu0 0.0
    %811 = vmatprep.subr.mxu0 0.0
    %812 = vmatpush2.xpose.msra.mxu0 0.0
    %813 = vmatprep.subr.mxu0 0.0
    %814 = vmatpush2.xpose.msra.mxu0 0.0
    %815 = vmatprep.subr.mxu0 0.0
    %816 = vmatpush2.xpose.msra.mxu0 0.0
    %817 = vmatprep.subr.mxu0 0.0
    %818 = vmatpush2.xpose.msra.mxu0 0.0
    %819 = vmatprep.subr.mxu0 0.0
    %820 = vmatpush2.xpose.msra.mxu0 0.0
    %821 = vmatprep.subr.mxu0 0.0
    %822 = vmatpush2.xpose.msra.mxu0 0.0
    %823 = vmatprep.subr.mxu0 0.0
    %824 = vmatpush2.xpose.msra.mxu0 0.0
    %825 = vmatprep.subr.mxu0 0.0
    %826 = vmatpush2.xpose.msra.mxu0 0.0
    %827 = vmatprep.subr.mxu0 0.0
    %828 = vmatpush2.xpose.msra.mxu0 0.0
    %829 = vmatprep.subr.mxu0 0.0
    %830 = vmatpush2.xpose.msra.mxu0 0.0
    %831 = vmatprep.subr.mxu0 0.0
    %832 = vmatpush2.xpose.msra.mxu0 0.0
    %833 = vmatprep.subr.mxu0 0.0
    %834 = vmatpush2.xpose.msra.mxu0 0.0
    %835 = vmatprep.subr.mxu0 0.0
    %836 = vmatpush2.xpose.msra.mxu0 0.0
    %837 = vmatprep.mubr.f32.mxu0 0.0
    %838 = vmatmul.mubr.f32.gmra.mxu0 %v769
    %v839 = vpop.f32.mrf.mxu0
    %v840 = vadd.f32 0.0, %v839
    %v841 = vpop.f32.mrf.mxu0
    %842 = vdwg.mxu0
    %843 = vrot.lane.b32.xlu0 %v292, 96
    %v844 = vpop.permute.xlu0 %843
    %v846 = vsel %vm305, %v302, 0
    %v848 = vsel %vm305, %v844, 0
    %850 = vmatprep.subr.mxu0 0.0
    %851 = vmatpush1.xpose.msra.mxu0 0.0
    %852 = vmatprep.subr.mxu0 0.0
    %853 = vmatpush1.xpose.msra.mxu0 0.0
    %854 = vmatprep.subr.mxu0 0.0
    %855 = vmatpush1.xpose.msra.mxu0 0.0
    %856 = vmatprep.subr.mxu0 0.0
    %857 = vmatpush1.xpose.msra.mxu0 0.0
    %858 = vmatprep.subr.mxu0 0.0
    %859 = vmatpush1.xpose.msra.mxu0 0.0
    %860 = vmatprep.subr.mxu0 0.0
    %861 = vmatpush1.xpose.msra.mxu0 0.0
    %862 = vmatprep.subr.mxu0 0.0
    %863 = vmatpush1.xpose.msra.mxu0 0.0
    %864 = vmatprep.subr.mxu0 0.0
    %865 = vmatpush1.xpose.msra.mxu0 0.0
    %866 = vmatprep.subr.mxu0 0.0
    %867 = vmatpush1.xpose.msra.mxu0 0.0
    %868 = vmatprep.subr.mxu0 0.0
    %869 = vmatpush1.xpose.msra.mxu0 0.0
    %870 = vmatprep.subr.mxu0 0.0
    %871 = vmatpush1.xpose.msra.mxu0 0.0
    %872 = vmatprep.subr.mxu0 0.0
    %873 = vmatpush1.xpose.msra.mxu0 0.0
    %874 = vmatprep.subr.mxu0 0.0
    %875 = vmatpush1.xpose.msra.mxu0 0.0
    %876 = vmatprep.subr.mxu0 0.0
    %877 = vmatpush1.xpose.msra.mxu0 0.0
    %878 = vmatprep.subr.mxu0 0.0
    %879 = vmatpush1.xpose.msra.mxu0 0.0
    %880 = vmatprep.subr.mxu0 0.0
    %881 = vmatpush1.xpose.msra.mxu0 %v848
    %882 = vmatprep.subr.mxu0 0.0
    %883 = vmatpush2.xpose.msra.mxu0 0.0
    %884 = vmatprep.subr.mxu0 0.0
    %885 = vmatpush2.xpose.msra.mxu0 0.0
    %886 = vmatprep.subr.mxu0 0.0
    %887 = vmatpush2.xpose.msra.mxu0 0.0
    %888 = vmatprep.subr.mxu0 0.0
    %889 = vmatpush2.xpose.msra.mxu0 0.0
    %890 = vmatprep.subr.mxu0 0.0
    %891 = vmatpush2.xpose.msra.mxu0 0.0
    %892 = vmatprep.subr.mxu0 0.0
    %893 = vmatpush2.xpose.msra.mxu0 0.0
    %894 = vmatprep.subr.mxu0 0.0
    %895 = vmatpush2.xpose.msra.mxu0 0.0
    %896 = vmatprep.subr.mxu0 0.0
    %897 = vmatpush2.xpose.msra.mxu0 0.0
    %898 = vmatprep.subr.mxu0 0.0
    %899 = vmatpush2.xpose.msra.mxu0 0.0
    %900 = vmatprep.subr.mxu0 0.0
    %901 = vmatpush2.xpose.msra.mxu0 0.0
    %902 = vmatprep.subr.mxu0 0.0
    %903 = vmatpush2.xpose.msra.mxu0 0.0
    %904 = vmatprep.subr.mxu0 0.0
    %905 = vmatpush2.xpose.msra.mxu0 0.0
    %906 = vmatprep.subr.mxu0 0.0
    %907 = vmatpush2.xpose.msra.mxu0 0.0
    %908 = vmatprep.subr.mxu0 0.0
    %909 = vmatpush2.xpose.msra.mxu0 0.0
    %910 = vmatprep.subr.mxu0 0.0
    %911 = vmatpush2.xpose.msra.mxu0 0.0
    %912 = vmatprep.subr.mxu0 0.0
    %913 = vmatpush2.xpose.msra.mxu0 0.0
    %914 = vmatprep.mubr.f32.mxu0 0.0
    %915 = vmatmul.mubr.f32.gmra.mxu0 %v846
    %v916 = vpop.f32.mrf.mxu0
    %v917 = vadd.f32 0.0, %v916
    %v918 = vpop.f32.mrf.mxu0
    %919 = vdwg.mxu0
    %v920 = vsel %vm116, 1, 0
    %vm921 = vcmp.eq.s32.totalorder %v920, 1
    %v922 = vsel %vm921, %v378, -1000000.0
    %v923 = vsel %vm921, %v455, -1000000.0
    %v924 = vsel %vm921, %v532, -1000000.0
    %v925 = vsel %vm921, %v609, -1000000.0
    %v926 = vsel %vm921, %v686, -1000000.0
    %v927 = vsel %vm921, %v763, -1000000.0
    %v928 = vsel %vm921, %v840, -1000000.0
    %v929 = vsel %vm921, %v917, -1000000.0
    %v930 = vsel %vm305, %v922, -inf
    %931 = vmax.xlane.f32.xlu0 %v930
    %v932 = vpop.xlane.xlu0 %931
    %v933 = vsel %vm305, %v923, -inf
    %934 = vmax.xlane.f32.xlu0 %v933
    %v935 = vpop.xlane.xlu0 %934
    %v936 = vsel %vm305, %v924, -inf
    %937 = vmax.xlane.f32.xlu0 %v936
    %v938 = vpop.xlane.xlu0 %937
    %v939 = vsel %vm305, %v925, -inf
    %940 = vmax.xlane.f32.xlu0 %v939
    %v941 = vpop.xlane.xlu0 %940
    %v942 = vsel %vm305, %v926, -inf
    %943 = vmax.xlane.f32.xlu0 %v942
    %v944 = vpop.xlane.xlu0 %943
    %v945 = vsel %vm305, %v927, -inf
    %946 = vmax.xlane.f32.xlu0 %v945
    %v947 = vpop.xlane.xlu0 %946
    %v948 = vsel %vm305, %v928, -inf
    %949 = vmax.xlane.f32.xlu0 %v948
    %v950 = vpop.xlane.xlu0 %949
    %v951 = vsel %vm305, %v929, -inf
    %952 = vmax.xlane.f32.xlu0 %v951
    %v953 = vpop.xlane.xlu0 %952
    %v954 = vsub.f32 %v922, %v932
    %v955 = vsub.f32 %v923, %v935
    %v956 = vsub.f32 %v924, %v938
    %v957 = vsub.f32 %v925, %v941
    %v958 = vsub.f32 %v926, %v944
    %v959 = vsub.f32 %v927, %v947
    %v960 = vsub.f32 %v928, %v950
    %v961 = vsub.f32 %v929, %v953
    %v962 = vmul.f32 %v954, 1.442695
    %v963 = vpow.pop %v962
    %v964 = vmul.f32 %v955, 1.442695
    %v965 = vpow.pop %v964
    %v966 = vmul.f32 %v956, 1.442695
    %v967 = vpow.pop %v966
    %v968 = vmul.f32 %v957, 1.442695
    %v969 = vpow.pop %v968
    %v970 = vmul.f32 %v958, 1.442695
    %v971 = vpow.pop %v970
    %v972 = vmul.f32 %v959, 1.442695
    %v973 = vpow.pop %v972
    %v974 = vmul.f32 %v960, 1.442695
    %v975 = vpow.pop %v974
    %v976 = vmul.f32 %v961, 1.442695
    %v977 = vpow.pop %v976
    %v978 = vsel %vm305, %v963, 0.0
    %979 = vadd.xlane.f32.xlu0 %v978
    %v980 = vpop.xlane.xlu0 %979
    %v981 = vsel %vm305, %v965, 0.0
    %982 = vadd.xlane.f32.xlu0 %v981
    %v983 = vpop.xlane.xlu0 %982
    %v984 = vsel %vm305, %v967, 0.0
    %985 = vadd.xlane.f32.xlu0 %v984
    %v986 = vpop.xlane.xlu0 %985
    %v987 = vsel %vm305, %v969, 0.0
    %988 = vadd.xlane.f32.xlu0 %v987
    %v989 = vpop.xlane.xlu0 %988
    %v990 = vsel %vm305, %v971, 0.0
    %991 = vadd.xlane.f32.xlu0 %v990
    %v992 = vpop.xlane.xlu0 %991
    %v993 = vsel %vm305, %v973, 0.0
    %994 = vadd.xlane.f32.xlu0 %v993
    %v995 = vpop.xlane.xlu0 %994
    %v996 = vsel %vm305, %v975, 0.0
    %997 = vadd.xlane.f32.xlu0 %v996
    %v998 = vpop.xlane.xlu0 %997
    %v999 = vsel %vm305, %v977, 0.0
    %1000 = vadd.xlane.f32.xlu0 %v999
    %v1001 = vpop.xlane.xlu0 %1000
    %v1002 = vrcp.pop %v980
    %v1003 = vrcp.pop %v983
    %v1004 = vrcp.pop %v986
    %v1005 = vrcp.pop %v989
    %v1006 = vrcp.pop %v992
    %v1007 = vrcp.pop %v995
    %v1008 = vrcp.pop %v998
    %v1009 = vrcp.pop %v1001
    %v1010 = vmul.f32 %v963, %v1002
    %v1011 = vmul.f32 %v965, %v1003
    %v1012 = vmul.f32 %v967, %v1004
    %v1013 = vmul.f32 %v969, %v1005
    %v1014 = vmul.f32 %v971, %v1006
    %v1015 = vmul.f32 %v973, %v1007
    %v1016 = vmul.f32 %v975, %v1008
    %v1017 = vmul.f32 %v977, %v1009
    %1018 = vrot.lane.b32.xlu0 %v267, 64
    %v1019 = vpop.permute.xlu0 %1018
    %v1022 = vsel %vm305, %v1010, 0
    %1024 = vmatprep.subr.mxu0 0.0
    %1025 = vmatpush1.msra.mxu0 0.0
    %1026 = vmatprep.subr.mxu0 0.0
    %1027 = vmatpush1.msra.mxu0 0.0
    %1028 = vmatprep.subr.mxu0 0.0
    %1029 = vmatpush1.msra.mxu0 0.0
    %1030 = vmatprep.subr.mxu0 0.0
    %1031 = vmatpush1.msra.mxu0 0.0
    %1032 = vmatprep.subr.mxu0 0.0
    %1033 = vmatpush1.msra.mxu0 0.0
    %1034 = vmatprep.subr.mxu0 0.0
    %1035 = vmatpush1.msra.mxu0 0.0
    %1036 = vmatprep.subr.mxu0 0.0
    %1037 = vmatpush1.msra.mxu0 0.0
    %1038 = vmatprep.subr.mxu0 0.0
    %1039 = vmatpush1.msra.mxu0 0.0
    %1040 = vmatprep.subr.mxu0 0.0
    %1041 = vmatpush1.msra.mxu0 0.0
    %1042 = vmatprep.subr.mxu0 0.0
    %1043 = vmatpush1.msra.mxu0 0.0
    %1044 = vmatprep.subr.mxu0 0.0
    %1045 = vmatpush1.msra.mxu0 0.0
    %1046 = vmatprep.subr.mxu0 0.0
    %1047 = vmatpush1.msra.mxu0 0.0
    %1048 = vmatprep.subr.mxu0 0.0
    %1049 = vmatpush1.msra.mxu0 0.0
    %1050 = vmatprep.subr.mxu0 0.0
    %1051 = vmatpush1.msra.mxu0 0.0
    %1052 = vmatprep.subr.mxu0 0.0
    %1053 = vmatpush1.msra.mxu0 0.0
    %1054 = vmatprep.subr.mxu0 0.0
    %1055 = vmatpush1.msra.mxu0 %v1019
    %1056 = vmatprep.subr.mxu0 0.0
    %1057 = vmatpush2.msra.mxu0 0.0
    %1058 = vmatprep.subr.mxu0 0.0
    %1059 = vmatpush2.msra.mxu0 0.0
    %1060 = vmatprep.subr.mxu0 0.0
    %1061 = vmatpush2.msra.mxu0 0.0
    %1062 = vmatprep.subr.mxu0 0.0
    %1063 = vmatpush2.msra.mxu0 0.0
    %1064 = vmatprep.subr.mxu0 0.0
    %1065 = vmatpush2.msra.mxu0 0.0
    %1066 = vmatprep.subr.mxu0 0.0
    %1067 = vmatpush2.msra.mxu0 0.0
    %1068 = vmatprep.subr.mxu0 0.0
    %1069 = vmatpush2.msra.mxu0 0.0
    %1070 = vmatprep.subr.mxu0 0.0
    %1071 = vmatpush2.msra.mxu0 0.0
    %1072 = vmatprep.subr.mxu0 0.0
    %1073 = vmatpush2.msra.mxu0 0.0
    %1074 = vmatprep.subr.mxu0 0.0
    %1075 = vmatpush2.msra.mxu0 0.0
    %1076 = vmatprep.subr.mxu0 0.0
    %1077 = vmatpush2.msra.mxu0 0.0
    %1078 = vmatprep.subr.mxu0 0.0
    %1079 = vmatpush2.msra.mxu0 0.0
    %1080 = vmatprep.subr.mxu0 0.0
    %1081 = vmatpush2.msra.mxu0 0.0
    %1082 = vmatprep.subr.mxu0 0.0
    %1083 = vmatpush2.msra.mxu0 0.0
    %1084 = vmatprep.subr.mxu0 0.0
    %1085 = vmatpush2.msra.mxu0 0.0
    %1086 = vmatprep.subr.mxu0 0.0
    %1087 = vmatpush2.msra.mxu0 0.0
    %1088 = vmatprep.mubr.f32.mxu0 0.0
    %1089 = vmatmul.mubr.f32.gmra.mxu0 %v1022
    %v1090 = vpop.f32.mrf.mxu0
    %v1091 = vadd.f32 0.0, %v1090
    %v1092 = vpop.f32.mrf.mxu0
    %1093 = vdwg.mxu0
    %1094 = vrot.lane.b32.xlu0 %v272, 64
    %v1095 = vpop.permute.xlu0 %1094
    %v1098 = vsel %vm305, %v1011, 0
    %1100 = vmatprep.subr.mxu0 0.0
    %1101 = vmatpush1.msra.mxu0 0.0
    %1102 = vmatprep.subr.mxu0 0.0
    %1103 = vmatpush1.msra.mxu0 0.0
    %1104 = vmatprep.subr.mxu0 0.0
    %1105 = vmatpush1.msra.mxu0 0.0
    %1106 = vmatprep.subr.mxu0 0.0
    %1107 = vmatpush1.msra.mxu0 0.0
    %1108 = vmatprep.subr.mxu0 0.0
    %1109 = vmatpush1.msra.mxu0 0.0
    %1110 = vmatprep.subr.mxu0 0.0
    %1111 = vmatpush1.msra.mxu0 0.0
    %1112 = vmatprep.subr.mxu0 0.0
    %1113 = vmatpush1.msra.mxu0 0.0
    %1114 = vmatprep.subr.mxu0 0.0
    %1115 = vmatpush1.msra.mxu0 0.0
    %1116 = vmatprep.subr.mxu0 0.0
    %1117 = vmatpush1.msra.mxu0 0.0
    %1118 = vmatprep.subr.mxu0 0.0
    %1119 = vmatpush1.msra.mxu0 0.0
    %1120 = vmatprep.subr.mxu0 0.0
    %1121 = vmatpush1.msra.mxu0 0.0
    %1122 = vmatprep.subr.mxu0 0.0
    %1123 = vmatpush1.msra.mxu0 0.0
    %1124 = vmatprep.subr.mxu0 0.0
    %1125 = vmatpush1.msra.mxu0 0.0
    %1126 = vmatprep.subr.mxu0 0.0
    %1127 = vmatpush1.msra.mxu0 0.0
    %1128 = vmatprep.subr.mxu0 0.0
    %1129 = vmatpush1.msra.mxu0 0.0
    %1130 = vmatprep.subr.mxu0 0.0
    %1131 = vmatpush1.msra.mxu0 %v1095
    %1132 = vmatprep.subr.mxu0 0.0
    %1133 = vmatpush2.msra.mxu0 0.0
    %1134 = vmatprep.subr.mxu0 0.0
    %1135 = vmatpush2.msra.mxu0 0.0
    %1136 = vmatprep.subr.mxu0 0.0
    %1137 = vmatpush2.msra.mxu0 0.0
    %1138 = vmatprep.subr.mxu0 0.0
    %1139 = vmatpush2.msra.mxu0 0.0
    %1140 = vmatprep.subr.mxu0 0.0
    %1141 = vmatpush2.msra.mxu0 0.0
    %1142 = vmatprep.subr.mxu0 0.0
    %1143 = vmatpush2.msra.mxu0 0.0
    %1144 = vmatprep.subr.mxu0 0.0
    %1145 = vmatpush2.msra.mxu0 0.0
    %1146 = vmatprep.subr.mxu0 0.0
    %1147 = vmatpush2.msra.mxu0 0.0
    %1148 = vmatprep.subr.mxu0 0.0
    %1149 = vmatpush2.msra.mxu0 0.0
    %1150 = vmatprep.subr.mxu0 0.0
    %1151 = vmatpush2.msra.mxu0 0.0
    %1152 = vmatprep.subr.mxu0 0.0
    %1153 = vmatpush2.msra.mxu0 0.0
    %1154 = vmatprep.subr.mxu0 0.0
    %1155 = vmatpush2.msra.mxu0 0.0
    %1156 = vmatprep.subr.mxu0 0.0
    %1157 = vmatpush2.msra.mxu0 0.0
    %1158 = vmatprep.subr.mxu0 0.0
    %1159 = vmatpush2.msra.mxu0 0.0
    %1160 = vmatprep.subr.mxu0 0.0
    %1161 = vmatpush2.msra.mxu0 0.0
    %1162 = vmatprep.subr.mxu0 0.0
    %1163 = vmatpush2.msra.mxu0 0.0
    %1164 = vmatprep.mubr.f32.mxu0 0.0
    %1165 = vmatmul.mubr.f32.gmra.mxu0 %v1098
    %v1166 = vpop.f32.mrf.mxu0
    %v1167 = vadd.f32 0.0, %v1166
    %v1168 = vpop.f32.mrf.mxu0
    %1169 = vdwg.mxu0
    %1170 = vrot.lane.b32.xlu0 %v278, 64
    %v1171 = vpop.permute.xlu0 %1170
    %v1174 = vsel %vm305, %v1012, 0
    %1176 = vmatprep.subr.mxu0 0.0
    %1177 = vmatpush1.msra.mxu0 0.0
    %1178 = vmatprep.subr.mxu0 0.0
    %1179 = vmatpush1.msra.mxu0 0.0
    %1180 = vmatprep.subr.mxu0 0.0
    %1181 = vmatpush1.msra.mxu0 0.0
    %1182 = vmatprep.subr.mxu0 0.0
    %1183 = vmatpush1.msra.mxu0 0.0
    %1184 = vmatprep.subr.mxu0 0.0
    %1185 = vmatpush1.msra.mxu0 0.0
    %1186 = vmatprep.subr.mxu0 0.0
    %1187 = vmatpush1.msra.mxu0 0.0
    %1188 = vmatprep.subr.mxu0 0.0
    %1189 = vmatpush1.msra.mxu0 0.0
    %1190 = vmatprep.subr.mxu0 0.0
    %1191 = vmatpush1.msra.mxu0 0.0
    %1192 = vmatprep.subr.mxu0 0.0
    %1193 = vmatpush1.msra.mxu0 0.0
    %1194 = vmatprep.subr.mxu0 0.0
    %1195 = vmatpush1.msra.mxu0 0.0
    %1196 = vmatprep.subr.mxu0 0.0
    %1197 = vmatpush1.msra.mxu0 0.0
    %1198 = vmatprep.subr.mxu0 0.0
    %1199 = vmatpush1.msra.mxu0 0.0
    %1200 = vmatprep.subr.mxu0 0.0
    %1201 = vmatpush1.msra.mxu0 0.0
    %1202 = vmatprep.subr.mxu0 0.0
    %1203 = vmatpush1.msra.mxu0 0.0
    %1204 = vmatprep.subr.mxu0 0.0
    %1205 = vmatpush1.msra.mxu0 0.0
    %1206 = vmatprep.subr.mxu0 0.0
    %1207 = vmatpush1.msra.mxu0 %v1171
    %1208 = vmatprep.subr.mxu0 0.0
    %1209 = vmatpush2.msra.mxu0 0.0
    %1210 = vmatprep.subr.mxu0 0.0
    %1211 = vmatpush2.msra.mxu0 0.0
    %1212 = vmatprep.subr.mxu0 0.0
    %1213 = vmatpush2.msra.mxu0 0.0
    %1214 = vmatprep.subr.mxu0 0.0
    %1215 = vmatpush2.msra.mxu0 0.0
    %1216 = vmatprep.subr.mxu0 0.0
    %1217 = vmatpush2.msra.mxu0 0.0
    %1218 = vmatprep.subr.mxu0 0.0
    %1219 = vmatpush2.msra.mxu0 0.0
    %1220 = vmatprep.subr.mxu0 0.0
    %1221 = vmatpush2.msra.mxu0 0.0
    %1222 = vmatprep.subr.mxu0 0.0
    %1223 = vmatpush2.msra.mxu0 0.0
    %1224 = vmatprep.subr.mxu0 0.0
    %1225 = vmatpush2.msra.mxu0 0.0
    %1226 = vmatprep.subr.mxu0 0.0
    %1227 = vmatpush2.msra.mxu0 0.0
    %1228 = vmatprep.subr.mxu0 0.0
    %1229 = vmatpush2.msra.mxu0 0.0
    %1230 = vmatprep.subr.mxu0 0.0
    %1231 = vmatpush2.msra.mxu0 0.0
    %1232 = vmatprep.subr.mxu0 0.0
    %1233 = vmatpush2.msra.mxu0 0.0
    %1234 = vmatprep.subr.mxu0 0.0
    %1235 = vmatpush2.msra.mxu0 0.0
    %1236 = vmatprep.subr.mxu0 0.0
    %1237 = vmatpush2.msra.mxu0 0.0
    %1238 = vmatprep.subr.mxu0 0.0
    %1239 = vmatpush2.msra.mxu0 0.0
    %1240 = vmatprep.mubr.f32.mxu0 0.0
    %1241 = vmatmul.mubr.f32.gmra.mxu0 %v1174
    %v1242 = vpop.f32.mrf.mxu0
    %v1243 = vadd.f32 0.0, %v1242
    %v1244 = vpop.f32.mrf.mxu0
    %1245 = vdwg.mxu0
    %1246 = vrot.lane.b32.xlu0 %v280, 64
    %v1247 = vpop.permute.xlu0 %1246
    %v1250 = vsel %vm305, %v1013, 0
    %1252 = vmatprep.subr.mxu0 0.0
    %1253 = vmatpush1.msra.mxu0 0.0
    %1254 = vmatprep.subr.mxu0 0.0
    %1255 = vmatpush1.msra.mxu0 0.0
    %1256 = vmatprep.subr.mxu0 0.0
    %1257 = vmatpush1.msra.mxu0 0.0
    %1258 = vmatprep.subr.mxu0 0.0
    %1259 = vmatpush1.msra.mxu0 0.0
    %1260 = vmatprep.subr.mxu0 0.0
    %1261 = vmatpush1.msra.mxu0 0.0
    %1262 = vmatprep.subr.mxu0 0.0
    %1263 = vmatpush1.msra.mxu0 0.0
    %1264 = vmatprep.subr.mxu0 0.0
    %1265 = vmatpush1.msra.mxu0 0.0
    %1266 = vmatprep.subr.mxu0 0.0
    %1267 = vmatpush1.msra.mxu0 0.0
    %1268 = vmatprep.subr.mxu0 0.0
    %1269 = vmatpush1.msra.mxu0 0.0
    %1270 = vmatprep.subr.mxu0 0.0
    %1271 = vmatpush1.msra.mxu0 0.0
    %1272 = vmatprep.subr.mxu0 0.0
    %1273 = vmatpush1.msra.mxu0 0.0
    %1274 = vmatprep.subr.mxu0 0.0
    %1275 = vmatpush1.msra.mxu0 0.0
    %1276 = vmatprep.subr.mxu0 0.0
    %1277 = vmatpush1.msra.mxu0 0.0
    %1278 = vmatprep.subr.mxu0 0.0
    %1279 = vmatpush1.msra.mxu0 0.0
    %1280 = vmatprep.subr.mxu0 0.0
    %1281 = vmatpush1.msra.mxu0 0.0
    %1282 = vmatprep.subr.mxu0 0.0
    %1283 = vmatpush1.msra.mxu0 %v1247
    %1284 = vmatprep.subr.mxu0 0.0
    %1285 = vmatpush2.msra.mxu0 0.0
    %1286 = vmatprep.subr.mxu0 0.0
    %1287 = vmatpush2.msra.mxu0 0.0
    %1288 = vmatprep.subr.mxu0 0.0
    %1289 = vmatpush2.msra.mxu0 0.0
    %1290 = vmatprep.subr.mxu0 0.0
    %1291 = vmatpush2.msra.mxu0 0.0
    %1292 = vmatprep.subr.mxu0 0.0
    %1293 = vmatpush2.msra.mxu0 0.0
    %1294 = vmatprep.subr.mxu0 0.0
    %1295 = vmatpush2.msra.mxu0 0.0
    %1296 = vmatprep.subr.mxu0 0.0
    %1297 = vmatpush2.msra.mxu0 0.0
    %1298 = vmatprep.subr.mxu0 0.0
    %1299 = vmatpush2.msra.mxu0 0.0
    %1300 = vmatprep.subr.mxu0 0.0
    %1301 = vmatpush2.msra.mxu0 0.0
    %1302 = vmatprep.subr.mxu0 0.0
    %1303 = vmatpush2.msra.mxu0 0.0
    %1304 = vmatprep.subr.mxu0 0.0
    %1305 = vmatpush2.msra.mxu0 0.0
    %1306 = vmatprep.subr.mxu0 0.0
    %1307 = vmatpush2.msra.mxu0 0.0
    %1308 = vmatprep.subr.mxu0 0.0
    %1309 = vmatpush2.msra.mxu0 0.0
    %1310 = vmatprep.subr.mxu0 0.0
    %1311 = vmatpush2.msra.mxu0 0.0
    %1312 = vmatprep.subr.mxu0 0.0
    %1313 = vmatpush2.msra.mxu0 0.0
    %1314 = vmatprep.subr.mxu0 0.0
    %1315 = vmatpush2.msra.mxu0 0.0
    %1316 = vmatprep.mubr.f32.mxu0 0.0
    %1317 = vmatmul.mubr.f32.gmra.mxu0 %v1250
    %v1318 = vpop.f32.mrf.mxu0
    %v1319 = vadd.f32 0.0, %v1318
    %v1320 = vpop.f32.mrf.mxu0
    %1321 = vdwg.mxu0
    %1322 = vrot.lane.b32.xlu0 %v284, 64
    %v1323 = vpop.permute.xlu0 %1322
    %v1326 = vsel %vm305, %v1014, 0
    %1328 = vmatprep.subr.mxu0 0.0
    %1329 = vmatpush1.msra.mxu0 0.0
    %1330 = vmatprep.subr.mxu0 0.0
    %1331 = vmatpush1.msra.mxu0 0.0
    %1332 = vmatprep.subr.mxu0 0.0
    %1333 = vmatpush1.msra.mxu0 0.0
    %1334 = vmatprep.subr.mxu0 0.0
    %1335 = vmatpush1.msra.mxu0 0.0
    %1336 = vmatprep.subr.mxu0 0.0
    %1337 = vmatpush1.msra.mxu0 0.0
    %1338 = vmatprep.subr.mxu0 0.0
    %1339 = vmatpush1.msra.mxu0 0.0
    %1340 = vmatprep.subr.mxu0 0.0
    %1341 = vmatpush1.msra.mxu0 0.0
    %1342 = vmatprep.subr.mxu0 0.0
    %1343 = vmatpush1.msra.mxu0 0.0
    %1344 = vmatprep.subr.mxu0 0.0
    %1345 = vmatpush1.msra.mxu0 0.0
    %1346 = vmatprep.subr.mxu0 0.0
    %1347 = vmatpush1.msra.mxu0 0.0
    %1348 = vmatprep.subr.mxu0 0.0
    %1349 = vmatpush1.msra.mxu0 0.0
    %1350 = vmatprep.subr.mxu0 0.0
    %1351 = vmatpush1.msra.mxu0 0.0
    %1352 = vmatprep.subr.mxu0 0.0
    %1353 = vmatpush1.msra.mxu0 0.0
    %1354 = vmatprep.subr.mxu0 0.0
    %1355 = vmatpush1.msra.mxu0 0.0
    %1356 = vmatprep.subr.mxu0 0.0
    %1357 = vmatpush1.msra.mxu0 0.0
    %1358 = vmatprep.subr.mxu0 0.0
    %1359 = vmatpush1.msra.mxu0 %v1323
    %1360 = vmatprep.subr.mxu0 0.0
    %1361 = vmatpush2.msra.mxu0 0.0
    %1362 = vmatprep.subr.mxu0 0.0
    %1363 = vmatpush2.msra.mxu0 0.0
    %1364 = vmatprep.subr.mxu0 0.0
    %1365 = vmatpush2.msra.mxu0 0.0
    %1366 = vmatprep.subr.mxu0 0.0
    %1367 = vmatpush2.msra.mxu0 0.0
    %1368 = vmatprep.subr.mxu0 0.0
    %1369 = vmatpush2.msra.mxu0 0.0
    %1370 = vmatprep.subr.mxu0 0.0
    %1371 = vmatpush2.msra.mxu0 0.0
    %1372 = vmatprep.subr.mxu0 0.0
    %1373 = vmatpush2.msra.mxu0 0.0
    %1374 = vmatprep.subr.mxu0 0.0
    %1375 = vmatpush2.msra.mxu0 0.0
    %1376 = vmatprep.subr.mxu0 0.0
    %1377 = vmatpush2.msra.mxu0 0.0
    %1378 = vmatprep.subr.mxu0 0.0
    %1379 = vmatpush2.msra.mxu0 0.0
    %1380 = vmatprep.subr.mxu0 0.0
    %1381 = vmatpush2.msra.mxu0 0.0
    %1382 = vmatprep.subr.mxu0 0.0
    %1383 = vmatpush2.msra.mxu0 0.0
    %1384 = vmatprep.subr.mxu0 0.0
    %1385 = vmatpush2.msra.mxu0 0.0
    %1386 = vmatprep.subr.mxu0 0.0
    %1387 = vmatpush2.msra.mxu0 0.0
    %1388 = vmatprep.subr.mxu0 0.0
    %1389 = vmatpush2.msra.mxu0 0.0
    %1390 = vmatprep.subr.mxu0 0.0
    %1391 = vmatpush2.msra.mxu0 0.0
    %1392 = vmatprep.mubr.f32.mxu0 0.0
    %1393 = vmatmul.mubr.f32.gmra.mxu0 %v1326
    %v1394 = vpop.f32.mrf.mxu0
    %v1395 = vadd.f32 0.0, %v1394
    %v1396 = vpop.f32.mrf.mxu0
    %1397 = vdwg.mxu0
    %1398 = vrot.lane.b32.xlu0 %v286, 64
    %v1399 = vpop.permute.xlu0 %1398
    %v1402 = vsel %vm305, %v1015, 0
    %1404 = vmatprep.subr.mxu0 0.0
    %1405 = vmatpush1.msra.mxu0 0.0
    %1406 = vmatprep.subr.mxu0 0.0
    %1407 = vmatpush1.msra.mxu0 0.0
    %1408 = vmatprep.subr.mxu0 0.0
    %1409 = vmatpush1.msra.mxu0 0.0
    %1410 = vmatprep.subr.mxu0 0.0
    %1411 = vmatpush1.msra.mxu0 0.0
    %1412 = vmatprep.subr.mxu0 0.0
    %1413 = vmatpush1.msra.mxu0 0.0
    %1414 = vmatprep.subr.mxu0 0.0
    %1415 = vmatpush1.msra.mxu0 0.0
    %1416 = vmatprep.subr.mxu0 0.0
    %1417 = vmatpush1.msra.mxu0 0.0
    %1418 = vmatprep.subr.mxu0 0.0
    %1419 = vmatpush1.msra.mxu0 0.0
    %1420 = vmatprep.subr.mxu0 0.0
    %1421 = vmatpush1.msra.mxu0 0.0
    %1422 = vmatprep.subr.mxu0 0.0
    %1423 = vmatpush1.msra.mxu0 0.0
    %1424 = vmatprep.subr.mxu0 0.0
    %1425 = vmatpush1.msra.mxu0 0.0
    %1426 = vmatprep.subr.mxu0 0.0
    %1427 = vmatpush1.msra.mxu0 0.0
    %1428 = vmatprep.subr.mxu0 0.0
    %1429 = vmatpush1.msra.mxu0 0.0
    %1430 = vmatprep.subr.mxu0 0.0
    %1431 = vmatpush1.msra.mxu0 0.0
    %1432 = vmatprep.subr.mxu0 0.0
    %1433 = vmatpush1.msra.mxu0 0.0
    %1434 = vmatprep.subr.mxu0 0.0
    %1435 = vmatpush1.msra.mxu0 %v1399
    %1436 = vmatprep.subr.mxu0 0.0
    %1437 = vmatpush2.msra.mxu0 0.0
    %1438 = vmatprep.subr.mxu0 0.0
    %1439 = vmatpush2.msra.mxu0 0.0
    %1440 = vmatprep.subr.mxu0 0.0
    %1441 = vmatpush2.msra.mxu0 0.0
    %1442 = vmatprep.subr.mxu0 0.0
    %1443 = vmatpush2.msra.mxu0 0.0
    %1444 = vmatprep.subr.mxu0 0.0
    %1445 = vmatpush2.msra.mxu0 0.0
    %1446 = vmatprep.subr.mxu0 0.0
    %1447 = vmatpush2.msra.mxu0 0.0
    %1448 = vmatprep.subr.mxu0 0.0
    %1449 = vmatpush2.msra.mxu0 0.0
    %1450 = vmatprep.subr.mxu0 0.0
    %1451 = vmatpush2.msra.mxu0 0.0
    %1452 = vmatprep.subr.mxu0 0.0
    %1453 = vmatpush2.msra.mxu0 0.0
    %1454 = vmatprep.subr.mxu0 0.0
    %1455 = vmatpush2.msra.mxu0 0.0
    %1456 = vmatprep.subr.mxu0 0.0
    %1457 = vmatpush2.msra.mxu0 0.0
    %1458 = vmatprep.subr.mxu0 0.0
    %1459 = vmatpush2.msra.mxu0 0.0
    %1460 = vmatprep.subr.mxu0 0.0
    %1461 = vmatpush2.msra.mxu0 0.0
    %1462 = vmatprep.subr.mxu0 0.0
    %1463 = vmatpush2.msra.mxu0 0.0
    %1464 = vmatprep.subr.mxu0 0.0
    %1465 = vmatpush2.msra.mxu0 0.0
    %1466 = vmatprep.subr.mxu0 0.0
    %1467 = vmatpush2.msra.mxu0 0.0
    %1468 = vmatprep.mubr.f32.mxu0 0.0
    %1469 = vmatmul.mubr.f32.gmra.mxu0 %v1402
    %v1470 = vpop.f32.mrf.mxu0
    %v1471 = vadd.f32 0.0, %v1470
    %v1472 = vpop.f32.mrf.mxu0
    %1473 = vdwg.mxu0
    %1474 = vrot.lane.b32.xlu0 %v290, 64
    %v1475 = vpop.permute.xlu0 %1474
    %v1478 = vsel %vm305, %v1016, 0
    %1480 = vmatprep.subr.mxu0 0.0
    %1481 = vmatpush1.msra.mxu0 0.0
    %1482 = vmatprep.subr.mxu0 0.0
    %1483 = vmatpush1.msra.mxu0 0.0
    %1484 = vmatprep.subr.mxu0 0.0
    %1485 = vmatpush1.msra.mxu0 0.0
    %1486 = vmatprep.subr.mxu0 0.0
    %1487 = vmatpush1.msra.mxu0 0.0
    %1488 = vmatprep.subr.mxu0 0.0
    %1489 = vmatpush1.msra.mxu0 0.0
    %1490 = vmatprep.subr.mxu0 0.0
    %1491 = vmatpush1.msra.mxu0 0.0
    %1492 = vmatprep.subr.mxu0 0.0
    %1493 = vmatpush1.msra.mxu0 0.0
    %1494 = vmatprep.subr.mxu0 0.0
    %1495 = vmatpush1.msra.mxu0 0.0
    %1496 = vmatprep.subr.mxu0 0.0
    %1497 = vmatpush1.msra.mxu0 0.0
    %1498 = vmatprep.subr.mxu0 0.0
    %1499 = vmatpush1.msra.mxu0 0.0
    %1500 = vmatprep.subr.mxu0 0.0
    %1501 = vmatpush1.msra.mxu0 0.0
    %1502 = vmatprep.subr.mxu0 0.0
    %1503 = vmatpush1.msra.mxu0 0.0
    %1504 = vmatprep.subr.mxu0 0.0
    %1505 = vmatpush1.msra.mxu0 0.0
    %1506 = vmatprep.subr.mxu0 0.0
    %1507 = vmatpush1.msra.mxu0 0.0
    %1508 = vmatprep.subr.mxu0 0.0
    %1509 = vmatpush1.msra.mxu0 0.0
    %1510 = vmatprep.subr.mxu0 0.0
    %1511 = vmatpush1.msra.mxu0 %v1475
    %1512 = vmatprep.subr.mxu0 0.0
    %1513 = vmatpush2.msra.mxu0 0.0
    %1514 = vmatprep.subr.mxu0 0.0
    %1515 = vmatpush2.msra.mxu0 0.0
    %1516 = vmatprep.subr.mxu0 0.0
    %1517 = vmatpush2.msra.mxu0 0.0
    %1518 = vmatprep.subr.mxu0 0.0
    %1519 = vmatpush2.msra.mxu0 0.0
    %1520 = vmatprep.subr.mxu0 0.0
    %1521 = vmatpush2.msra.mxu0 0.0
    %1522 = vmatprep.subr.mxu0 0.0
    %1523 = vmatpush2.msra.mxu0 0.0
    %1524 = vmatprep.subr.mxu0 0.0
    %1525 = vmatpush2.msra.mxu0 0.0
    %1526 = vmatprep.subr.mxu0 0.0
    %1527 = vmatpush2.msra.mxu0 0.0
    %1528 = vmatprep.subr.mxu0 0.0
    %1529 = vmatpush2.msra.mxu0 0.0
    %1530 = vmatprep.subr.mxu0 0.0
    %1531 = vmatpush2.msra.mxu0 0.0
    %1532 = vmatprep.subr.mxu0 0.0
    %1533 = vmatpush2.msra.mxu0 0.0
    %1534 = vmatprep.subr.mxu0 0.0
    %1535 = vmatpush2.msra.mxu0 0.0
    %1536 = vmatprep.subr.mxu0 0.0
    %1537 = vmatpush2.msra.mxu0 0.0
    %1538 = vmatprep.subr.mxu0 0.0
    %1539 = vmatpush2.msra.mxu0 0.0
    %1540 = vmatprep.subr.mxu0 0.0
    %1541 = vmatpush2.msra.mxu0 0.0
    %1542 = vmatprep.subr.mxu0 0.0
    %1543 = vmatpush2.msra.mxu0 0.0
    %1544 = vmatprep.mubr.f32.mxu0 0.0
    %1545 = vmatmul.mubr.f32.gmra.mxu0 %v1478
    %v1546 = vpop.f32.mrf.mxu0
    %v1547 = vadd.f32 0.0, %v1546
    %v1548 = vpop.f32.mrf.mxu0
    %1549 = vdwg.mxu0
    %1550 = vrot.lane.b32.xlu0 %v292, 64
    %v1551 = vpop.permute.xlu0 %1550
    %v1554 = vsel %vm305, %v1017, 0
    %1556 = vmatprep.subr.mxu0 0.0
    %1557 = vmatpush1.msra.mxu0 0.0
    %1558 = vmatprep.subr.mxu0 0.0
    %1559 = vmatpush1.msra.mxu0 0.0
    %1560 = vmatprep.subr.mxu0 0.0
    %1561 = vmatpush1.msra.mxu0 0.0
    %1562 = vmatprep.subr.mxu0 0.0
    %1563 = vmatpush1.msra.mxu0 0.0
    %1564 = vmatprep.subr.mxu0 0.0
    %1565 = vmatpush1.msra.mxu0 0.0
    %1566 = vmatprep.subr.mxu0 0.0
    %1567 = vmatpush1.msra.mxu0 0.0
    %1568 = vmatprep.subr.mxu0 0.0
    %1569 = vmatpush1.msra.mxu0 0.0
    %1570 = vmatprep.subr.mxu0 0.0
    %1571 = vmatpush1.msra.mxu0 0.0
    %1572 = vmatprep.subr.mxu0 0.0
    %1573 = vmatpush1.msra.mxu0 0.0
    %1574 = vmatprep.subr.mxu0 0.0
    %1575 = vmatpush1.msra.mxu0 0.0
    %1576 = vmatprep.subr.mxu0 0.0
    %1577 = vmatpush1.msra.mxu0 0.0
    %1578 = vmatprep.subr.mxu0 0.0
    %1579 = vmatpush1.msra.mxu0 0.0
    %1580 = vmatprep.subr.mxu0 0.0
    %1581 = vmatpush1.msra.mxu0 0.0
    %1582 = vmatprep.subr.mxu0 0.0
    %1583 = vmatpush1.msra.mxu0 0.0
    %1584 = vmatprep.subr.mxu0 0.0
    %1585 = vmatpush1.msra.mxu0 0.0
    %1586 = vmatprep.subr.mxu0 0.0
    %1587 = vmatpush1.msra.mxu0 %v1551
    %1588 = vmatprep.subr.mxu0 0.0
    %1589 = vmatpush2.msra.mxu0 0.0
    %1590 = vmatprep.subr.mxu0 0.0
    %1591 = vmatpush2.msra.mxu0 0.0
    %1592 = vmatprep.subr.mxu0 0.0
    %1593 = vmatpush2.msra.mxu0 0.0
    %1594 = vmatprep.subr.mxu0 0.0
    %1595 = vmatpush2.msra.mxu0 0.0
    %1596 = vmatprep.subr.mxu0 0.0
    %1597 = vmatpush2.msra.mxu0 0.0
    %1598 = vmatprep.subr.mxu0 0.0
    %1599 = vmatpush2.msra.mxu0 0.0
    %1600 = vmatprep.subr.mxu0 0.0
    %1601 = vmatpush2.msra.mxu0 0.0
    %1602 = vmatprep.subr.mxu0 0.0
    %1603 = vmatpush2.msra.mxu0 0.0
    %1604 = vmatprep.subr.mxu0 0.0
    %1605 = vmatpush2.msra.mxu0 0.0
    %1606 = vmatprep.subr.mxu0 0.0
    %1607 = vmatpush2.msra.mxu0 0.0
    %1608 = vmatprep.subr.mxu0 0.0
    %1609 = vmatpush2.msra.mxu0 0.0
    %1610 = vmatprep.subr.mxu0 0.0
    %1611 = vmatpush2.msra.mxu0 0.0
    %1612 = vmatprep.subr.mxu0 0.0
    %1613 = vmatpush2.msra.mxu0 0.0
    %1614 = vmatprep.subr.mxu0 0.0
    %1615 = vmatpush2.msra.mxu0 0.0
    %1616 = vmatprep.subr.mxu0 0.0
    %1617 = vmatpush2.msra.mxu0 0.0
    %1618 = vmatprep.subr.mxu0 0.0
    %1619 = vmatpush2.msra.mxu0 0.0
    %1620 = vmatprep.mubr.f32.mxu0 0.0
    %1621 = vmatmul.mubr.f32.gmra.mxu0 %v1554
    %v1622 = vpop.f32.mrf.mxu0
    %v1623 = vadd.f32 0.0, %v1622
    %v1624 = vpop.f32.mrf.mxu0
    %1625 = vdwg.mxu0
    %v1626 = vld [vmem:[%s4] sm:$0xff]
    %v1627 = vld [vmem:[%s4 + $0x8] sm:$0xff]
    %v1628 = vld [vmem:[%s4 + $0x10] sm:$0xff]
    %v1629 = vld [vmem:[%s4 + $0x18] sm:$0xff]
    %v1631 = vsel %vm305, %v1091, 0
    %v1634 = vsel %vm305, %v1167, 0
    %1636 = vmatprep.subr.mxu0 0.0
    %1637 = vmatpush1.msra.mxu0 0.0
    %1638 = vmatprep.subr.mxu0 0.0
    %1639 = vmatpush1.msra.mxu0 0.0
    %1640 = vmatprep.subr.mxu0 0.0
    %1641 = vmatpush1.msra.mxu0 0.0
    %1642 = vmatprep.subr.mxu0 0.0
    %1643 = vmatpush1.msra.mxu0 0.0
    %1644 = vmatprep.subr.mxu0 0.0
    %1645 = vmatpush1.msra.mxu0 0.0
    %1646 = vmatprep.subr.mxu0 0.0
    %1647 = vmatpush1.msra.mxu0 0.0
    %1648 = vmatprep.subr.mxu0 0.0
    %1649 = vmatpush1.msra.mxu0 0.0
    %1650 = vmatprep.subr.mxu0 0.0
    %1651 = vmatpush1.msra.mxu0 0.0
    %1652 = vmatprep.subr.mxu0 0.0
    %1653 = vmatpush1.msra.mxu0 0.0
    %1654 = vmatprep.subr.mxu0 0.0
    %1655 = vmatpush1.msra.mxu0 0.0
    %1656 = vmatprep.subr.mxu0 0.0
    %1657 = vmatpush1.msra.mxu0 0.0
    %1658 = vmatprep.subr.mxu0 0.0
    %1659 = vmatpush1.msra.mxu0 0.0
    %1660 = vmatprep.subr.mxu0 0.0
    %1661 = vmatpush1.msra.mxu0 0.0
    %1662 = vmatprep.subr.mxu0 0.0
    %1663 = vmatpush1.msra.mxu0 0.0
    %1664 = vmatprep.subr.mxu0 0.0
    %1665 = vmatpush1.msra.mxu0 0.0
    %1666 = vmatprep.subr.mxu0 0.0
    %1667 = vmatpush1.msra.mxu0 %v1626
    %1668 = vmatprep.subr.mxu0 0.0
    %1669 = vmatpush2.msra.mxu0 0.0
    %1670 = vmatprep.subr.mxu0 0.0
    %1671 = vmatpush2.msra.mxu0 0.0
    %1672 = vmatprep.subr.mxu0 0.0
    %1673 = vmatpush2.msra.mxu0 0.0
    %1674 = vmatprep.subr.mxu0 0.0
    %1675 = vmatpush2.msra.mxu0 0.0
    %1676 = vmatprep.subr.mxu0 0.0
    %1677 = vmatpush2.msra.mxu0 0.0
    %1678 = vmatprep.subr.mxu0 0.0
    %1679 = vmatpush2.msra.mxu0 0.0
    %1680 = vmatprep.subr.mxu0 0.0
    %1681 = vmatpush2.msra.mxu0 0.0
    %1682 = vmatprep.subr.mxu0 0.0
    %1683 = vmatpush2.msra.mxu0 0.0
    %1684 = vmatprep.subr.mxu0 0.0
    %1685 = vmatpush2.msra.mxu0 0.0
    %1686 = vmatprep.subr.mxu0 0.0
    %1687 = vmatpush2.msra.mxu0 0.0
    %1688 = vmatprep.subr.mxu0 0.0
    %1689 = vmatpush2.msra.mxu0 0.0
    %1690 = vmatprep.subr.mxu0 0.0
    %1691 = vmatpush2.msra.mxu0 0.0
    %1692 = vmatprep.subr.mxu0 0.0
    %1693 = vmatpush2.msra.mxu0 0.0
    %1694 = vmatprep.subr.mxu0 0.0
    %1695 = vmatpush2.msra.mxu0 0.0
    %1696 = vmatprep.subr.mxu0 0.0
    %1697 = vmatpush2.msra.mxu0 0.0
    %1698 = vmatprep.subr.mxu0 0.0
    %1699 = vmatpush2.msra.mxu0 0.0
    %1700 = vmatprep.mubr.f32.mxu0 0.0
    %1701 = vmatmul.mubr.f32.gmra.mxu0 %v1631
    %v1702 = vpop.f32.mrf.mxu0
    %v1703 = vadd.f32 0.0, %v1702
    %v1704 = vpop.f32.mrf.mxu0
    %1705 = vmatprep.mubr.f32.mxu0 0.0
    %1706 = vmatmul.mubr.f32.gmra.mxu0 %v1634
    %v1707 = vpop.f32.mrf.mxu0
    %v1708 = vadd.f32 0.0, %v1707
    %v1709 = vpop.f32.mrf.mxu0
    %1710 = vdwg.mxu0
    %v1712 = vsel %vm305, %v1243, 0
    %v1715 = vsel %vm305, %v1319, 0
    %1717 = vmatprep.subr.mxu0 0.0
    %1718 = vmatpush1.msra.mxu0 0.0
    %1719 = vmatprep.subr.mxu0 0.0
    %1720 = vmatpush1.msra.mxu0 0.0
    %1721 = vmatprep.subr.mxu0 0.0
    %1722 = vmatpush1.msra.mxu0 0.0
    %1723 = vmatprep.subr.mxu0 0.0
    %1724 = vmatpush1.msra.mxu0 0.0
    %1725 = vmatprep.subr.mxu0 0.0
    %1726 = vmatpush1.msra.mxu0 0.0
    %1727 = vmatprep.subr.mxu0 0.0
    %1728 = vmatpush1.msra.mxu0 0.0
    %1729 = vmatprep.subr.mxu0 0.0
    %1730 = vmatpush1.msra.mxu0 0.0
    %1731 = vmatprep.subr.mxu0 0.0
    %1732 = vmatpush1.msra.mxu0 0.0
    %1733 = vmatprep.subr.mxu0 0.0
    %1734 = vmatpush1.msra.mxu0 0.0
    %1735 = vmatprep.subr.mxu0 0.0
    %1736 = vmatpush1.msra.mxu0 0.0
    %1737 = vmatprep.subr.mxu0 0.0
    %1738 = vmatpush1.msra.mxu0 0.0
    %1739 = vmatprep.subr.mxu0 0.0
    %1740 = vmatpush1.msra.mxu0 0.0
    %1741 = vmatprep.subr.mxu0 0.0
    %1742 = vmatpush1.msra.mxu0 0.0
    %1743 = vmatprep.subr.mxu0 0.0
    %1744 = vmatpush1.msra.mxu0 0.0
    %1745 = vmatprep.subr.mxu0 0.0
    %1746 = vmatpush1.msra.mxu0 0.0
    %1747 = vmatprep.subr.mxu0 0.0
    %1748 = vmatpush1.msra.mxu0 %v1627
    %1749 = vmatprep.subr.mxu0 0.0
    %1750 = vmatpush2.msra.mxu0 0.0
    %1751 = vmatprep.subr.mxu0 0.0
    %1752 = vmatpush2.msra.mxu0 0.0
    %1753 = vmatprep.subr.mxu0 0.0
    %1754 = vmatpush2.msra.mxu0 0.0
    %1755 = vmatprep.subr.mxu0 0.0
    %1756 = vmatpush2.msra.mxu0 0.0
    %1757 = vmatprep.subr.mxu0 0.0
    %1758 = vmatpush2.msra.mxu0 0.0
    %1759 = vmatprep.subr.mxu0 0.0
    %1760 = vmatpush2.msra.mxu0 0.0
    %1761 = vmatprep.subr.mxu0 0.0
    %1762 = vmatpush2.msra.mxu0 0.0
    %1763 = vmatprep.subr.mxu0 0.0
    %1764 = vmatpush2.msra.mxu0 0.0
    %1765 = vmatprep.subr.mxu0 0.0
    %1766 = vmatpush2.msra.mxu0 0.0
    %1767 = vmatprep.subr.mxu0 0.0
    %1768 = vmatpush2.msra.mxu0 0.0
    %1769 = vmatprep.subr.mxu0 0.0
    %1770 = vmatpush2.msra.mxu0 0.0
    %1771 = vmatprep.subr.mxu0 0.0
    %1772 = vmatpush2.msra.mxu0 0.0
    %1773 = vmatprep.subr.mxu0 0.0
    %1774 = vmatpush2.msra.mxu0 0.0
    %1775 = vmatprep.subr.mxu0 0.0
    %1776 = vmatpush2.msra.mxu0 0.0
    %1777 = vmatprep.subr.mxu0 0.0
    %1778 = vmatpush2.msra.mxu0 0.0
    %1779 = vmatprep.subr.mxu0 0.0
    %1780 = vmatpush2.msra.mxu0 0.0
    %1781 = vmatprep.mubr.f32.mxu0 0.0
    %1782 = vmatmul.mubr.f32.gmra.mxu0 %v1712
    %v1783 = vpop.f32.mrf.mxu0
    %v1784 = vadd.f32 0.0, %v1783
    %v1785 = vpop.f32.mrf.mxu0
    %1786 = vmatprep.mubr.f32.mxu0 0.0
    %1787 = vmatmul.mubr.f32.gmra.mxu0 %v1715
    %v1788 = vpop.f32.mrf.mxu0
    %v1789 = vadd.f32 0.0, %v1788
    %v1790 = vpop.f32.mrf.mxu0
    %1791 = vdwg.mxu0
    %v1793 = vsel %vm305, %v1395, 0
    %v1796 = vsel %vm305, %v1471, 0
    %1798 = vmatprep.subr.mxu0 0.0
    %1799 = vmatpush1.msra.mxu0 0.0
    %1800 = vmatprep.subr.mxu0 0.0
    %1801 = vmatpush1.msra.mxu0 0.0
    %1802 = vmatprep.subr.mxu0 0.0
    %1803 = vmatpush1.msra.mxu0 0.0
    %1804 = vmatprep.subr.mxu0 0.0
    %1805 = vmatpush1.msra.mxu0 0.0
    %1806 = vmatprep.subr.mxu0 0.0
    %1807 = vmatpush1.msra.mxu0 0.0
    %1808 = vmatprep.subr.mxu0 0.0
    %1809 = vmatpush1.msra.mxu0 0.0
    %1810 = vmatprep.subr.mxu0 0.0
    %1811 = vmatpush1.msra.mxu0 0.0
    %1812 = vmatprep.subr.mxu0 0.0
    %1813 = vmatpush1.msra.mxu0 0.0
    %1814 = vmatprep.subr.mxu0 0.0
    %1815 = vmatpush1.msra.mxu0 0.0
    %1816 = vmatprep.subr.mxu0 0.0
    %1817 = vmatpush1.msra.mxu0 0.0
    %1818 = vmatprep.subr.mxu0 0.0
    %1819 = vmatpush1.msra.mxu0 0.0
    %1820 = vmatprep.subr.mxu0 0.0
    %1821 = vmatpush1.msra.mxu0 0.0
    %1822 = vmatprep.subr.mxu0 0.0
    %1823 = vmatpush1.msra.mxu0 0.0
    %1824 = vmatprep.subr.mxu0 0.0
    %1825 = vmatpush1.msra.mxu0 0.0
    %1826 = vmatprep.subr.mxu0 0.0
    %1827 = vmatpush1.msra.mxu0 0.0
    %1828 = vmatprep.subr.mxu0 0.0
    %1829 = vmatpush1.msra.mxu0 %v1628
    %1830 = vmatprep.subr.mxu0 0.0
    %1831 = vmatpush2.msra.mxu0 0.0
    %1832 = vmatprep.subr.mxu0 0.0
    %1833 = vmatpush2.msra.mxu0 0.0
    %1834 = vmatprep.subr.mxu0 0.0
    %1835 = vmatpush2.msra.mxu0 0.0
    %1836 = vmatprep.subr.mxu0 0.0
    %1837 = vmatpush2.msra.mxu0 0.0
    %1838 = vmatprep.subr.mxu0 0.0
    %1839 = vmatpush2.msra.mxu0 0.0
    %1840 = vmatprep.subr.mxu0 0.0
    %1841 = vmatpush2.msra.mxu0 0.0
    %1842 = vmatprep.subr.mxu0 0.0
    %1843 = vmatpush2.msra.mxu0 0.0
    %1844 = vmatprep.subr.mxu0 0.0
    %1845 = vmatpush2.msra.mxu0 0.0
    %1846 = vmatprep.subr.mxu0 0.0
    %1847 = vmatpush2.msra.mxu0 0.0
    %1848 = vmatprep.subr.mxu0 0.0
    %1849 = vmatpush2.msra.mxu0 0.0
    %1850 = vmatprep.subr.mxu0 0.0
    %1851 = vmatpush2.msra.mxu0 0.0
    %1852 = vmatprep.subr.mxu0 0.0
    %1853 = vmatpush2.msra.mxu0 0.0
    %1854 = vmatprep.subr.mxu0 0.0
    %1855 = vmatpush2.msra.mxu0 0.0
    %1856 = vmatprep.subr.mxu0 0.0
    %1857 = vmatpush2.msra.mxu0 0.0
    %1858 = vmatprep.subr.mxu0 0.0
    %1859 = vmatpush2.msra.mxu0 0.0
    %1860 = vmatprep.subr.mxu0 0.0
    %1861 = vmatpush2.msra.mxu0 0.0
    %1862 = vmatprep.mubr.f32.mxu0 0.0
    %1863 = vmatmul.mubr.f32.gmra.mxu0 %v1793
    %v1864 = vpop.f32.mrf.mxu0
    %v1865 = vadd.f32 0.0, %v1864
    %v1866 = vpop.f32.mrf.mxu0
    %1867 = vmatprep.mubr.f32.mxu0 0.0
    %1868 = vmatmul.mubr.f32.gmra.mxu0 %v1796
    %v1869 = vpop.f32.mrf.mxu0
    %v1870 = vadd.f32 0.0, %v1869
    %v1871 = vpop.f32.mrf.mxu0
    %1872 = vdwg.mxu0
    %v1874 = vsel %vm305, %v1547, 0
    %v1877 = vsel %vm305, %v1623, 0
    %1879 = vmatprep.subr.mxu0 0.0
    %1880 = vmatpush1.msra.mxu0 0.0
    %1881 = vmatprep.subr.mxu0 0.0
    %1882 = vmatpush1.msra.mxu0 0.0
    %1883 = vmatprep.subr.mxu0 0.0
    %1884 = vmatpush1.msra.mxu0 0.0
    %1885 = vmatprep.subr.mxu0 0.0
    %1886 = vmatpush1.msra.mxu0 0.0
    %1887 = vmatprep.subr.mxu0 0.0
    %1888 = vmatpush1.msra.mxu0 0.0
    %1889 = vmatprep.subr.mxu0 0.0
    %1890 = vmatpush1.msra.mxu0 0.0
    %1891 = vmatprep.subr.mxu0 0.0
    %1892 = vmatpush1.msra.mxu0 0.0
    %1893 = vmatprep.subr.mxu0 0.0
    %1894 = vmatpush1.msra.mxu0 0.0
    %1895 = vmatprep.subr.mxu0 0.0
    %1896 = vmatpush1.msra.mxu0 0.0
    %1897 = vmatprep.subr.mxu0 0.0
    %1898 = vmatpush1.msra.mxu0 0.0
    %1899 = vmatprep.subr.mxu0 0.0
    %1900 = vmatpush1.msra.mxu0 0.0
    %1901 = vmatprep.subr.mxu0 0.0
    %1902 = vmatpush1.msra.mxu0 0.0
    %1903 = vmatprep.subr.mxu0 0.0
    %1904 = vmatpush1.msra.mxu0 0.0
    %1905 = vmatprep.subr.mxu0 0.0
    %1906 = vmatpush1.msra.mxu0 0.0
    %1907 = vmatprep.subr.mxu0 0.0
    %1908 = vmatpush1.msra.mxu0 0.0
    %1909 = vmatprep.subr.mxu0 0.0
    %1910 = vmatpush1.msra.mxu0 %v1629
    %1911 = vmatprep.subr.mxu0 0.0
    %1912 = vmatpush2.msra.mxu0 0.0
    %1913 = vmatprep.subr.mxu0 0.0
    %1914 = vmatpush2.msra.mxu0 0.0
    %1915 = vmatprep.subr.mxu0 0.0
    %1916 = vmatpush2.msra.mxu0 0.0
    %1917 = vmatprep.subr.mxu0 0.0
    %1918 = vmatpush2.msra.mxu0 0.0
    %1919 = vmatprep.subr.mxu0 0.0
    %1920 = vmatpush2.msra.mxu0 0.0
    %1921 = vmatprep.subr.mxu0 0.0
    %1922 = vmatpush2.msra.mxu0 0.0
    %1923 = vmatprep.subr.mxu0 0.0
    %1924 = vmatpush2.msra.mxu0 0.0
    %1925 = vmatprep.subr.mxu0 0.0
    %1926 = vmatpush2.msra.mxu0 0.0
    %1927 = vmatprep.subr.mxu0 0.0
    %1928 = vmatpush2.msra.mxu0 0.0
    %1929 = vmatprep.subr.mxu0 0.0
    %1930 = vmatpush2.msra.mxu0 0.0
    %1931 = vmatprep.subr.mxu0 0.0
    %1932 = vmatpush2.msra.mxu0 0.0
    %1933 = vmatprep.subr.mxu0 0.0
    %1934 = vmatpush2.msra.mxu0 0.0
    %1935 = vmatprep.subr.mxu0 0.0
    %1936 = vmatpush2.msra.mxu0 0.0
    %1937 = vmatprep.subr.mxu0 0.0
    %1938 = vmatpush2.msra.mxu0 0.0
    %1939 = vmatprep.subr.mxu0 0.0
    %1940 = vmatpush2.msra.mxu0 0.0
    %1941 = vmatprep.subr.mxu0 0.0
    %1942 = vmatpush2.msra.mxu0 0.0
    %1943 = vmatprep.mubr.f32.mxu0 0.0
    %1944 = vmatmul.mubr.f32.gmra.mxu0 %v1874
    %v1945 = vpop.f32.mrf.mxu0
    %v1946 = vadd.f32 0.0, %v1945
    %v1947 = vpop.f32.mrf.mxu0
    %1948 = vmatprep.mubr.f32.mxu0 0.0
    %1949 = vmatmul.mubr.f32.gmra.mxu0 %v1877
    %v1950 = vpop.f32.mrf.mxu0
    %v1951 = vadd.f32 0.0, %v1950
    %v1952 = vpop.f32.mrf.mxu0
    %1953 = vdwg.mxu0
    %v1954 = vsel %vm193, %v1703, 0.0
    %v1955 = vsel %vm193, %v1784, 0.0
    %v1956 = vadd.f32 %v1954, %v1955
    %v1957 = vsel %vm193, %v1865, 0.0
    %v1958 = vadd.f32 %v1956, %v1957
    %v1959 = vsel %vm193, %v1946, 0.0
    %v1960 = vadd.f32 %v1958, %v1959
    %v1961 = vsel %vm193, %v1708, 0.0
    %v1962 = vsel %vm193, %v1789, 0.0
    %v1963 = vadd.f32 %v1961, %v1962
    %v1964 = vsel %vm193, %v1870, 0.0
    %v1965 = vadd.f32 %v1963, %v1964
    %v1966 = vsel %vm193, %v1951, 0.0
    %v1967 = vadd.f32 %v1965, %v1966
    %v1968 = vadd.f32 %v107, %v1960
    %v1969 = vadd.f32 %v108, %v1967
    %v1970 = vsel %vm193, %v1968, 0.0
    %1971 = vadd.xlane.f32.xlu0 %v1970
    %v1972 = vpop.xlane.xlu0 %1971
    %v1973 = vsel %vm193, %v1969, 0.0
    %1974 = vadd.xlane.f32.xlu0 %v1973
    %v1975 = vpop.xlane.xlu0 %1974
    %v1976 = vrcp.pop 32.0
    %v1977 = vmul.f32 %v1972, %v1976
    %v1978 = vmul.f32 %v1975, %v1976
    %v1979 = vsub.f32 %v1968, %v1977
    %v1980 = vsub.f32 %v1969, %v1978
    %v1981 = vmul.f32 %v1979, %v1979
    %v1982 = vmul.f32 %v1980, %v1980
    %v1983 = vsel %vm193, %v1981, 0.0
    %1984 = vadd.xlane.f32.xlu0 %v1983
    %v1985 = vpop.xlane.xlu0 %1984
    %v1986 = vsel %vm193, %v1982, 0.0
    %1987 = vadd.xlane.f32.xlu0 %v1986
    %v1988 = vpop.xlane.xlu0 %1987
    %v1989 = vmul.f32 %v1985, %v1976
    %v1990 = vmul.f32 %v1988, %v1976
    %v1991 = vadd.f32 %v1989, 1e-05
    %v1992 = vadd.f32 %v1990, 1e-05
    %v1993 = vrsqrt.pop %v1991
    %v1994 = vrsqrt.pop %v1992
    %v1995 = vmul.f32 %v1979, %v1993
    %v1996 = vmul.f32 %v1980, %v1994
    %v1997 = vlaneseq
    %v1998 = vshrl.u32 %v1997, 7
    %v1999 = vsub.s32 0, %v1998
    %v2000 = vrot.slane %v111, %v1999
    %v2001 = vmul.f32 %v1995, %v2000
    %v2002 = vmul.f32 %v1996, %v2000
    %v2003 = vlaneseq
    %v2004 = vshrl.u32 %v2003, 7
    %v2005 = vsub.s32 1, %v2004
    %v2006 = vrot.slane %v111, %v2005
    %v2007 = vadd.f32 %v2001, %v2006
    %v2008 = vadd.f32 %v2002, %v2006
    %v2009 = vld [vmem:[%s5] sm:$0xff]
    %v2010 = vld [vmem:[%s5 + $0x8] sm:$0xff]
    %v2011 = vld [vmem:[%s5 + $0x10] sm:$0xff]
    %v2012 = vld [vmem:[%s5 + $0x18] sm:$0xff]
    %v2014 = vsel %vm193, %v2007, 0
    %v2017 = vsel %vm193, %v2008, 0
    %2019 = vmatprep.subr.mxu0 0.0
    %2020 = vmatpush1.msra.mxu0 0.0
    %2021 = vmatprep.subr.mxu0 0.0
    %2022 = vmatpush1.msra.mxu0 0.0
    %2023 = vmatprep.subr.mxu0 0.0
    %2024 = vmatpush1.msra.mxu0 0.0
    %2025 = vmatprep.subr.mxu0 0.0
    %2026 = vmatpush1.msra.mxu0 0.0
    %2027 = vmatprep.subr.mxu0 0.0
    %2028 = vmatpush1.msra.mxu0 0.0
    %2029 = vmatprep.subr.mxu0 0.0
    %2030 = vmatpush1.msra.mxu0 0.0
    %2031 = vmatprep.subr.mxu0 0.0
    %2032 = vmatpush1.msra.mxu0 0.0
    %2033 = vmatprep.subr.mxu0 0.0
    %2034 = vmatpush1.msra.mxu0 0.0
    %2035 = vmatprep.subr.mxu0 0.0
    %2036 = vmatpush1.msra.mxu0 0.0
    %2037 = vmatprep.subr.mxu0 0.0
    %2038 = vmatpush1.msra.mxu0 0.0
    %2039 = vmatprep.subr.mxu0 0.0
    %2040 = vmatpush1.msra.mxu0 0.0
    %2041 = vmatprep.subr.mxu0 0.0
    %2042 = vmatpush1.msra.mxu0 0.0
    %2043 = vmatprep.subr.mxu0 0.0
    %2044 = vmatpush1.msra.mxu0 %v2012
    %2045 = vmatprep.subr.mxu0 0.0
    %2046 = vmatpush1.msra.mxu0 %v2011
    %2047 = vmatprep.subr.mxu0 0.0
    %2048 = vmatpush1.msra.mxu0 %v2010
    %2049 = vmatprep.subr.mxu0 0.0
    %2050 = vmatpush1.msra.mxu0 %v2009
    %2051 = vmatprep.subr.mxu0 0.0
    %2052 = vmatpush2.msra.mxu0 0.0
    %2053 = vmatprep.subr.mxu0 0.0
    %2054 = vmatpush2.msra.mxu0 0.0
    %2055 = vmatprep.subr.mxu0 0.0
    %2056 = vmatpush2.msra.mxu0 0.0
    %2057 = vmatprep.subr.mxu0 0.0
    %2058 = vmatpush2.msra.mxu0 0.0
    %2059 = vmatprep.subr.mxu0 0.0
    %2060 = vmatpush2.msra.mxu0 0.0
    %2061 = vmatprep.subr.mxu0 0.0
    %2062 = vmatpush2.msra.mxu0 0.0
    %2063 = vmatprep.subr.mxu0 0.0
    %2064 = vmatpush2.msra.mxu0 0.0
    %2065 = vmatprep.subr.mxu0 0.0
    %2066 = vmatpush2.msra.mxu0 0.0
    %2067 = vmatprep.subr.mxu0 0.0
    %2068 = vmatpush2.msra.mxu0 0.0
    %2069 = vmatprep.subr.mxu0 0.0
    %2070 = vmatpush2.msra.mxu0 0.0
    %2071 = vmatprep.subr.mxu0 0.0
    %2072 = vmatpush2.msra.mxu0 0.0
    %2073 = vmatprep.subr.mxu0 0.0
    %2074 = vmatpush2.msra.mxu0 0.0
    %2075 = vmatprep.subr.mxu0 0.0
    %2076 = vmatpush2.msra.mxu0 0.0
    %2077 = vmatprep.subr.mxu0 0.0
    %2078 = vmatpush2.msra.mxu0 0.0
    %2079 = vmatprep.subr.mxu0 0.0
    %2080 = vmatpush2.msra.mxu0 0.0
    %2081 = vmatprep.subr.mxu0 0.0
    %2082 = vmatpush2.msra.mxu0 0.0
    %2083 = vmatprep.mubr.f32.mxu0 0.0
    %2084 = vmatmul.mubr.f32.gmra.mxu0 %v2014
    %v2085 = vpop.f32.mrf.mxu0
    %v2086 = vadd.f32 0.0, %v2085
    %v2087 = vpop.f32.mrf.mxu0
    %2088 = vmatprep.mubr.f32.mxu0 0.0
    %2089 = vmatmul.mubr.f32.gmra.mxu0 %v2017
    %v2090 = vpop.f32.mrf.mxu0
    %v2091 = vadd.f32 0.0, %v2090
    %v2092 = vpop.f32.mrf.mxu0
    %2093 = vdwg.mxu0
    %v2094 = vld [vmem:[#allocation7] sm:$0xff]
    %v2095 = vld [vmem:[#allocation7 + $0x8] sm:$0xff]
    %v2096 = vld [vmem:[#allocation7 + $0x10] sm:$0xff]
    %v2097 = vld [vmem:[#allocation7 + $0x18] sm:$0xff]
    %v2099 = vsel %vm193, %v109, 0
    %v2102 = vsel %vm193, %v110, 0
    %2104 = vmatprep.subr.mxu0 0.0
    %2105 = vmatpush1.msra.mxu0 0.0
    %2106 = vmatprep.subr.mxu0 0.0
    %2107 = vmatpush1.msra.mxu0 0.0
    %2108 = vmatprep.subr.mxu0 0.0
    %2109 = vmatpush1.msra.mxu0 0.0
    %2110 = vmatprep.subr.mxu0 0.0
    %2111 = vmatpush1.msra.mxu0 0.0
    %2112 = vmatprep.subr.mxu0 0.0
    %2113 = vmatpush1.msra.mxu0 0.0
    %2114 = vmatprep.subr.mxu0 0.0
    %2115 = vmatpush1.msra.mxu0 0.0
    %2116 = vmatprep.subr.mxu0 0.0
    %2117 = vmatpush1.msra.mxu0 0.0
    %2118 = vmatprep.subr.mxu0 0.0
    %2119 = vmatpush1.msra.mxu0 0.0
    %2120 = vmatprep.subr.mxu0 0.0
    %2121 = vmatpush1.msra.mxu0 0.0
    %2122 = vmatprep.subr.mxu0 0.0
    %2123 = vmatpush1.msra.mxu0 0.0
    %2124 = vmatprep.subr.mxu0 0.0
    %2125 = vmatpush1.msra.mxu0 0.0
    %2126 = vmatprep.subr.mxu0 0.0
    %2127 = vmatpush1.msra.mxu0 0.0
    %2128 = vmatprep.subr.mxu0 0.0
    %2129 = vmatpush1.msra.mxu0 %v2097
    %2130 = vmatprep.subr.mxu0 0.0
    %2131 = vmatpush1.msra.mxu0 %v2096
    %2132 = vmatprep.subr.mxu0 0.0
    %2133 = vmatpush1.msra.mxu0 %v2095
    %2134 = vmatprep.subr.mxu0 0.0
    %2135 = vmatpush1.msra.mxu0 %v2094
    %2136 = vmatprep.subr.mxu0 0.0
    %2137 = vmatpush2.msra.mxu0 0.0
    %2138 = vmatprep.subr.mxu0 0.0
    %2139 = vmatpush2.msra.mxu0 0.0
    %2140 = vmatprep.subr.mxu0 0.0
    %2141 = vmatpush2.msra.mxu0 0.0
    %2142 = vmatprep.subr.mxu0 0.0
    %2143 = vmatpush2.msra.mxu0 0.0
    %2144 = vmatprep.subr.mxu0 0.0
    %2145 = vmatpush2.msra.mxu0 0.0
    %2146 = vmatprep.subr.mxu0 0.0
    %2147 = vmatpush2.msra.mxu0 0.0
    %2148 = vmatprep.subr.mxu0 0.0
    %2149 = vmatpush2.msra.mxu0 0.0
    %2150 = vmatprep.subr.mxu0 0.0
    %2151 = vmatpush2.msra.mxu0 0.0
    %2152 = vmatprep.subr.mxu0 0.0
    %2153 = vmatpush2.msra.mxu0 0.0
    %2154 = vmatprep.subr.mxu0 0.0
    %2155 = vmatpush2.msra.mxu0 0.0
    %2156 = vmatprep.subr.mxu0 0.0
    %2157 = vmatpush2.msra.mxu0 0.0
    %2158 = vmatprep.subr.mxu0 0.0
    %2159 = vmatpush2.msra.mxu0 0.0
    %2160 = vmatprep.subr.mxu0 0.0
    %2161 = vmatpush2.msra.mxu0 0.0
    %2162 = vmatprep.subr.mxu0 0.0
    %2163 = vmatpush2.msra.mxu0 0.0
    %2164 = vmatprep.subr.mxu0 0.0
    %2165 = vmatpush2.msra.mxu0 0.0
    %2166 = vmatprep.subr.mxu0 0.0
    %2167 = vmatpush2.msra.mxu0 0.0
    %2168 = vmatprep.mubr.f32.mxu0 0.0
    %2169 = vmatmul.mubr.f32.gmra.mxu0 %v2099
    %v2170 = vpop.f32.mrf.mxu0
    %v2171 = vadd.f32 0.0, %v2170
    %v2172 = vpop.f32.mrf.mxu0
    %2173 = vmatprep.mubr.f32.mxu0 0.0
    %2174 = vmatmul.mubr.f32.gmra.mxu0 %v2102
    %v2175 = vpop.f32.mrf.mxu0
    %v2176 = vadd.f32 0.0, %v2175
    %v2177 = vpop.f32.mrf.mxu0
    %2178 = vdwg.mxu0
    %2181 = vrot.lane.b32.xlu0 %v2086, 120
    %v2182 = vpop.permute.xlu0 %2181
    %2183 = vrot.lane.b32.xlu0 %v2091, 120
    %v2184 = vpop.permute.xlu0 %2183
    %2187 = vrot.lane.b32.xlu0 %v2086, 112
    %v2188 = vpop.permute.xlu0 %2187
    %2189 = vrot.lane.b32.xlu0 %v2091, 112
    %v2190 = vpop.permute.xlu0 %2189
    %2193 = vrot.lane.b32.xlu0 %v2086, 104
    %v2194 = vpop.permute.xlu0 %2193
    %2195 = vrot.lane.b32.xlu0 %v2091, 104
    %v2196 = vpop.permute.xlu0 %2195
    %v2199 = vmul.f32 %v2086, 0.35355338
    %v2200 = vmul.f32 %v2091, 0.35355338
    %v2201 = vmul.f32 %v2182, 0.35355338
    %v2202 = vmul.f32 %v2184, 0.35355338
    %v2203 = vmul.f32 %v2188, 0.35355338
    %v2204 = vmul.f32 %v2190, 0.35355338
    %v2205 = vmul.f32 %v2194, 0.35355338
    %v2206 = vmul.f32 %v2196, 0.35355338
    %2209 = vrot.lane.b32.xlu0 %v2171, 120
    %v2210 = vpop.permute.xlu0 %2209
    %2211 = vrot.lane.b32.xlu0 %v2176, 120
    %v2212 = vpop.permute.xlu0 %2211
    %2213 = vrot.lane.b32.xlu0 %v2171, 112
    %v2214 = vpop.permute.xlu0 %2213
    %2215 = vrot.lane.b32.xlu0 %v2176, 112
    %v2216 = vpop.permute.xlu0 %2215
    %2217 = vrot.lane.b32.xlu0 %v2171, 104
    %v2218 = vpop.permute.xlu0 %2217
    %2219 = vrot.lane.b32.xlu0 %v2176, 104
    %v2220 = vpop.permute.xlu0 %2219
    %v2222 = vsel %vm305, %v2199, 0
    %v2224 = vsel %vm305, %v2171, 0
    %2226 = vmatprep.subr.mxu0 0.0
    %2227 = vmatpush1.xpose.msra.mxu0 0.0
    %2228 = vmatprep.subr.mxu0 0.0
    %2229 = vmatpush1.xpose.msra.mxu0 0.0
    %2230 = vmatprep.subr.mxu0 0.0
    %2231 = vmatpush1.xpose.msra.mxu0 0.0
    %2232 = vmatprep.subr.mxu0 0.0
    %2233 = vmatpush1.xpose.msra.mxu0 0.0
    %2234 = vmatprep.subr.mxu0 0.0
    %2235 = vmatpush1.xpose.msra.mxu0 0.0
    %2236 = vmatprep.subr.mxu0 0.0
    %2237 = vmatpush1.xpose.msra.mxu0 0.0
    %2238 = vmatprep.subr.mxu0 0.0
    %2239 = vmatpush1.xpose.msra.mxu0 0.0
    %2240 = vmatprep.subr.mxu0 0.0
    %2241 = vmatpush1.xpose.msra.mxu0 0.0
    %2242 = vmatprep.subr.mxu0 0.0
    %2243 = vmatpush1.xpose.msra.mxu0 0.0
    %2244 = vmatprep.subr.mxu0 0.0
    %2245 = vmatpush1.xpose.msra.mxu0 0.0
    %2246 = vmatprep.subr.mxu0 0.0
    %2247 = vmatpush1.xpose.msra.mxu0 0.0
    %2248 = vmatprep.subr.mxu0 0.0
    %2249 = vmatpush1.xpose.msra.mxu0 0.0
    %2250 = vmatprep.subr.mxu0 0.0
    %2251 = vmatpush1.xpose.msra.mxu0 0.0
    %2252 = vmatprep.subr.mxu0 0.0
    %2253 = vmatpush1.xpose.msra.mxu0 0.0
    %2254 = vmatprep.subr.mxu0 0.0
    %2255 = vmatpush1.xpose.msra.mxu0 0.0
    %2256 = vmatprep.subr.mxu0 0.0
    %2257 = vmatpush1.xpose.msra.mxu0 %v2224
    %2258 = vmatprep.subr.mxu0 0.0
    %2259 = vmatpush2.xpose.msra.mxu0 0.0
    %2260 = vmatprep.subr.mxu0 0.0
    %2261 = vmatpush2.xpose.msra.mxu0 0.0
    %2262 = vmatprep.subr.mxu0 0.0
    %2263 = vmatpush2.xpose.msra.mxu0 0.0
    %2264 = vmatprep.subr.mxu0 0.0
    %2265 = vmatpush2.xpose.msra.mxu0 0.0
    %2266 = vmatprep.subr.mxu0 0.0
    %2267 = vmatpush2.xpose.msra.mxu0 0.0
    %2268 = vmatprep.subr.mxu0 0.0
    %2269 = vmatpush2.xpose.msra.mxu0 0.0
    %2270 = vmatprep.subr.mxu0 0.0
    %2271 = vmatpush2.xpose.msra.mxu0 0.0
    %2272 = vmatprep.subr.mxu0 0.0
    %2273 = vmatpush2.xpose.msra.mxu0 0.0
    %2274 = vmatprep.subr.mxu0 0.0
    %2275 = vmatpush2.xpose.msra.mxu0 0.0
    %2276 = vmatprep.subr.mxu0 0.0
    %2277 = vmatpush2.xpose.msra.mxu0 0.0
    %2278 = vmatprep.subr.mxu0 0.0
    %2279 = vmatpush2.xpose.msra.mxu0 0.0
    %2280 = vmatprep.subr.mxu0 0.0
    %2281 = vmatpush2.xpose.msra.mxu0 0.0
    %2282 = vmatprep.subr.mxu0 0.0
    %2283 = vmatpush2.xpose.msra.mxu0 0.0
    %2284 = vmatprep.subr.mxu0 0.0
    %2285 = vmatpush2.xpose.msra.mxu0 0.0
    %2286 = vmatprep.subr.mxu0 0.0
    %2287 = vmatpush2.xpose.msra.mxu0 0.0
    %2288 = vmatprep.subr.mxu0 0.0
    %2289 = vmatpush2.xpose.msra.mxu0 0.0
    %2290 = vmatprep.mubr.f32.mxu0 0.0
    %2291 = vmatmul.mubr.f32.gmra.mxu0 %v2222
    %v2292 = vpop.f32.mrf.mxu0
    %v2293 = vadd.f32 0.0, %v2292
    %v2294 = vpop.f32.mrf.mxu0
    %2295 = vdwg.mxu0
    %v2297 = vsel %vm305, %v2200, 0
    %v2299 = vsel %vm305, %v2176, 0
    %2301 = vmatprep.subr.mxu0 0.0
    %2302 = vmatpush1.xpose.msra.mxu0 0.0
    %2303 = vmatprep.subr.mxu0 0.0
    %2304 = vmatpush1.xpose.msra.mxu0 0.0
    %2305 = vmatprep.subr.mxu0 0.0
    %2306 = vmatpush1.xpose.msra.mxu0 0.0
    %2307 = vmatprep.subr.mxu0 0.0
    %2308 = vmatpush1.xpose.msra.mxu0 0.0
    %2309 = vmatprep.subr.mxu0 0.0
    %2310 = vmatpush1.xpose.msra.mxu0 0.0
    %2311 = vmatprep.subr.mxu0 0.0
    %2312 = vmatpush1.xpose.msra.mxu0 0.0
    %2313 = vmatprep.subr.mxu0 0.0
    %2314 = vmatpush1.xpose.msra.mxu0 0.0
    %2315 = vmatprep.subr.mxu0 0.0
    %2316 = vmatpush1.xpose.msra.mxu0 0.0
    %2317 = vmatprep.subr.mxu0 0.0
    %2318 = vmatpush1.xpose.msra.mxu0 0.0
    %2319 = vmatprep.subr.mxu0 0.0
    %2320 = vmatpush1.xpose.msra.mxu0 0.0
    %2321 = vmatprep.subr.mxu0 0.0
    %2322 = vmatpush1.xpose.msra.mxu0 0.0
    %2323 = vmatprep.subr.mxu0 0.0
    %2324 = vmatpush1.xpose.msra.mxu0 0.0
    %2325 = vmatprep.subr.mxu0 0.0
    %2326 = vmatpush1.xpose.msra.mxu0 0.0
    %2327 = vmatprep.subr.mxu0 0.0
    %2328 = vmatpush1.xpose.msra.mxu0 0.0
    %2329 = vmatprep.subr.mxu0 0.0
    %2330 = vmatpush1.xpose.msra.mxu0 0.0
    %2331 = vmatprep.subr.mxu0 0.0
    %2332 = vmatpush1.xpose.msra.mxu0 %v2299
    %2333 = vmatprep.subr.mxu0 0.0
    %2334 = vmatpush2.xpose.msra.mxu0 0.0
    %2335 = vmatprep.subr.mxu0 0.0
    %2336 = vmatpush2.xpose.msra.mxu0 0.0
    %2337 = vmatprep.subr.mxu0 0.0
    %2338 = vmatpush2.xpose.msra.mxu0 0.0
    %2339 = vmatprep.subr.mxu0 0.0
    %2340 = vmatpush2.xpose.msra.mxu0 0.0
    %2341 = vmatprep.subr.mxu0 0.0
    %2342 = vmatpush2.xpose.msra.mxu0 0.0
    %2343 = vmatprep.subr.mxu0 0.0
    %2344 = vmatpush2.xpose.msra.mxu0 0.0
    %2345 = vmatprep.subr.mxu0 0.0
    %2346 = vmatpush2.xpose.msra.mxu0 0.0
    %2347 = vmatprep.subr.mxu0 0.0
    %2348 = vmatpush2.xpose.msra.mxu0 0.0
    %2349 = vmatprep.subr.mxu0 0.0
    %2350 = vmatpush2.xpose.msra.mxu0 0.0
    %2351 = vmatprep.subr.mxu0 0.0
    %2352 = vmatpush2.xpose.msra.mxu0 0.0
    %2353 = vmatprep.subr.mxu0 0.0
    %2354 = vmatpush2.xpose.msra.mxu0 0.0
    %2355 = vmatprep.subr.mxu0 0.0
    %2356 = vmatpush2.xpose.msra.mxu0 0.0
    %2357 = vmatprep.subr.mxu0 0.0
    %2358 = vmatpush2.xpose.msra.mxu0 0.0
    %2359 = vmatprep.subr.mxu0 0.0
    %2360 = vmatpush2.xpose.msra.mxu0 0.0
    %2361 = vmatprep.subr.mxu0 0.0
    %2362 = vmatpush2.xpose.msra.mxu0 0.0
    %2363 = vmatprep.subr.mxu0 0.0
    %2364 = vmatpush2.xpose.msra.mxu0 0.0
    %2365 = vmatprep.mubr.f32.mxu0 0.0
    %2366 = vmatmul.mubr.f32.gmra.mxu0 %v2297
    %v2367 = vpop.f32.mrf.mxu0
    %v2368 = vadd.f32 0.0, %v2367
    %v2369 = vpop.f32.mrf.mxu0
    %2370 = vdwg.mxu0
    %v2372 = vsel %vm305, %v2201, 0
    %v2374 = vsel %vm305, %v2210, 0
    %2376 = vmatprep.subr.mxu0 0.0
    %2377 = vmatpush1.xpose.msra.mxu0 0.0
    %2378 = vmatprep.subr.mxu0 0.0
    %2379 = vmatpush1.xpose.msra.mxu0 0.0
    %2380 = vmatprep.subr.mxu0 0.0
    %2381 = vmatpush1.xpose.msra.mxu0 0.0
    %2382 = vmatprep.subr.mxu0 0.0
    %2383 = vmatpush1.xpose.msra.mxu0 0.0
    %2384 = vmatprep.subr.mxu0 0.0
    %2385 = vmatpush1.xpose.msra.mxu0 0.0
    %2386 = vmatprep.subr.mxu0 0.0
    %2387 = vmatpush1.xpose.msra.mxu0 0.0
    %2388 = vmatprep.subr.mxu0 0.0
    %2389 = vmatpush1.xpose.msra.mxu0 0.0
    %2390 = vmatprep.subr.mxu0 0.0
    %2391 = vmatpush1.xpose.msra.mxu0 0.0
    %2392 = vmatprep.subr.mxu0 0.0
    %2393 = vmatpush1.xpose.msra.mxu0 0.0
    %2394 = vmatprep.subr.mxu0 0.0
    %2395 = vmatpush1.xpose.msra.mxu0 0.0
    %2396 = vmatprep.subr.mxu0 0.0
    %2397 = vmatpush1.xpose.msra.mxu0 0.0
    %2398 = vmatprep.subr.mxu0 0.0
    %2399 = vmatpush1.xpose.msra.mxu0 0.0
    %2400 = vmatprep.subr.mxu0 0.0
    %2401 = vmatpush1.xpose.msra.mxu0 0.0
    %2402 = vmatprep.subr.mxu0 0.0
    %2403 = vmatpush1.xpose.msra.mxu0 0.0
    %2404 = vmatprep.subr.mxu0 0.0
    %2405 = vmatpush1.xpose.msra.mxu0 0.0
    %2406 = vmatprep.subr.mxu0 0.0
    %2407 = vmatpush1.xpose.msra.mxu0 %v2374
    %2408 = vmatprep.subr.mxu0 0.0
    %2409 = vmatpush2.xpose.msra.mxu0 0.0
    %2410 = vmatprep.subr.mxu0 0.0
    %2411 = vmatpush2.xpose.msra.mxu0 0.0
    %2412 = vmatprep.subr.mxu0 0.0
    %2413 = vmatpush2.xpose.msra.mxu0 0.0
    %2414 = vmatprep.subr.mxu0 0.0
    %2415 = vmatpush2.xpose.msra.mxu0 0.0
    %2416 = vmatprep.subr.mxu0 0.0
    %2417 = vmatpush2.xpose.msra.mxu0 0.0
    %2418 = vmatprep.subr.mxu0 0.0
    %2419 = vmatpush2.xpose.msra.mxu0 0.0
    %2420 = vmatprep.subr.mxu0 0.0
    %2421 = vmatpush2.xpose.msra.mxu0 0.0
    %2422 = vmatprep.subr.mxu0 0.0
    %2423 = vmatpush2.xpose.msra.mxu0 0.0
    %2424 = vmatprep.subr.mxu0 0.0
    %2425 = vmatpush2.xpose.msra.mxu0 0.0
    %2426 = vmatprep.subr.mxu0 0.0
    %2427 = vmatpush2.xpose.msra.mxu0 0.0
    %2428 = vmatprep.subr.mxu0 0.0
    %2429 = vmatpush2.xpose.msra.mxu0 0.0
    %2430 = vmatprep.subr.mxu0 0.0
    %2431 = vmatpush2.xpose.msra.mxu0 0.0
    %2432 = vmatprep.subr.mxu0 0.0
    %2433 = vmatpush2.xpose.msra.mxu0 0.0
    %2434 = vmatprep.subr.mxu0 0.0
    %2435 = vmatpush2.xpose.msra.mxu0 0.0
    %2436 = vmatprep.subr.mxu0 0.0
    %2437 = vmatpush2.xpose.msra.mxu0 0.0
    %2438 = vmatprep.subr.mxu0 0.0
    %2439 = vmatpush2.xpose.msra.mxu0 0.0
    %2440 = vmatprep.mubr.f32.mxu0 0.0
    %2441 = vmatmul.mubr.f32.gmra.mxu0 %v2372
    %v2442 = vpop.f32.mrf.mxu0
    %v2443 = vadd.f32 0.0, %v2442
    %v2444 = vpop.f32.mrf.mxu0
    %2445 = vdwg.mxu0
    %v2447 = vsel %vm305, %v2202, 0
    %v2449 = vsel %vm305, %v2212, 0
    %2451 = vmatprep.subr.mxu0 0.0
    %2452 = vmatpush1.xpose.msra.mxu0 0.0
    %2453 = vmatprep.subr.mxu0 0.0
    %2454 = vmatpush1.xpose.msra.mxu0 0.0
    %2455 = vmatprep.subr.mxu0 0.0
    %2456 = vmatpush1.xpose.msra.mxu0 0.0
    %2457 = vmatprep.subr.mxu0 0.0
    %2458 = vmatpush1.xpose.msra.mxu0 0.0
    %2459 = vmatprep.subr.mxu0 0.0
    %2460 = vmatpush1.xpose.msra.mxu0 0.0
    %2461 = vmatprep.subr.mxu0 0.0
    %2462 = vmatpush1.xpose.msra.mxu0 0.0
    %2463 = vmatprep.subr.mxu0 0.0
    %2464 = vmatpush1.xpose.msra.mxu0 0.0
    %2465 = vmatprep.subr.mxu0 0.0
    %2466 = vmatpush1.xpose.msra.mxu0 0.0
    %2467 = vmatprep.subr.mxu0 0.0
    %2468 = vmatpush1.xpose.msra.mxu0 0.0
    %2469 = vmatprep.subr.mxu0 0.0
    %2470 = vmatpush1.xpose.msra.mxu0 0.0
    %2471 = vmatprep.subr.mxu0 0.0
    %2472 = vmatpush1.xpose.msra.mxu0 0.0
    %2473 = vmatprep.subr.mxu0 0.0
    %2474 = vmatpush1.xpose.msra.mxu0 0.0
    %2475 = vmatprep.subr.mxu0 0.0
    %2476 = vmatpush1.xpose.msra.mxu0 0.0
    %2477 = vmatprep.subr.mxu0 0.0
    %2478 = vmatpush1.xpose.msra.mxu0 0.0
    %2479 = vmatprep.subr.mxu0 0.0
    %2480 = vmatpush1.xpose.msra.mxu0 0.0
    %2481 = vmatprep.subr.mxu0 0.0
    %2482 = vmatpush1.xpose.msra.mxu0 %v2449
    %2483 = vmatprep.subr.mxu0 0.0
    %2484 = vmatpush2.xpose.msra.mxu0 0.0
    %2485 = vmatprep.subr.mxu0 0.0
    %2486 = vmatpush2.xpose.msra.mxu0 0.0
    %2487 = vmatprep.subr.mxu0 0.0
    %2488 = vmatpush2.xpose.msra.mxu0 0.0
    %2489 = vmatprep.subr.mxu0 0.0
    %2490 = vmatpush2.xpose.msra.mxu0 0.0
    %2491 = vmatprep.subr.mxu0 0.0
    %2492 = vmatpush2.xpose.msra.mxu0 0.0
    %2493 = vmatprep.subr.mxu0 0.0
    %2494 = vmatpush2.xpose.msra.mxu0 0.0
    %2495 = vmatprep.subr.mxu0 0.0
    %2496 = vmatpush2.xpose.msra.mxu0 0.0
    %2497 = vmatprep.subr.mxu0 0.0
    %2498 = vmatpush2.xpose.msra.mxu0 0.0
    %2499 = vmatprep.subr.mxu0 0.0
    %2500 = vmatpush2.xpose.msra.mxu0 0.0
    %2501 = vmatprep.subr.mxu0 0.0
    %2502 = vmatpush2.xpose.msra.mxu0 0.0
    %2503 = vmatprep.subr.mxu0 0.0
    %2504 = vmatpush2.xpose.msra.mxu0 0.0
    %2505 = vmatprep.subr.mxu0 0.0
    %2506 = vmatpush2.xpose.msra.mxu0 0.0
    %2507 = vmatprep.subr.mxu0 0.0
    %2508 = vmatpush2.xpose.msra.mxu0 0.0
    %2509 = vmatprep.subr.mxu0 0.0
    %2510 = vmatpush2.xpose.msra.mxu0 0.0
    %2511 = vmatprep.subr.mxu0 0.0
    %2512 = vmatpush2.xpose.msra.mxu0 0.0
    %2513 = vmatprep.subr.mxu0 0.0
    %2514 = vmatpush2.xpose.msra.mxu0 0.0
    %2515 = vmatprep.mubr.f32.mxu0 0.0
    %2516 = vmatmul.mubr.f32.gmra.mxu0 %v2447
    %v2517 = vpop.f32.mrf.mxu0
    %v2518 = vadd.f32 0.0, %v2517
    %v2519 = vpop.f32.mrf.mxu0
    %2520 = vdwg.mxu0
    %v2522 = vsel %vm305, %v2203, 0
    %v2524 = vsel %vm305, %v2214, 0
    %2526 = vmatprep.subr.mxu0 0.0
    %2527 = vmatpush1.xpose.msra.mxu0 0.0
    %2528 = vmatprep.subr.mxu0 0.0
    %2529 = vmatpush1.xpose.msra.mxu0 0.0
    %2530 = vmatprep.subr.mxu0 0.0
    %2531 = vmatpush1.xpose.msra.mxu0 0.0
    %2532 = vmatprep.subr.mxu0 0.0
    %2533 = vmatpush1.xpose.msra.mxu0 0.0
    %2534 = vmatprep.subr.mxu0 0.0
    %2535 = vmatpush1.xpose.msra.mxu0 0.0
    %2536 = vmatprep.subr.mxu0 0.0
    %2537 = vmatpush1.xpose.msra.mxu0 0.0
    %2538 = vmatprep.subr.mxu0 0.0
    %2539 = vmatpush1.xpose.msra.mxu0 0.0
    %2540 = vmatprep.subr.mxu0 0.0
    %2541 = vmatpush1.xpose.msra.mxu0 0.0
    %2542 = vmatprep.subr.mxu0 0.0
    %2543 = vmatpush1.xpose.msra.mxu0 0.0
    %2544 = vmatprep.subr.mxu0 0.0
    %2545 = vmatpush1.xpose.msra.mxu0 0.0
    %2546 = vmatprep.subr.mxu0 0.0
    %2547 = vmatpush1.xpose.msra.mxu0 0.0
    %2548 = vmatprep.subr.mxu0 0.0
    %2549 = vmatpush1.xpose.msra.mxu0 0.0
    %2550 = vmatprep.subr.mxu0 0.0
    %2551 = vmatpush1.xpose.msra.mxu0 0.0
    %2552 = vmatprep.subr.mxu0 0.0
    %2553 = vmatpush1.xpose.msra.mxu0 0.0
    %2554 = vmatprep.subr.mxu0 0.0
    %2555 = vmatpush1.xpose.msra.mxu0 0.0
    %2556 = vmatprep.subr.mxu0 0.0
    %2557 = vmatpush1.xpose.msra.mxu0 %v2524
    %2558 = vmatprep.subr.mxu0 0.0
    %2559 = vmatpush2.xpose.msra.mxu0 0.0
    %2560 = vmatprep.subr.mxu0 0.0
    %2561 = vmatpush2.xpose.msra.mxu0 0.0
    %2562 = vmatprep.subr.mxu0 0.0
    %2563 = vmatpush2.xpose.msra.mxu0 0.0
    %2564 = vmatprep.subr.mxu0 0.0
    %2565 = vmatpush2.xpose.msra.mxu0 0.0
    %2566 = vmatprep.subr.mxu0 0.0
    %2567 = vmatpush2.xpose.msra.mxu0 0.0
    %2568 = vmatprep.subr.mxu0 0.0
    %2569 = vmatpush2.xpose.msra.mxu0 0.0
    %2570 = vmatprep.subr.mxu0 0.0
    %2571 = vmatpush2.xpose.msra.mxu0 0.0
    %2572 = vmatprep.subr.mxu0 0.0
    %2573 = vmatpush2.xpose.msra.mxu0 0.0
    %2574 = vmatprep.subr.mxu0 0.0
    %2575 = vmatpush2.xpose.msra.mxu0 0.0
    %2576 = vmatprep.subr.mxu0 0.0
    %2577 = vmatpush2.xpose.msra.mxu0 0.0
    %2578 = vmatprep.subr.mxu0 0.0
    %2579 = vmatpush2.xpose.msra.mxu0 0.0
    %2580 = vmatprep.subr.mxu0 0.0
    %2581 = vmatpush2.xpose.msra.mxu0 0.0
    %2582 = vmatprep.subr.mxu0 0.0
    %2583 = vmatpush2.xpose.msra.mxu0 0.0
    %2584 = vmatprep.subr.mxu0 0.0
    %2585 = vmatpush2.xpose.msra.mxu0 0.0
    %2586 = vmatprep.subr.mxu0 0.0
    %2587 = vmatpush2.xpose.msra.mxu0 0.0
    %2588 = vmatprep.subr.mxu0 0.0
    %2589 = vmatpush2.xpose.msra.mxu0 0.0
    %2590 = vmatprep.mubr.f32.mxu0 0.0
    %2591 = vmatmul.mubr.f32.gmra.mxu0 %v2522
    %v2592 = vpop.f32.mrf.mxu0
    %v2593 = vadd.f32 0.0, %v2592
    %v2594 = vpop.f32.mrf.mxu0
    %2595 = vdwg.mxu0
    %v2597 = vsel %vm305, %v2204, 0
    %v2599 = vsel %vm305, %v2216, 0
    %2601 = vmatprep.subr.mxu0 0.0
    %2602 = vmatpush1.xpose.msra.mxu0 0.0
    %2603 = vmatprep.subr.mxu0 0.0
    %2604 = vmatpush1.xpose.msra.mxu0 0.0
    %2605 = vmatprep.subr.mxu0 0.0
    %2606 = vmatpush1.xpose.msra.mxu0 0.0
    %2607 = vmatprep.subr.mxu0 0.0
    %2608 = vmatpush1.xpose.msra.mxu0 0.0
    %2609 = vmatprep.subr.mxu0 0.0
    %2610 = vmatpush1.xpose.msra.mxu0 0.0
    %2611 = vmatprep.subr.mxu0 0.0
    %2612 = vmatpush1.xpose.msra.mxu0 0.0
    %2613 = vmatprep.subr.mxu0 0.0
    %2614 = vmatpush1.xpose.msra.mxu0 0.0
    %2615 = vmatprep.subr.mxu0 0.0
    %2616 = vmatpush1.xpose.msra.mxu0 0.0
    %2617 = vmatprep.subr.mxu0 0.0
    %2618 = vmatpush1.xpose.msra.mxu0 0.0
    %2619 = vmatprep.subr.mxu0 0.0
    %2620 = vmatpush1.xpose.msra.mxu0 0.0
    %2621 = vmatprep.subr.mxu0 0.0
    %2622 = vmatpush1.xpose.msra.mxu0 0.0
    %2623 = vmatprep.subr.mxu0 0.0
    %2624 = vmatpush1.xpose.msra.mxu0 0.0
    %2625 = vmatprep.subr.mxu0 0.0
    %2626 = vmatpush1.xpose.msra.mxu0 0.0
    %2627 = vmatprep.subr.mxu0 0.0
    %2628 = vmatpush1.xpose.msra.mxu0 0.0
    %2629 = vmatprep.subr.mxu0 0.0
    %2630 = vmatpush1.xpose.msra.mxu0 0.0
    %2631 = vmatprep.subr.mxu0 0.0
    %2632 = vmatpush1.xpose.msra.mxu0 %v2599
    %2633 = vmatprep.subr.mxu0 0.0
    %2634 = vmatpush2.xpose.msra.mxu0 0.0
    %2635 = vmatprep.subr.mxu0 0.0
    %2636 = vmatpush2.xpose.msra.mxu0 0.0
    %2637 = vmatprep.subr.mxu0 0.0
    %2638 = vmatpush2.xpose.msra.mxu0 0.0
    %2639 = vmatprep.subr.mxu0 0.0
    %2640 = vmatpush2.xpose.msra.mxu0 0.0
    %2641 = vmatprep.subr.mxu0 0.0
    %2642 = vmatpush2.xpose.msra.mxu0 0.0
    %2643 = vmatprep.subr.mxu0 0.0
    %2644 = vmatpush2.xpose.msra.mxu0 0.0
    %2645 = vmatprep.subr.mxu0 0.0
    %2646 = vmatpush2.xpose.msra.mxu0 0.0
    %2647 = vmatprep.subr.mxu0 0.0
    %2648 = vmatpush2.xpose.msra.mxu0 0.0
    %2649 = vmatprep.subr.mxu0 0.0
    %2650 = vmatpush2.xpose.msra.mxu0 0.0
    %2651 = vmatprep.subr.mxu0 0.0
    %2652 = vmatpush2.xpose.msra.mxu0 0.0
    %2653 = vmatprep.subr.mxu0 0.0
    %2654 = vmatpush2.xpose.msra.mxu0 0.0
    %2655 = vmatprep.subr.mxu0 0.0
    %2656 = vmatpush2.xpose.msra.mxu0 0.0
    %2657 = vmatprep.subr.mxu0 0.0
    %2658 = vmatpush2.xpose.msra.mxu0 0.0
    %2659 = vmatprep.subr.mxu0 0.0
    %2660 = vmatpush2.xpose.msra.mxu0 0.0
    %2661 = vmatprep.subr.mxu0 0.0
    %2662 = vmatpush2.xpose.msra.mxu0 0.0
    %2663 = vmatprep.subr.mxu0 0.0
    %2664 = vmatpush2.xpose.msra.mxu0 0.0
    %2665 = vmatprep.mubr.f32.mxu0 0.0
    %2666 = vmatmul.mubr.f32.gmra.mxu0 %v2597
    %v2667 = vpop.f32.mrf.mxu0
    %v2668 = vadd.f32 0.0, %v2667
    %v2669 = vpop.f32.mrf.mxu0
    %2670 = vdwg.mxu0
    %v2672 = vsel %vm305, %v2205, 0
    %v2674 = vsel %vm305, %v2218, 0
    %2676 = vmatprep.subr.mxu0 0.0
    %2677 = vmatpush1.xpose.msra.mxu0 0.0
    %2678 = vmatprep.subr.mxu0 0.0
    %2679 = vmatpush1.xpose.msra.mxu0 0.0
    %2680 = vmatprep.subr.mxu0 0.0
    %2681 = vmatpush1.xpose.msra.mxu0 0.0
    %2682 = vmatprep.subr.mxu0 0.0
    %2683 = vmatpush1.xpose.msra.mxu0 0.0
    %2684 = vmatprep.subr.mxu0 0.0
    %2685 = vmatpush1.xpose.msra.mxu0 0.0
    %2686 = vmatprep.subr.mxu0 0.0
    %2687 = vmatpush1.xpose.msra.mxu0 0.0
    %2688 = vmatprep.subr.mxu0 0.0
    %2689 = vmatpush1.xpose.msra.mxu0 0.0
    %2690 = vmatprep.subr.mxu0 0.0
    %2691 = vmatpush1.xpose.msra.mxu0 0.0
    %2692 = vmatprep.subr.mxu0 0.0
    %2693 = vmatpush1.xpose.msra.mxu0 0.0
    %2694 = vmatprep.subr.mxu0 0.0
    %2695 = vmatpush1.xpose.msra.mxu0 0.0
    %2696 = vmatprep.subr.mxu0 0.0
    %2697 = vmatpush1.xpose.msra.mxu0 0.0
    %2698 = vmatprep.subr.mxu0 0.0
    %2699 = vmatpush1.xpose.msra.mxu0 0.0
    %2700 = vmatprep.subr.mxu0 0.0
    %2701 = vmatpush1.xpose.msra.mxu0 0.0
    %2702 = vmatprep.subr.mxu0 0.0
    %2703 = vmatpush1.xpose.msra.mxu0 0.0
    %2704 = vmatprep.subr.mxu0 0.0
    %2705 = vmatpush1.xpose.msra.mxu0 0.0
    %2706 = vmatprep.subr.mxu0 0.0
    %2707 = vmatpush1.xpose.msra.mxu0 %v2674
    %2708 = vmatprep.subr.mxu0 0.0
    %2709 = vmatpush2.xpose.msra.mxu0 0.0
    %2710 = vmatprep.subr.mxu0 0.0
    %2711 = vmatpush2.xpose.msra.mxu0 0.0
    %2712 = vmatprep.subr.mxu0 0.0
    %2713 = vmatpush2.xpose.msra.mxu0 0.0
    %2714 = vmatprep.subr.mxu0 0.0
    %2715 = vmatpush2.xpose.msra.mxu0 0.0
    %2716 = vmatprep.subr.mxu0 0.0
    %2717 = vmatpush2.xpose.msra.mxu0 0.0
    %2718 = vmatprep.subr.mxu0 0.0
    %2719 = vmatpush2.xpose.msra.mxu0 0.0
    %2720 = vmatprep.subr.mxu0 0.0
    %2721 = vmatpush2.xpose.msra.mxu0 0.0
    %2722 = vmatprep.subr.mxu0 0.0
    %2723 = vmatpush2.xpose.msra.mxu0 0.0
    %2724 = vmatprep.subr.mxu0 0.0
    %2725 = vmatpush2.xpose.msra.mxu0 0.0
    %2726 = vmatprep.subr.mxu0 0.0
    %2727 = vmatpush2.xpose.msra.mxu0 0.0
    %2728 = vmatprep.subr.mxu0 0.0
    %2729 = vmatpush2.xpose.msra.mxu0 0.0
    %2730 = vmatprep.subr.mxu0 0.0
    %2731 = vmatpush2.xpose.msra.mxu0 0.0
    %2732 = vmatprep.subr.mxu0 0.0
    %2733 = vmatpush2.xpose.msra.mxu0 0.0
    %2734 = vmatprep.subr.mxu0 0.0
    %2735 = vmatpush2.xpose.msra.mxu0 0.0
    %2736 = vmatprep.subr.mxu0 0.0
    %2737 = vmatpush2.xpose.msra.mxu0 0.0
    %2738 = vmatprep.subr.mxu0 0.0
    %2739 = vmatpush2.xpose.msra.mxu0 0.0
    %2740 = vmatprep.mubr.f32.mxu0 0.0
    %2741 = vmatmul.mubr.f32.gmra.mxu0 %v2672
    %v2742 = vpop.f32.mrf.mxu0
    %v2743 = vadd.f32 0.0, %v2742
    %v2744 = vpop.f32.mrf.mxu0
    %2745 = vdwg.mxu0
    %v2747 = vsel %vm305, %v2206, 0
    %v2749 = vsel %vm305, %v2220, 0
    %2751 = vmatprep.subr.mxu0 0.0
    %2752 = vmatpush1.xpose.msra.mxu0 0.0
    %2753 = vmatprep.subr.mxu0 0.0
    %2754 = vmatpush1.xpose.msra.mxu0 0.0
    %2755 = vmatprep.subr.mxu0 0.0
    %2756 = vmatpush1.xpose.msra.mxu0 0.0
    %2757 = vmatprep.subr.mxu0 0.0
    %2758 = vmatpush1.xpose.msra.mxu0 0.0
    %2759 = vmatprep.subr.mxu0 0.0
    %2760 = vmatpush1.xpose.msra.mxu0 0.0
    %2761 = vmatprep.subr.mxu0 0.0
    %2762 = vmatpush1.xpose.msra.mxu0 0.0
    %2763 = vmatprep.subr.mxu0 0.0
    %2764 = vmatpush1.xpose.msra.mxu0 0.0
    %2765 = vmatprep.subr.mxu0 0.0
    %2766 = vmatpush1.xpose.msra.mxu0 0.0
    %2767 = vmatprep.subr.mxu0 0.0
    %2768 = vmatpush1.xpose.msra.mxu0 0.0
    %2769 = vmatprep.subr.mxu0 0.0
    %2770 = vmatpush1.xpose.msra.mxu0 0.0
    %2771 = vmatprep.subr.mxu0 0.0
    %2772 = vmatpush1.xpose.msra.mxu0 0.0
    %2773 = vmatprep.subr.mxu0 0.0
    %2774 = vmatpush1.xpose.msra.mxu0 0.0
    %2775 = vmatprep.subr.mxu0 0.0
    %2776 = vmatpush1.xpose.msra.mxu0 0.0
    %2777 = vmatprep.subr.mxu0 0.0
    %2778 = vmatpush1.xpose.msra.mxu0 0.0
    %2779 = vmatprep.subr.mxu0 0.0
    %2780 = vmatpush1.xpose.msra.mxu0 0.0
    %2781 = vmatprep.subr.mxu0 0.0
    %2782 = vmatpush1.xpose.msra.mxu0 %v2749
    %2783 = vmatprep.subr.mxu0 0.0
    %2784 = vmatpush2.xpose.msra.mxu0 0.0
    %2785 = vmatprep.subr.mxu0 0.0
    %2786 = vmatpush2.xpose.msra.mxu0 0.0
    %2787 = vmatprep.subr.mxu0 0.0
    %2788 = vmatpush2.xpose.msra.mxu0 0.0
    %2789 = vmatprep.subr.mxu0 0.0
    %2790 = vmatpush2.xpose.msra.mxu0 0.0
    %2791 = vmatprep.subr.mxu0 0.0
    %2792 = vmatpush2.xpose.msra.mxu0 0.0
    %2793 = vmatprep.subr.mxu0 0.0
    %2794 = vmatpush2.xpose.msra.mxu0 0.0
    %2795 = vmatprep.subr.mxu0 0.0
    %2796 = vmatpush2.xpose.msra.mxu0 0.0
    %2797 = vmatprep.subr.mxu0 0.0
    %2798 = vmatpush2.xpose.msra.mxu0 0.0
    %2799 = vmatprep.subr.mxu0 0.0
    %2800 = vmatpush2.xpose.msra.mxu0 0.0
    %2801 = vmatprep.subr.mxu0 0.0
    %2802 = vmatpush2.xpose.msra.mxu0 0.0
    %2803 = vmatprep.subr.mxu0 0.0
    %2804 = vmatpush2.xpose.msra.mxu0 0.0
    %2805 = vmatprep.subr.mxu0 0.0
    %2806 = vmatpush2.xpose.msra.mxu0 0.0
    %2807 = vmatprep.subr.mxu0 0.0
    %2808 = vmatpush2.xpose.msra.mxu0 0.0
    %2809 = vmatprep.subr.mxu0 0.0
    %2810 = vmatpush2.xpose.msra.mxu0 0.0
    %2811 = vmatprep.subr.mxu0 0.0
    %2812 = vmatpush2.xpose.msra.mxu0 0.0
    %2813 = vmatprep.subr.mxu0 0.0
    %2814 = vmatpush2.xpose.msra.mxu0 0.0
    %2815 = vmatprep.mubr.f32.mxu0 0.0
    %2816 = vmatmul.mubr.f32.gmra.mxu0 %v2747
    %v2817 = vpop.f32.mrf.mxu0
    %v2818 = vadd.f32 0.0, %v2817
    %v2819 = vpop.f32.mrf.mxu0
    %2820 = vdwg.mxu0
    %v2821 = vsel %vm181, 1, 0
    %v2822 = vsel %vm182, 1, 0
    %v2823 = vsel %vm183, 1, 0
    %v2824 = vsel %vm184, 1, 0
    %v2825 = vsel %vm185, 1, 0
    %v2826 = vsel %vm186, 1, 0
    %v2827 = vsel %vm187, 1, 0
    %v2828 = vsel %vm188, 1, 0
    %v2829 = vlaneseq
    %v2830 = vshrl.u32 %v2829, 7
    %v2831 = vsub.s32 0, %v2830
    %v2832 = vrot.slane %v2821, %v2831
    %v2833 = vlaneseq
    %v2834 = vshrl.u32 %v2833, 7
    %v2835 = vsub.s32 0, %v2834
    %v2836 = vrot.slane %v2822, %v2835
    %v2837 = vlaneseq
    %v2838 = vshrl.u32 %v2837, 7
    %v2839 = vsub.s32 0, %v2838
    %v2840 = vrot.slane %v2823, %v2839
    %v2841 = vlaneseq
    %v2842 = vshrl.u32 %v2841, 7
    %v2843 = vsub.s32 0, %v2842
    %v2844 = vrot.slane %v2824, %v2843
    %v2845 = vlaneseq
    %v2846 = vshrl.u32 %v2845, 7
    %v2847 = vsub.s32 0, %v2846
    %v2848 = vrot.slane %v2825, %v2847
    %v2849 = vlaneseq
    %v2850 = vshrl.u32 %v2849, 7
    %v2851 = vsub.s32 0, %v2850
    %v2852 = vrot.slane %v2826, %v2851
    %v2853 = vlaneseq
    %v2854 = vshrl.u32 %v2853, 7
    %v2855 = vsub.s32 0, %v2854
    %v2856 = vrot.slane %v2827, %v2855
    %v2857 = vlaneseq
    %v2858 = vshrl.u32 %v2857, 7
    %v2859 = vsub.s32 0, %v2858
    %v2860 = vrot.slane %v2828, %v2859
    %vm2861 = vcmp.eq.s32.totalorder %v2832, 1
    %vm2862 = vcmp.eq.s32.totalorder %v2836, 1
    %vm2863 = vcmp.eq.s32.totalorder %v2840, 1
    %vm2864 = vcmp.eq.s32.totalorder %v2844, 1
    %vm2865 = vcmp.eq.s32.totalorder %v2848, 1
    %vm2866 = vcmp.eq.s32.totalorder %v2852, 1
    %vm2867 = vcmp.eq.s32.totalorder %v2856, 1
    %vm2868 = vcmp.eq.s32.totalorder %v2860, 1
    %v2869 = vsel %vm2861, %v2293, -1000000.0
    %v2870 = vsel %vm2862, %v2368, -1000000.0
    %v2871 = vsel %vm2863, %v2443, -1000000.0
    %v2872 = vsel %vm2864, %v2518, -1000000.0
    %v2873 = vsel %vm2865, %v2593, -1000000.0
    %v2874 = vsel %vm2866, %v2668, -1000000.0
    %v2875 = vsel %vm2867, %v2743, -1000000.0
    %v2876 = vsel %vm2868, %v2818, -1000000.0
    %v2877 = vsel %vm305, %v2869, -inf
    %2878 = vmax.xlane.f32.xlu0 %v2877
    %v2879 = vpop.xlane.xlu0 %2878
    %v2880 = vsel %vm305, %v2870, -inf
    %2881 = vmax.xlane.f32.xlu0 %v2880
    %v2882 = vpop.xlane.xlu0 %2881
    %v2883 = vsel %vm305, %v2871, -inf
    %2884 = vmax.xlane.f32.xlu0 %v2883
    %v2885 = vpop.xlane.xlu0 %2884
    %v2886 = vsel %vm305, %v2872, -inf
    %2887 = vmax.xlane.f32.xlu0 %v2886
    %v2888 = vpop.xlane.xlu0 %2887
    %v2889 = vsel %vm305, %v2873, -inf
    %2890 = vmax.xlane.f32.xlu0 %v2889
    %v2891 = vpop.xlane.xlu0 %2890
    %v2892 = vsel %vm305, %v2874, -inf
    %2893 = vmax.xlane.f32.xlu0 %v2892
    %v2894 = vpop.xlane.xlu0 %2893
    %v2895 = vsel %vm305, %v2875, -inf
    %2896 = vmax.xlane.f32.xlu0 %v2895
    %v2897 = vpop.xlane.xlu0 %2896
    %v2898 = vsel %vm305, %v2876, -inf
    %2899 = vmax.xlane.f32.xlu0 %v2898
    %v2900 = vpop.xlane.xlu0 %2899
    %v2901 = vsub.f32 %v2869, %v2879
    %v2902 = vsub.f32 %v2870, %v2882
    %v2903 = vsub.f32 %v2871, %v2885
    %v2904 = vsub.f32 %v2872, %v2888
    %v2905 = vsub.f32 %v2873, %v2891
    %v2906 = vsub.f32 %v2874, %v2894
    %v2907 = vsub.f32 %v2875, %v2897
    %v2908 = vsub.f32 %v2876, %v2900
    %v2909 = vmul.f32 %v2901, 1.442695
    %v2910 = vpow.pop %v2909
    %v2911 = vmul.f32 %v2902, 1.442695
    %v2912 = vpow.pop %v2911
    %v2913 = vmul.f32 %v2903, 1.442695
    %v2914 = vpow.pop %v2913
    %v2915 = vmul.f32 %v2904, 1.442695
    %v2916 = vpow.pop %v2915
    %v2917 = vmul.f32 %v2905, 1.442695
    %v2918 = vpow.pop %v2917
    %v2919 = vmul.f32 %v2906, 1.442695
    %v2920 = vpow.pop %v2919
    %v2921 = vmul.f32 %v2907, 1.442695
    %v2922 = vpow.pop %v2921
    %v2923 = vmul.f32 %v2908, 1.442695
    %v2924 = vpow.pop %v2923
    %v2925 = vsel %vm305, %v2910, 0.0
    %2926 = vadd.xlane.f32.xlu0 %v2925
    %v2927 = vpop.xlane.xlu0 %2926
    %v2928 = vsel %vm305, %v2912, 0.0
    %2929 = vadd.xlane.f32.xlu0 %v2928
    %v2930 = vpop.xlane.xlu0 %2929
    %v2931 = vsel %vm305, %v2914, 0.0
    %2932 = vadd.xlane.f32.xlu0 %v2931
    %v2933 = vpop.xlane.xlu0 %2932
    %v2934 = vsel %vm305, %v2916, 0.0
    %2935 = vadd.xlane.f32.xlu0 %v2934
    %v2936 = vpop.xlane.xlu0 %2935
    %v2937 = vsel %vm305, %v2918, 0.0
    %2938 = vadd.xlane.f32.xlu0 %v2937
    %v2939 = vpop.xlane.xlu0 %2938
    %v2940 = vsel %vm305, %v2920, 0.0
    %2941 = vadd.xlane.f32.xlu0 %v2940
    %v2942 = vpop.xlane.xlu0 %2941
    %v2943 = vsel %vm305, %v2922, 0.0
    %2944 = vadd.xlane.f32.xlu0 %v2943
    %v2945 = vpop.xlane.xlu0 %2944
    %v2946 = vsel %vm305, %v2924, 0.0
    %2947 = vadd.xlane.f32.xlu0 %v2946
    %v2948 = vpop.xlane.xlu0 %2947
    %v2949 = vrcp.pop %v2927
    %v2950 = vrcp.pop %v2930
    %v2951 = vrcp.pop %v2933
    %v2952 = vrcp.pop %v2936
    %v2953 = vrcp.pop %v2939
    %v2954 = vrcp.pop %v2942
    %v2955 = vrcp.pop %v2945
    %v2956 = vrcp.pop %v2948
    %v2957 = vmul.f32 %v2910, %v2949
    %v2958 = vmul.f32 %v2912, %v2950
    %v2959 = vmul.f32 %v2914, %v2951
    %v2960 = vmul.f32 %v2916, %v2952
    %v2961 = vmul.f32 %v2918, %v2953
    %v2962 = vmul.f32 %v2920, %v2954
    %v2963 = vmul.f32 %v2922, %v2955
    %v2964 = vmul.f32 %v2924, %v2956
    %2965 = vrot.lane.b32.xlu0 %v2171, 96
    %v2966 = vpop.permute.xlu0 %2965
    %v2969 = vsel %vm305, %v2957, 0
    %2971 = vmatprep.subr.mxu0 0.0
    %2972 = vmatpush1.msra.mxu0 0.0
    %2973 = vmatprep.subr.mxu0 0.0
    %2974 = vmatpush1.msra.mxu0 0.0
    %2975 = vmatprep.subr.mxu0 0.0
    %2976 = vmatpush1.msra.mxu0 0.0
    %2977 = vmatprep.subr.mxu0 0.0
    %2978 = vmatpush1.msra.mxu0 0.0
    %2979 = vmatprep.subr.mxu0 0.0
    %2980 = vmatpush1.msra.mxu0 0.0
    %2981 = vmatprep.subr.mxu0 0.0
    %2982 = vmatpush1.msra.mxu0 0.0
    %2983 = vmatprep.subr.mxu0 0.0
    %2984 = vmatpush1.msra.mxu0 0.0
    %2985 = vmatprep.subr.mxu0 0.0
    %2986 = vmatpush1.msra.mxu0 0.0
    %2987 = vmatprep.subr.mxu0 0.0
    %2988 = vmatpush1.msra.mxu0 0.0
    %2989 = vmatprep.subr.mxu0 0.0
    %2990 = vmatpush1.msra.mxu0 0.0
    %2991 = vmatprep.subr.mxu0 0.0
    %2992 = vmatpush1.msra.mxu0 0.0
    %2993 = vmatprep.subr.mxu0 0.0
    %2994 = vmatpush1.msra.mxu0 0.0
    %2995 = vmatprep.subr.mxu0 0.0
    %2996 = vmatpush1.msra.mxu0 0.0
    %2997 = vmatprep.subr.mxu0 0.0
    %2998 = vmatpush1.msra.mxu0 0.0
    %2999 = vmatprep.subr.mxu0 0.0
    %3000 = vmatpush1.msra.mxu0 0.0
    %3001 = vmatprep.subr.mxu0 0.0
    %3002 = vmatpush1.msra.mxu0 %v2966
    %3003 = vmatprep.subr.mxu0 0.0
    %3004 = vmatpush2.msra.mxu0 0.0
    %3005 = vmatprep.subr.mxu0 0.0
    %3006 = vmatpush2.msra.mxu0 0.0
    %3007 = vmatprep.subr.mxu0 0.0
    %3008 = vmatpush2.msra.mxu0 0.0
    %3009 = vmatprep.subr.mxu0 0.0
    %3010 = vmatpush2.msra.mxu0 0.0
    %3011 = vmatprep.subr.mxu0 0.0
    %3012 = vmatpush2.msra.mxu0 0.0
    %3013 = vmatprep.subr.mxu0 0.0
    %3014 = vmatpush2.msra.mxu0 0.0
    %3015 = vmatprep.subr.mxu0 0.0
    %3016 = vmatpush2.msra.mxu0 0.0
    %3017 = vmatprep.subr.mxu0 0.0
    %3018 = vmatpush2.msra.mxu0 0.0
    %3019 = vmatprep.subr.mxu0 0.0
    %3020 = vmatpush2.msra.mxu0 0.0
    %3021 = vmatprep.subr.mxu0 0.0
    %3022 = vmatpush2.msra.mxu0 0.0
    %3023 = vmatprep.subr.mxu0 0.0
    %3024 = vmatpush2.msra.mxu0 0.0
    %3025 = vmatprep.subr.mxu0 0.0
    %3026 = vmatpush2.msra.mxu0 0.0
    %3027 = vmatprep.subr.mxu0 0.0
    %3028 = vmatpush2.msra.mxu0 0.0
    %3029 = vmatprep.subr.mxu0 0.0
    %3030 = vmatpush2.msra.mxu0 0.0
    %3031 = vmatprep.subr.mxu0 0.0
    %3032 = vmatpush2.msra.mxu0 0.0
    %3033 = vmatprep.subr.mxu0 0.0
    %3034 = vmatpush2.msra.mxu0 0.0
    %3035 = vmatprep.mubr.f32.mxu0 0.0
    %3036 = vmatmul.mubr.f32.gmra.mxu0 %v2969
    %v3037 = vpop.f32.mrf.mxu0
    %v3038 = vadd.f32 0.0, %v3037
    %v3039 = vpop.f32.mrf.mxu0
    %3040 = vdwg.mxu0
    %3041 = vrot.lane.b32.xlu0 %v2176, 96
    %v3042 = vpop.permute.xlu0 %3041
    %v3045 = vsel %vm305, %v2958, 0
    %3047 = vmatprep.subr.mxu0 0.0
    %3048 = vmatpush1.msra.mxu0 0.0
    %3049 = vmatprep.subr.mxu0 0.0
    %3050 = vmatpush1.msra.mxu0 0.0
    %3051 = vmatprep.subr.mxu0 0.0
    %3052 = vmatpush1.msra.mxu0 0.0
    %3053 = vmatprep.subr.mxu0 0.0
    %3054 = vmatpush1.msra.mxu0 0.0
    %3055 = vmatprep.subr.mxu0 0.0
    %3056 = vmatpush1.msra.mxu0 0.0
    %3057 = vmatprep.subr.mxu0 0.0
    %3058 = vmatpush1.msra.mxu0 0.0
    %3059 = vmatprep.subr.mxu0 0.0
    %3060 = vmatpush1.msra.mxu0 0.0
    %3061 = vmatprep.subr.mxu0 0.0
    %3062 = vmatpush1.msra.mxu0 0.0
    %3063 = vmatprep.subr.mxu0 0.0
    %3064 = vmatpush1.msra.mxu0 0.0
    %3065 = vmatprep.subr.mxu0 0.0
    %3066 = vmatpush1.msra.mxu0 0.0
    %3067 = vmatprep.subr.mxu0 0.0
    %3068 = vmatpush1.msra.mxu0 0.0
    %3069 = vmatprep.subr.mxu0 0.0
    %3070 = vmatpush1.msra.mxu0 0.0
    %3071 = vmatprep.subr.mxu0 0.0
    %3072 = vmatpush1.msra.mxu0 0.0
    %3073 = vmatprep.subr.mxu0 0.0
    %3074 = vmatpush1.msra.mxu0 0.0
    %3075 = vmatprep.subr.mxu0 0.0
    %3076 = vmatpush1.msra.mxu0 0.0
    %3077 = vmatprep.subr.mxu0 0.0
    %3078 = vmatpush1.msra.mxu0 %v3042
    %3079 = vmatprep.subr.mxu0 0.0
    %3080 = vmatpush2.msra.mxu0 0.0
    %3081 = vmatprep.subr.mxu0 0.0
    %3082 = vmatpush2.msra.mxu0 0.0
    %3083 = vmatprep.subr.mxu0 0.0
    %3084 = vmatpush2.msra.mxu0 0.0
    %3085 = vmatprep.subr.mxu0 0.0
    %3086 = vmatpush2.msra.mxu0 0.0
    %3087 = vmatprep.subr.mxu0 0.0
    %3088 = vmatpush2.msra.mxu0 0.0
    %3089 = vmatprep.subr.mxu0 0.0
    %3090 = vmatpush2.msra.mxu0 0.0
    %3091 = vmatprep.subr.mxu0 0.0
    %3092 = vmatpush2.msra.mxu0 0.0
    %3093 = vmatprep.subr.mxu0 0.0
    %3094 = vmatpush2.msra.mxu0 0.0
    %3095 = vmatprep.subr.mxu0 0.0
    %3096 = vmatpush2.msra.mxu0 0.0
    %3097 = vmatprep.subr.mxu0 0.0
    %3098 = vmatpush2.msra.mxu0 0.0
    %3099 = vmatprep.subr.mxu0 0.0
    %3100 = vmatpush2.msra.mxu0 0.0
    %3101 = vmatprep.subr.mxu0 0.0
    %3102 = vmatpush2.msra.mxu0 0.0
    %3103 = vmatprep.subr.mxu0 0.0
    %3104 = vmatpush2.msra.mxu0 0.0
    %3105 = vmatprep.subr.mxu0 0.0
    %3106 = vmatpush2.msra.mxu0 0.0
    %3107 = vmatprep.subr.mxu0 0.0
    %3108 = vmatpush2.msra.mxu0 0.0
    %3109 = vmatprep.subr.mxu0 0.0
    %3110 = vmatpush2.msra.mxu0 0.0
    %3111 = vmatprep.mubr.f32.mxu0 0.0
    %3112 = vmatmul.mubr.f32.gmra.mxu0 %v3045
    %v3113 = vpop.f32.mrf.mxu0
    %v3114 = vadd.f32 0.0, %v3113
    %v3115 = vpop.f32.mrf.mxu0
    %3116 = vdwg.mxu0
    %3117 = vrot.lane.b32.xlu0 %v2210, 96
    %v3118 = vpop.permute.xlu0 %3117
    %v3121 = vsel %vm305, %v2959, 0
    %3123 = vmatprep.subr.mxu0 0.0
    %3124 = vmatpush1.msra.mxu0 0.0
    %3125 = vmatprep.subr.mxu0 0.0
    %3126 = vmatpush1.msra.mxu0 0.0
    %3127 = vmatprep.subr.mxu0 0.0
    %3128 = vmatpush1.msra.mxu0 0.0
    %3129 = vmatprep.subr.mxu0 0.0
    %3130 = vmatpush1.msra.mxu0 0.0
    %3131 = vmatprep.subr.mxu0 0.0
    %3132 = vmatpush1.msra.mxu0 0.0
    %3133 = vmatprep.subr.mxu0 0.0
    %3134 = vmatpush1.msra.mxu0 0.0
    %3135 = vmatprep.subr.mxu0 0.0
    %3136 = vmatpush1.msra.mxu0 0.0
    %3137 = vmatprep.subr.mxu0 0.0
    %3138 = vmatpush1.msra.mxu0 0.0
    %3139 = vmatprep.subr.mxu0 0.0
    %3140 = vmatpush1.msra.mxu0 0.0
    %3141 = vmatprep.subr.mxu0 0.0
    %3142 = vmatpush1.msra.mxu0 0.0
    %3143 = vmatprep.subr.mxu0 0.0
    %3144 = vmatpush1.msra.mxu0 0.0
    %3145 = vmatprep.subr.mxu0 0.0
    %3146 = vmatpush1.msra.mxu0 0.0
    %3147 = vmatprep.subr.mxu0 0.0
    %3148 = vmatpush1.msra.mxu0 0.0
    %3149 = vmatprep.subr.mxu0 0.0
    %3150 = vmatpush1.msra.mxu0 0.0
    %3151 = vmatprep.subr.mxu0 0.0
    %3152 = vmatpush1.msra.mxu0 0.0
    %3153 = vmatprep.subr.mxu0 0.0
    %3154 = vmatpush1.msra.mxu0 %v3118
    %3155 = vmatprep.subr.mxu0 0.0
    %3156 = vmatpush2.msra.mxu0 0.0
    %3157 = vmatprep.subr.mxu0 0.0
    %3158 = vmatpush2.msra.mxu0 0.0
    %3159 = vmatprep.subr.mxu0 0.0
    %3160 = vmatpush2.msra.mxu0 0.0
    %3161 = vmatprep.subr.mxu0 0.0
    %3162 = vmatpush2.msra.mxu0 0.0
    %3163 = vmatprep.subr.mxu0 0.0
    %3164 = vmatpush2.msra.mxu0 0.0
    %3165 = vmatprep.subr.mxu0 0.0
    %3166 = vmatpush2.msra.mxu0 0.0
    %3167 = vmatprep.subr.mxu0 0.0
    %3168 = vmatpush2.msra.mxu0 0.0
    %3169 = vmatprep.subr.mxu0 0.0
    %3170 = vmatpush2.msra.mxu0 0.0
    %3171 = vmatprep.subr.mxu0 0.0
    %3172 = vmatpush2.msra.mxu0 0.0
    %3173 = vmatprep.subr.mxu0 0.0
    %3174 = vmatpush2.msra.mxu0 0.0
    %3175 = vmatprep.subr.mxu0 0.0
    %3176 = vmatpush2.msra.mxu0 0.0
    %3177 = vmatprep.subr.mxu0 0.0
    %3178 = vmatpush2.msra.mxu0 0.0
    %3179 = vmatprep.subr.mxu0 0.0
    %3180 = vmatpush2.msra.mxu0 0.0
    %3181 = vmatprep.subr.mxu0 0.0
    %3182 = vmatpush2.msra.mxu0 0.0
    %3183 = vmatprep.subr.mxu0 0.0
    %3184 = vmatpush2.msra.mxu0 0.0
    %3185 = vmatprep.subr.mxu0 0.0
    %3186 = vmatpush2.msra.mxu0 0.0
    %3187 = vmatprep.mubr.f32.mxu0 0.0
    %3188 = vmatmul.mubr.f32.gmra.mxu0 %v3121
    %v3189 = vpop.f32.mrf.mxu0
    %v3190 = vadd.f32 0.0, %v3189
    %v3191 = vpop.f32.mrf.mxu0
    %3192 = vdwg.mxu0
    %3193 = vrot.lane.b32.xlu0 %v2212, 96
    %v3194 = vpop.permute.xlu0 %3193
    %v3197 = vsel %vm305, %v2960, 0
    %3199 = vmatprep.subr.mxu0 0.0
    %3200 = vmatpush1.msra.mxu0 0.0
    %3201 = vmatprep.subr.mxu0 0.0
    %3202 = vmatpush1.msra.mxu0 0.0
    %3203 = vmatprep.subr.mxu0 0.0
    %3204 = vmatpush1.msra.mxu0 0.0
    %3205 = vmatprep.subr.mxu0 0.0
    %3206 = vmatpush1.msra.mxu0 0.0
    %3207 = vmatprep.subr.mxu0 0.0
    %3208 = vmatpush1.msra.mxu0 0.0
    %3209 = vmatprep.subr.mxu0 0.0
    %3210 = vmatpush1.msra.mxu0 0.0
    %3211 = vmatprep.subr.mxu0 0.0
    %3212 = vmatpush1.msra.mxu0 0.0
    %3213 = vmatprep.subr.mxu0 0.0
    %3214 = vmatpush1.msra.mxu0 0.0
    %3215 = vmatprep.subr.mxu0 0.0
    %3216 = vmatpush1.msra.mxu0 0.0
    %3217 = vmatprep.subr.mxu0 0.0
    %3218 = vmatpush1.msra.mxu0 0.0
    %3219 = vmatprep.subr.mxu0 0.0
    %3220 = vmatpush1.msra.mxu0 0.0
    %3221 = vmatprep.subr.mxu0 0.0
    %3222 = vmatpush1.msra.mxu0 0.0
    %3223 = vmatprep.subr.mxu0 0.0
    %3224 = vmatpush1.msra.mxu0 0.0
    %3225 = vmatprep.subr.mxu0 0.0
    %3226 = vmatpush1.msra.mxu0 0.0
    %3227 = vmatprep.subr.mxu0 0.0
    %3228 = vmatpush1.msra.mxu0 0.0
    %3229 = vmatprep.subr.mxu0 0.0
    %3230 = vmatpush1.msra.mxu0 %v3194
    %3231 = vmatprep.subr.mxu0 0.0
    %3232 = vmatpush2.msra.mxu0 0.0
    %3233 = vmatprep.subr.mxu0 0.0
    %3234 = vmatpush2.msra.mxu0 0.0
    %3235 = vmatprep.subr.mxu0 0.0
    %3236 = vmatpush2.msra.mxu0 0.0
    %3237 = vmatprep.subr.mxu0 0.0
    %3238 = vmatpush2.msra.mxu0 0.0
    %3239 = vmatprep.subr.mxu0 0.0
    %3240 = vmatpush2.msra.mxu0 0.0
    %3241 = vmatprep.subr.mxu0 0.0
    %3242 = vmatpush2.msra.mxu0 0.0
    %3243 = vmatprep.subr.mxu0 0.0
    %3244 = vmatpush2.msra.mxu0 0.0
    %3245 = vmatprep.subr.mxu0 0.0
    %3246 = vmatpush2.msra.mxu0 0.0
    %3247 = vmatprep.subr.mxu0 0.0
    %3248 = vmatpush2.msra.mxu0 0.0
    %3249 = vmatprep.subr.mxu0 0.0
    %3250 = vmatpush2.msra.mxu0 0.0
    %3251 = vmatprep.subr.mxu0 0.0
    %3252 = vmatpush2.msra.mxu0 0.0
    %3253 = vmatprep.subr.mxu0 0.0
    %3254 = vmatpush2.msra.mxu0 0.0
    %3255 = vmatprep.subr.mxu0 0.0
    %3256 = vmatpush2.msra.mxu0 0.0
    %3257 = vmatprep.subr.mxu0 0.0
    %3258 = vmatpush2.msra.mxu0 0.0
    %3259 = vmatprep.subr.mxu0 0.0
    %3260 = vmatpush2.msra.mxu0 0.0
    %3261 = vmatprep.subr.mxu0 0.0
    %3262 = vmatpush2.msra.mxu0 0.0
    %3263 = vmatprep.mubr.f32.mxu0 0.0
    %3264 = vmatmul.mubr.f32.gmra.mxu0 %v3197
    %v3265 = vpop.f32.mrf.mxu0
    %v3266 = vadd.f32 0.0, %v3265
    %v3267 = vpop.f32.mrf.mxu0
    %3268 = vdwg.mxu0
    %3269 = vrot.lane.b32.xlu0 %v2214, 96
    %v3270 = vpop.permute.xlu0 %3269
    %v3273 = vsel %vm305, %v2961, 0
    %3275 = vmatprep.subr.mxu0 0.0
    %3276 = vmatpush1.msra.mxu0 0.0
    %3277 = vmatprep.subr.mxu0 0.0
    %3278 = vmatpush1.msra.mxu0 0.0
    %3279 = vmatprep.subr.mxu0 0.0
    %3280 = vmatpush1.msra.mxu0 0.0
    %3281 = vmatprep.subr.mxu0 0.0
    %3282 = vmatpush1.msra.mxu0 0.0
    %3283 = vmatprep.subr.mxu0 0.0
    %3284 = vmatpush1.msra.mxu0 0.0
    %3285 = vmatprep.subr.mxu0 0.0
    %3286 = vmatpush1.msra.mxu0 0.0
    %3287 = vmatprep.subr.mxu0 0.0
    %3288 = vmatpush1.msra.mxu0 0.0
    %3289 = vmatprep.subr.mxu0 0.0
    %3290 = vmatpush1.msra.mxu0 0.0
    %3291 = vmatprep.subr.mxu0 0.0
    %3292 = vmatpush1.msra.mxu0 0.0
    %3293 = vmatprep.subr.mxu0 0.0
    %3294 = vmatpush1.msra.mxu0 0.0
    %3295 = vmatprep.subr.mxu0 0.0
    %3296 = vmatpush1.msra.mxu0 0.0
    %3297 = vmatprep.subr.mxu0 0.0
    %3298 = vmatpush1.msra.mxu0 0.0
    %3299 = vmatprep.subr.mxu0 0.0
    %3300 = vmatpush1.msra.mxu0 0.0
    %3301 = vmatprep.subr.mxu0 0.0
    %3302 = vmatpush1.msra.mxu0 0.0
    %3303 = vmatprep.subr.mxu0 0.0
    %3304 = vmatpush1.msra.mxu0 0.0
    %3305 = vmatprep.subr.mxu0 0.0
    %3306 = vmatpush1.msra.mxu0 %v3270
    %3307 = vmatprep.subr.mxu0 0.0
    %3308 = vmatpush2.msra.mxu0 0.0
    %3309 = vmatprep.subr.mxu0 0.0
    %3310 = vmatpush2.msra.mxu0 0.0
    %3311 = vmatprep.subr.mxu0 0.0
    %3312 = vmatpush2.msra.mxu0 0.0
    %3313 = vmatprep.subr.mxu0 0.0
    %3314 = vmatpush2.msra.mxu0 0.0
    %3315 = vmatprep.subr.mxu0 0.0
    %3316 = vmatpush2.msra.mxu0 0.0
    %3317 = vmatprep.subr.mxu0 0.0
    %3318 = vmatpush2.msra.mxu0 0.0
    %3319 = vmatprep.subr.mxu0 0.0
    %3320 = vmatpush2.msra.mxu0 0.0
    %3321 = vmatprep.subr.mxu0 0.0
    %3322 = vmatpush2.msra.mxu0 0.0
    %3323 = vmatprep.subr.mxu0 0.0
    %3324 = vmatpush2.msra.mxu0 0.0
    %3325 = vmatprep.subr.mxu0 0.0
    %3326 = vmatpush2.msra.mxu0 0.0
    %3327 = vmatprep.subr.mxu0 0.0
    %3328 = vmatpush2.msra.mxu0 0.0
    %3329 = vmatprep.subr.mxu0 0.0
    %3330 = vmatpush2.msra.mxu0 0.0
    %3331 = vmatprep.subr.mxu0 0.0
    %3332 = vmatpush2.msra.mxu0 0.0
    %3333 = vmatprep.subr.mxu0 0.0
    %3334 = vmatpush2.msra.mxu0 0.0
    %3335 = vmatprep.subr.mxu0 0.0
    %3336 = vmatpush2.msra.mxu0 0.0
    %3337 = vmatprep.subr.mxu0 0.0
    %3338 = vmatpush2.msra.mxu0 0.0
    %3339 = vmatprep.mubr.f32.mxu0 0.0
    %3340 = vmatmul.mubr.f32.gmra.mxu0 %v3273
    %v3341 = vpop.f32.mrf.mxu0
    %v3342 = vadd.f32 0.0, %v3341
    %v3343 = vpop.f32.mrf.mxu0
    %3344 = vdwg.mxu0
    %3345 = vrot.lane.b32.xlu0 %v2216, 96
    %v3346 = vpop.permute.xlu0 %3345
    %v3349 = vsel %vm305, %v2962, 0
    %3351 = vmatprep.subr.mxu0 0.0
    %3352 = vmatpush1.msra.mxu0 0.0
    %3353 = vmatprep.subr.mxu0 0.0
    %3354 = vmatpush1.msra.mxu0 0.0
    %3355 = vmatprep.subr.mxu0 0.0
    %3356 = vmatpush1.msra.mxu0 0.0
    %3357 = vmatprep.subr.mxu0 0.0
    %3358 = vmatpush1.msra.mxu0 0.0
    %3359 = vmatprep.subr.mxu0 0.0
    %3360 = vmatpush1.msra.mxu0 0.0
    %3361 = vmatprep.subr.mxu0 0.0
    %3362 = vmatpush1.msra.mxu0 0.0
    %3363 = vmatprep.subr.mxu0 0.0
    %3364 = vmatpush1.msra.mxu0 0.0
    %3365 = vmatprep.subr.mxu0 0.0
    %3366 = vmatpush1.msra.mxu0 0.0
    %3367 = vmatprep.subr.mxu0 0.0
    %3368 = vmatpush1.msra.mxu0 0.0
    %3369 = vmatprep.subr.mxu0 0.0
    %3370 = vmatpush1.msra.mxu0 0.0
    %3371 = vmatprep.subr.mxu0 0.0
    %3372 = vmatpush1.msra.mxu0 0.0
    %3373 = vmatprep.subr.mxu0 0.0
    %3374 = vmatpush1.msra.mxu0 0.0
    %3375 = vmatprep.subr.mxu0 0.0
    %3376 = vmatpush1.msra.mxu0 0.0
    %3377 = vmatprep.subr.mxu0 0.0
    %3378 = vmatpush1.msra.mxu0 0.0
    %3379 = vmatprep.subr.mxu0 0.0
    %3380 = vmatpush1.msra.mxu0 0.0
    %3381 = vmatprep.subr.mxu0 0.0
    %3382 = vmatpush1.msra.mxu0 %v3346
    %3383 = vmatprep.subr.mxu0 0.0
    %3384 = vmatpush2.msra.mxu0 0.0
    %3385 = vmatprep.subr.mxu0 0.0
    %3386 = vmatpush2.msra.mxu0 0.0
    %3387 = vmatprep.subr.mxu0 0.0
    %3388 = vmatpush2.msra.mxu0 0.0
    %3389 = vmatprep.subr.mxu0 0.0
    %3390 = vmatpush2.msra.mxu0 0.0
    %3391 = vmatprep.subr.mxu0 0.0
    %3392 = vmatpush2.msra.mxu0 0.0
    %3393 = vmatprep.subr.mxu0 0.0
    %3394 = vmatpush2.msra.mxu0 0.0
    %3395 = vmatprep.subr.mxu0 0.0
    %3396 = vmatpush2.msra.mxu0 0.0
    %3397 = vmatprep.subr.mxu0 0.0
    %3398 = vmatpush2.msra.mxu0 0.0
    %3399 = vmatprep.subr.mxu0 0.0
    %3400 = vmatpush2.msra.mxu0 0.0
    %3401 = vmatprep.subr.mxu0 0.0
    %3402 = vmatpush2.msra.mxu0 0.0
    %3403 = vmatprep.subr.mxu0 0.0
    %3404 = vmatpush2.msra.mxu0 0.0
    %3405 = vmatprep.subr.mxu0 0.0
    %3406 = vmatpush2.msra.mxu0 0.0
    %3407 = vmatprep.subr.mxu0 0.0
    %3408 = vmatpush2.msra.mxu0 0.0
    %3409 = vmatprep.subr.mxu0 0.0
    %3410 = vmatpush2.msra.mxu0 0.0
    %3411 = vmatprep.subr.mxu0 0.0
    %3412 = vmatpush2.msra.mxu0 0.0
    %3413 = vmatprep.subr.mxu0 0.0
    %3414 = vmatpush2.msra.mxu0 0.0
    %3415 = vmatprep.mubr.f32.mxu0 0.0
    %3416 = vmatmul.mubr.f32.gmra.mxu0 %v3349
    %v3417 = vpop.f32.mrf.mxu0
    %v3418 = vadd.f32 0.0, %v3417
    %v3419 = vpop.f32.mrf.mxu0
    %3420 = vdwg.mxu0
    %3421 = vrot.lane.b32.xlu0 %v2218, 96
    %v3422 = vpop.permute.xlu0 %3421
    %v3425 = vsel %vm305, %v2963, 0
    %3427 = vmatprep.subr.mxu0 0.0
    %3428 = vmatpush1.msra.mxu0 0.0
    %3429 = vmatprep.subr.mxu0 0.0
    %3430 = vmatpush1.msra.mxu0 0.0
    %3431 = vmatprep.subr.mxu0 0.0
    %3432 = vmatpush1.msra.mxu0 0.0
    %3433 = vmatprep.subr.mxu0 0.0
    %3434 = vmatpush1.msra.mxu0 0.0
    %3435 = vmatprep.subr.mxu0 0.0
    %3436 = vmatpush1.msra.mxu0 0.0
    %3437 = vmatprep.subr.mxu0 0.0
    %3438 = vmatpush1.msra.mxu0 0.0
    %3439 = vmatprep.subr.mxu0 0.0
    %3440 = vmatpush1.msra.mxu0 0.0
    %3441 = vmatprep.subr.mxu0 0.0
    %3442 = vmatpush1.msra.mxu0 0.0
    %3443 = vmatprep.subr.mxu0 0.0
    %3444 = vmatpush1.msra.mxu0 0.0
    %3445 = vmatprep.subr.mxu0 0.0
    %3446 = vmatpush1.msra.mxu0 0.0
    %3447 = vmatprep.subr.mxu0 0.0
    %3448 = vmatpush1.msra.mxu0 0.0
    %3449 = vmatprep.subr.mxu0 0.0
    %3450 = vmatpush1.msra.mxu0 0.0
    %3451 = vmatprep.subr.mxu0 0.0
    %3452 = vmatpush1.msra.mxu0 0.0
    %3453 = vmatprep.subr.mxu0 0.0
    %3454 = vmatpush1.msra.mxu0 0.0
    %3455 = vmatprep.subr.mxu0 0.0
    %3456 = vmatpush1.msra.mxu0 0.0
    %3457 = vmatprep.subr.mxu0 0.0
    %3458 = vmatpush1.msra.mxu0 %v3422
    %3459 = vmatprep.subr.mxu0 0.0
    %3460 = vmatpush2.msra.mxu0 0.0
    %3461 = vmatprep.subr.mxu0 0.0
    %3462 = vmatpush2.msra.mxu0 0.0
    %3463 = vmatprep.subr.mxu0 0.0
    %3464 = vmatpush2.msra.mxu0 0.0
    %3465 = vmatprep.subr.mxu0 0.0
    %3466 = vmatpush2.msra.mxu0 0.0
    %3467 = vmatprep.subr.mxu0 0.0
    %3468 = vmatpush2.msra.mxu0 0.0
    %3469 = vmatprep.subr.mxu0 0.0
    %3470 = vmatpush2.msra.mxu0 0.0
    %3471 = vmatprep.subr.mxu0 0.0
    %3472 = vmatpush2.msra.mxu0 0.0
    %3473 = vmatprep.subr.mxu0 0.0
    %3474 = vmatpush2.msra.mxu0 0.0
    %3475 = vmatprep.subr.mxu0 0.0
    %3476 = vmatpush2.msra.mxu0 0.0
    %3477 = vmatprep.subr.mxu0 0.0
    %3478 = vmatpush2.msra.mxu0 0.0
    %3479 = vmatprep.subr.mxu0 0.0
    %3480 = vmatpush2.msra.mxu0 0.0
    %3481 = vmatprep.subr.mxu0 0.0
    %3482 = vmatpush2.msra.mxu0 0.0
    %3483 = vmatprep.subr.mxu0 0.0
    %3484 = vmatpush2.msra.mxu0 0.0
    %3485 = vmatprep.subr.mxu0 0.0
    %3486 = vmatpush2.msra.mxu0 0.0
    %3487 = vmatprep.subr.mxu0 0.0
    %3488 = vmatpush2.msra.mxu0 0.0
    %3489 = vmatprep.subr.mxu0 0.0
    %3490 = vmatpush2.msra.mxu0 0.0
    %3491 = vmatprep.mubr.f32.mxu0 0.0
    %3492 = vmatmul.mubr.f32.gmra.mxu0 %v3425
    %v3493 = vpop.f32.mrf.mxu0
    %v3494 = vadd.f32 0.0, %v3493
    %v3495 = vpop.f32.mrf.mxu0
    %3496 = vdwg.mxu0
    %3497 = vrot.lane.b32.xlu0 %v2220, 96
    %v3498 = vpop.permute.xlu0 %3497
    %v3501 = vsel %vm305, %v2964, 0
    %3503 = vmatprep.subr.mxu0 0.0
    %3504 = vmatpush1.msra.mxu0 0.0
    %3505 = vmatprep.subr.mxu0 0.0
    %3506 = vmatpush1.msra.mxu0 0.0
    %3507 = vmatprep.subr.mxu0 0.0
    %3508 = vmatpush1.msra.mxu0 0.0
    %3509 = vmatprep.subr.mxu0 0.0
    %3510 = vmatpush1.msra.mxu0 0.0
    %3511 = vmatprep.subr.mxu0 0.0
    %3512 = vmatpush1.msra.mxu0 0.0
    %3513 = vmatprep.subr.mxu0 0.0
    %3514 = vmatpush1.msra.mxu0 0.0
    %3515 = vmatprep.subr.mxu0 0.0
    %3516 = vmatpush1.msra.mxu0 0.0
    %3517 = vmatprep.subr.mxu0 0.0
    %3518 = vmatpush1.msra.mxu0 0.0
    %3519 = vmatprep.subr.mxu0 0.0
    %3520 = vmatpush1.msra.mxu0 0.0
    %3521 = vmatprep.subr.mxu0 0.0
    %3522 = vmatpush1.msra.mxu0 0.0
    %3523 = vmatprep.subr.mxu0 0.0
    %3524 = vmatpush1.msra.mxu0 0.0
    %3525 = vmatprep.subr.mxu0 0.0
    %3526 = vmatpush1.msra.mxu0 0.0
    %3527 = vmatprep.subr.mxu0 0.0
    %3528 = vmatpush1.msra.mxu0 0.0
    %3529 = vmatprep.subr.mxu0 0.0
    %3530 = vmatpush1.msra.mxu0 0.0
    %3531 = vmatprep.subr.mxu0 0.0
    %3532 = vmatpush1.msra.mxu0 0.0
    %3533 = vmatprep.subr.mxu0 0.0
    %3534 = vmatpush1.msra.mxu0 %v3498
    %3535 = vmatprep.subr.mxu0 0.0
    %3536 = vmatpush2.msra.mxu0 0.0
    %3537 = vmatprep.subr.mxu0 0.0
    %3538 = vmatpush2.msra.mxu0 0.0
    %3539 = vmatprep.subr.mxu0 0.0
    %3540 = vmatpush2.msra.mxu0 0.0
    %3541 = vmatprep.subr.mxu0 0.0
    %3542 = vmatpush2.msra.mxu0 0.0
    %3543 = vmatprep.subr.mxu0 0.0
    %3544 = vmatpush2.msra.mxu0 0.0
    %3545 = vmatprep.subr.mxu0 0.0
    %3546 = vmatpush2.msra.mxu0 0.0
    %3547 = vmatprep.subr.mxu0 0.0
    %3548 = vmatpush2.msra.mxu0 0.0
    %3549 = vmatprep.subr.mxu0 0.0
    %3550 = vmatpush2.msra.mxu0 0.0
    %3551 = vmatprep.subr.mxu0 0.0
    %3552 = vmatpush2.msra.mxu0 0.0
    %3553 = vmatprep.subr.mxu0 0.0
    %3554 = vmatpush2.msra.mxu0 0.0
    %3555 = vmatprep.subr.mxu0 0.0
    %3556 = vmatpush2.msra.mxu0 0.0
    %3557 = vmatprep.subr.mxu0 0.0
    %3558 = vmatpush2.msra.mxu0 0.0
    %3559 = vmatprep.subr.mxu0 0.0
    %3560 = vmatpush2.msra.mxu0 0.0
    %3561 = vmatprep.subr.mxu0 0.0
    %3562 = vmatpush2.msra.mxu0 0.0
    %3563 = vmatprep.subr.mxu0 0.0
    %3564 = vmatpush2.msra.mxu0 0.0
    %3565 = vmatprep.subr.mxu0 0.0
    %3566 = vmatpush2.msra.mxu0 0.0
    %3567 = vmatprep.mubr.f32.mxu0 0.0
    %3568 = vmatmul.mubr.f32.gmra.mxu0 %v3501
    %v3569 = vpop.f32.mrf.mxu0
    %v3570 = vadd.f32 0.0, %v3569
    %v3571 = vpop.f32.mrf.mxu0
    %3572 = vdwg.mxu0
    %v3573 = vld [vmem:[#allocation8] sm:$0xff]
    %v3574 = vld [vmem:[#allocation8 + $0x8] sm:$0xff]
    %v3575 = vld [vmem:[#allocation8 + $0x10] sm:$0xff]
    %v3576 = vld [vmem:[#allocation8 + $0x18] sm:$0xff]
    %v3578 = vsel %vm305, %v3038, 0
    %v3581 = vsel %vm305, %v3114, 0
    %3583 = vmatprep.subr.mxu0 0.0
    %3584 = vmatpush1.msra.mxu0 0.0
    %3585 = vmatprep.subr.mxu0 0.0
    %3586 = vmatpush1.msra.mxu0 0.0
    %3587 = vmatprep.subr.mxu0 0.0
    %3588 = vmatpush1.msra.mxu0 0.0
    %3589 = vmatprep.subr.mxu0 0.0
    %3590 = vmatpush1.msra.mxu0 0.0
    %3591 = vmatprep.subr.mxu0 0.0
    %3592 = vmatpush1.msra.mxu0 0.0
    %3593 = vmatprep.subr.mxu0 0.0
    %3594 = vmatpush1.msra.mxu0 0.0
    %3595 = vmatprep.subr.mxu0 0.0
    %3596 = vmatpush1.msra.mxu0 0.0
    %3597 = vmatprep.subr.mxu0 0.0
    %3598 = vmatpush1.msra.mxu0 0.0
    %3599 = vmatprep.subr.mxu0 0.0
    %3600 = vmatpush1.msra.mxu0 0.0
    %3601 = vmatprep.subr.mxu0 0.0
    %3602 = vmatpush1.msra.mxu0 0.0
    %3603 = vmatprep.subr.mxu0 0.0
    %3604 = vmatpush1.msra.mxu0 0.0
    %3605 = vmatprep.subr.mxu0 0.0
    %3606 = vmatpush1.msra.mxu0 0.0
    %3607 = vmatprep.subr.mxu0 0.0
    %3608 = vmatpush1.msra.mxu0 0.0
    %3609 = vmatprep.subr.mxu0 0.0
    %3610 = vmatpush1.msra.mxu0 0.0
    %3611 = vmatprep.subr.mxu0 0.0
    %3612 = vmatpush1.msra.mxu0 0.0
    %3613 = vmatprep.subr.mxu0 0.0
    %3614 = vmatpush1.msra.mxu0 %v3573
    %3615 = vmatprep.subr.mxu0 0.0
    %3616 = vmatpush2.msra.mxu0 0.0
    %3617 = vmatprep.subr.mxu0 0.0
    %3618 = vmatpush2.msra.mxu0 0.0
    %3619 = vmatprep.subr.mxu0 0.0
    %3620 = vmatpush2.msra.mxu0 0.0
    %3621 = vmatprep.subr.mxu0 0.0
    %3622 = vmatpush2.msra.mxu0 0.0
    %3623 = vmatprep.subr.mxu0 0.0
    %3624 = vmatpush2.msra.mxu0 0.0
    %3625 = vmatprep.subr.mxu0 0.0
    %3626 = vmatpush2.msra.mxu0 0.0
    %3627 = vmatprep.subr.mxu0 0.0
    %3628 = vmatpush2.msra.mxu0 0.0
    %3629 = vmatprep.subr.mxu0 0.0
    %3630 = vmatpush2.msra.mxu0 0.0
    %3631 = vmatprep.subr.mxu0 0.0
    %3632 = vmatpush2.msra.mxu0 0.0
    %3633 = vmatprep.subr.mxu0 0.0
    %3634 = vmatpush2.msra.mxu0 0.0
    %3635 = vmatprep.subr.mxu0 0.0
    %3636 = vmatpush2.msra.mxu0 0.0
    %3637 = vmatprep.subr.mxu0 0.0
    %3638 = vmatpush2.msra.mxu0 0.0
    %3639 = vmatprep.subr.mxu0 0.0
    %3640 = vmatpush2.msra.mxu0 0.0
    %3641 = vmatprep.subr.mxu0 0.0
    %3642 = vmatpush2.msra.mxu0 0.0
    %3643 = vmatprep.subr.mxu0 0.0
    %3644 = vmatpush2.msra.mxu0 0.0
    %3645 = vmatprep.subr.mxu0 0.0
    %3646 = vmatpush2.msra.mxu0 0.0
    %3647 = vmatprep.mubr.f32.mxu0 0.0
    %3648 = vmatmul.mubr.f32.gmra.mxu0 %v3578
    %v3649 = vpop.f32.mrf.mxu0
    %v3650 = vadd.f32 0.0, %v3649
    %v3651 = vpop.f32.mrf.mxu0
    %3652 = vmatprep.mubr.f32.mxu0 0.0
    %3653 = vmatmul.mubr.f32.gmra.mxu0 %v3581
    %v3654 = vpop.f32.mrf.mxu0
    %v3655 = vadd.f32 0.0, %v3654
    %v3656 = vpop.f32.mrf.mxu0
    %3657 = vdwg.mxu0
    %v3659 = vsel %vm305, %v3190, 0
    %v3662 = vsel %vm305, %v3266, 0
    %3664 = vmatprep.subr.mxu0 0.0
    %3665 = vmatpush1.msra.mxu0 0.0
    %3666 = vmatprep.subr.mxu0 0.0
    %3667 = vmatpush1.msra.mxu0 0.0
    %3668 = vmatprep.subr.mxu0 0.0
    %3669 = vmatpush1.msra.mxu0 0.0
    %3670 = vmatprep.subr.mxu0 0.0
    %3671 = vmatpush1.msra.mxu0 0.0
    %3672 = vmatprep.subr.mxu0 0.0
    %3673 = vmatpush1.msra.mxu0 0.0
    %3674 = vmatprep.subr.mxu0 0.0
    %3675 = vmatpush1.msra.mxu0 0.0
    %3676 = vmatprep.subr.mxu0 0.0
    %3677 = vmatpush1.msra.mxu0 0.0
    %3678 = vmatprep.subr.mxu0 0.0
    %3679 = vmatpush1.msra.mxu0 0.0
    %3680 = vmatprep.subr.mxu0 0.0
    %3681 = vmatpush1.msra.mxu0 0.0
    %3682 = vmatprep.subr.mxu0 0.0
    %3683 = vmatpush1.msra.mxu0 0.0
    %3684 = vmatprep.subr.mxu0 0.0
    %3685 = vmatpush1.msra.mxu0 0.0
    %3686 = vmatprep.subr.mxu0 0.0
    %3687 = vmatpush1.msra.mxu0 0.0
    %3688 = vmatprep.subr.mxu0 0.0
    %3689 = vmatpush1.msra.mxu0 0.0
    %3690 = vmatprep.subr.mxu0 0.0
    %3691 = vmatpush1.msra.mxu0 0.0
    %3692 = vmatprep.subr.mxu0 0.0
    %3693 = vmatpush1.msra.mxu0 0.0
    %3694 = vmatprep.subr.mxu0 0.0
    %3695 = vmatpush1.msra.mxu0 %v3574
    %3696 = vmatprep.subr.mxu0 0.0
    %3697 = vmatpush2.msra.mxu0 0.0
    %3698 = vmatprep.subr.mxu0 0.0
    %3699 = vmatpush2.msra.mxu0 0.0
    %3700 = vmatprep.subr.mxu0 0.0
    %3701 = vmatpush2.msra.mxu0 0.0
    %3702 = vmatprep.subr.mxu0 0.0
    %3703 = vmatpush2.msra.mxu0 0.0
    %3704 = vmatprep.subr.mxu0 0.0
    %3705 = vmatpush2.msra.mxu0 0.0
    %3706 = vmatprep.subr.mxu0 0.0
    %3707 = vmatpush2.msra.mxu0 0.0
    %3708 = vmatprep.subr.mxu0 0.0
    %3709 = vmatpush2.msra.mxu0 0.0
    %3710 = vmatprep.subr.mxu0 0.0
    %3711 = vmatpush2.msra.mxu0 0.0
    %3712 = vmatprep.subr.mxu0 0.0
    %3713 = vmatpush2.msra.mxu0 0.0
    %3714 = vmatprep.subr.mxu0 0.0
    %3715 = vmatpush2.msra.mxu0 0.0
    %3716 = vmatprep.subr.mxu0 0.0
    %3717 = vmatpush2.msra.mxu0 0.0
    %3718 = vmatprep.subr.mxu0 0.0
    %3719 = vmatpush2.msra.mxu0 0.0
    %3720 = vmatprep.subr.mxu0 0.0
    %3721 = vmatpush2.msra.mxu0 0.0
    %3722 = vmatprep.subr.mxu0 0.0
    %3723 = vmatpush2.msra.mxu0 0.0
    %3724 = vmatprep.subr.mxu0 0.0
    %3725 = vmatpush2.msra.mxu0 0.0
    %3726 = vmatprep.subr.mxu0 0.0
    %3727 = vmatpush2.msra.mxu0 0.0
    %3728 = vmatprep.mubr.f32.mxu0 0.0
    %3729 = vmatmul.mubr.f32.gmra.mxu0 %v3659
    %v3730 = vpop.f32.mrf.mxu0
    %v3731 = vadd.f32 0.0, %v3730
    %v3732 = vpop.f32.mrf.mxu0
    %3733 = vmatprep.mubr.f32.mxu0 0.0
    %3734 = vmatmul.mubr.f32.gmra.mxu0 %v3662
    %v3735 = vpop.f32.mrf.mxu0
    %v3736 = vadd.f32 0.0, %v3735
    %v3737 = vpop.f32.mrf.mxu0
    %3738 = vdwg.mxu0
    %v3740 = vsel %vm305, %v3342, 0
    %v3743 = vsel %vm305, %v3418, 0
    %3745 = vmatprep.subr.mxu0 0.0
    %3746 = vmatpush1.msra.mxu0 0.0
    %3747 = vmatprep.subr.mxu0 0.0
    %3748 = vmatpush1.msra.mxu0 0.0
    %3749 = vmatprep.subr.mxu0 0.0
    %3750 = vmatpush1.msra.mxu0 0.0
    %3751 = vmatprep.subr.mxu0 0.0
    %3752 = vmatpush1.msra.mxu0 0.0
    %3753 = vmatprep.subr.mxu0 0.0
    %3754 = vmatpush1.msra.mxu0 0.0
    %3755 = vmatprep.subr.mxu0 0.0
    %3756 = vmatpush1.msra.mxu0 0.0
    %3757 = vmatprep.subr.mxu0 0.0
    %3758 = vmatpush1.msra.mxu0 0.0
    %3759 = vmatprep.subr.mxu0 0.0
    %3760 = vmatpush1.msra.mxu0 0.0
    %3761 = vmatprep.subr.mxu0 0.0
    %3762 = vmatpush1.msra.mxu0 0.0
    %3763 = vmatprep.subr.mxu0 0.0
    %3764 = vmatpush1.msra.mxu0 0.0
    %3765 = vmatprep.subr.mxu0 0.0
    %3766 = vmatpush1.msra.mxu0 0.0
    %3767 = vmatprep.subr.mxu0 0.0
    %3768 = vmatpush1.msra.mxu0 0.0
    %3769 = vmatprep.subr.mxu0 0.0
    %3770 = vmatpush1.msra.mxu0 0.0
    %3771 = vmatprep.subr.mxu0 0.0
    %3772 = vmatpush1.msra.mxu0 0.0
    %3773 = vmatprep.subr.mxu0 0.0
    %3774 = vmatpush1.msra.mxu0 0.0
    %3775 = vmatprep.subr.mxu0 0.0
    %3776 = vmatpush1.msra.mxu0 %v3575
    %3777 = vmatprep.subr.mxu0 0.0
    %3778 = vmatpush2.msra.mxu0 0.0
    %3779 = vmatprep.subr.mxu0 0.0
    %3780 = vmatpush2.msra.mxu0 0.0
    %3781 = vmatprep.subr.mxu0 0.0
    %3782 = vmatpush2.msra.mxu0 0.0
    %3783 = vmatprep.subr.mxu0 0.0
    %3784 = vmatpush2.msra.mxu0 0.0
    %3785 = vmatprep.subr.mxu0 0.0
    %3786 = vmatpush2.msra.mxu0 0.0
    %3787 = vmatprep.subr.mxu0 0.0
    %3788 = vmatpush2.msra.mxu0 0.0
    %3789 = vmatprep.subr.mxu0 0.0
    %3790 = vmatpush2.msra.mxu0 0.0
    %3791 = vmatprep.subr.mxu0 0.0
    %3792 = vmatpush2.msra.mxu0 0.0
    %3793 = vmatprep.subr.mxu0 0.0
    %3794 = vmatpush2.msra.mxu0 0.0
    %3795 = vmatprep.subr.mxu0 0.0
    %3796 = vmatpush2.msra.mxu0 0.0
    %3797 = vmatprep.subr.mxu0 0.0
    %3798 = vmatpush2.msra.mxu0 0.0
    %3799 = vmatprep.subr.mxu0 0.0
    %3800 = vmatpush2.msra.mxu0 0.0
    %3801 = vmatprep.subr.mxu0 0.0
    %3802 = vmatpush2.msra.mxu0 0.0
    %3803 = vmatprep.subr.mxu0 0.0
    %3804 = vmatpush2.msra.mxu0 0.0
    %3805 = vmatprep.subr.mxu0 0.0
    %3806 = vmatpush2.msra.mxu0 0.0
    %3807 = vmatprep.subr.mxu0 0.0
    %3808 = vmatpush2.msra.mxu0 0.0
    %3809 = vmatprep.mubr.f32.mxu0 0.0
    %3810 = vmatmul.mubr.f32.gmra.mxu0 %v3740
    %v3811 = vpop.f32.mrf.mxu0
    %v3812 = vadd.f32 0.0, %v3811
    %v3813 = vpop.f32.mrf.mxu0
    %3814 = vmatprep.mubr.f32.mxu0 0.0
    %3815 = vmatmul.mubr.f32.gmra.mxu0 %v3743
    %v3816 = vpop.f32.mrf.mxu0
    %v3817 = vadd.f32 0.0, %v3816
    %v3818 = vpop.f32.mrf.mxu0
    %3819 = vdwg.mxu0
    %v3821 = vsel %vm305, %v3494, 0
    %v3824 = vsel %vm305, %v3570, 0
    %3826 = vmatprep.subr.mxu0 0.0
    %3827 = vmatpush1.msra.mxu0 0.0
    %3828 = vmatprep.subr.mxu0 0.0
    %3829 = vmatpush1.msra.mxu0 0.0
    %3830 = vmatprep.subr.mxu0 0.0
    %3831 = vmatpush1.msra.mxu0 0.0
    %3832 = vmatprep.subr.mxu0 0.0
    %3833 = vmatpush1.msra.mxu0 0.0
    %3834 = vmatprep.subr.mxu0 0.0
    %3835 = vmatpush1.msra.mxu0 0.0
    %3836 = vmatprep.subr.mxu0 0.0
    %3837 = vmatpush1.msra.mxu0 0.0
    %3838 = vmatprep.subr.mxu0 0.0
    %3839 = vmatpush1.msra.mxu0 0.0
    %3840 = vmatprep.subr.mxu0 0.0
    %3841 = vmatpush1.msra.mxu0 0.0
    %3842 = vmatprep.subr.mxu0 0.0
    %3843 = vmatpush1.msra.mxu0 0.0
    %3844 = vmatprep.subr.mxu0 0.0
    %3845 = vmatpush1.msra.mxu0 0.0
    %3846 = vmatprep.subr.mxu0 0.0
    %3847 = vmatpush1.msra.mxu0 0.0
    %3848 = vmatprep.subr.mxu0 0.0
    %3849 = vmatpush1.msra.mxu0 0.0
    %3850 = vmatprep.subr.mxu0 0.0
    %3851 = vmatpush1.msra.mxu0 0.0
    %3852 = vmatprep.subr.mxu0 0.0
    %3853 = vmatpush1.msra.mxu0 0.0
    %3854 = vmatprep.subr.mxu0 0.0
    %3855 = vmatpush1.msra.mxu0 0.0
    %3856 = vmatprep.subr.mxu0 0.0
    %3857 = vmatpush1.msra.mxu0 %v3576
    %3858 = vmatprep.subr.mxu0 0.0
    %3859 = vmatpush2.msra.mxu0 0.0
    %3860 = vmatprep.subr.mxu0 0.0
    %3861 = vmatpush2.msra.mxu0 0.0
    %3862 = vmatprep.subr.mxu0 0.0
    %3863 = vmatpush2.msra.mxu0 0.0
    %3864 = vmatprep.subr.mxu0 0.0
    %3865 = vmatpush2.msra.mxu0 0.0
    %3866 = vmatprep.subr.mxu0 0.0
    %3867 = vmatpush2.msra.mxu0 0.0
    %3868 = vmatprep.subr.mxu0 0.0
    %3869 = vmatpush2.msra.mxu0 0.0
    %3870 = vmatprep.subr.mxu0 0.0
    %3871 = vmatpush2.msra.mxu0 0.0
    %3872 = vmatprep.subr.mxu0 0.0
    %3873 = vmatpush2.msra.mxu0 0.0
    %3874 = vmatprep.subr.mxu0 0.0
    %3875 = vmatpush2.msra.mxu0 0.0
    %3876 = vmatprep.subr.mxu0 0.0
    %3877 = vmatpush2.msra.mxu0 0.0
    %3878 = vmatprep.subr.mxu0 0.0
    %3879 = vmatpush2.msra.mxu0 0.0
    %3880 = vmatprep.subr.mxu0 0.0
    %3881 = vmatpush2.msra.mxu0 0.0
    %3882 = vmatprep.subr.mxu0 0.0
    %3883 = vmatpush2.msra.mxu0 0.0
    %3884 = vmatprep.subr.mxu0 0.0
    %3885 = vmatpush2.msra.mxu0 0.0
    %3886 = vmatprep.subr.mxu0 0.0
    %3887 = vmatpush2.msra.mxu0 0.0
    %3888 = vmatprep.subr.mxu0 0.0
    %3889 = vmatpush2.msra.mxu0 0.0
    %3890 = vmatprep.mubr.f32.mxu0 0.0
    %3891 = vmatmul.mubr.f32.gmra.mxu0 %v3821
    %v3892 = vpop.f32.mrf.mxu0
    %v3893 = vadd.f32 0.0, %v3892
    %v3894 = vpop.f32.mrf.mxu0
    %3895 = vmatprep.mubr.f32.mxu0 0.0
    %3896 = vmatmul.mubr.f32.gmra.mxu0 %v3824
    %v3897 = vpop.f32.mrf.mxu0
    %v3898 = vadd.f32 0.0, %v3897
    %v3899 = vpop.f32.mrf.mxu0
    %3900 = vdwg.mxu0
    %v3901 = vsel %vm193, %v3650, 0.0
    %v3902 = vsel %vm193, %v3731, 0.0
    %v3903 = vadd.f32 %v3901, %v3902
    %v3904 = vsel %vm193, %v3812, 0.0
    %v3905 = vadd.f32 %v3903, %v3904
    %v3906 = vsel %vm193, %v3893, 0.0
    %v3907 = vadd.f32 %v3905, %v3906
    %v3908 = vsel %vm193, %v3655, 0.0
    %v3909 = vsel %vm193, %v3736, 0.0
    %v3910 = vadd.f32 %v3908, %v3909
    %v3911 = vsel %vm193, %v3817, 0.0
    %v3912 = vadd.f32 %v3910, %v3911
    %v3913 = vsel %vm193, %v3898, 0.0
    %v3914 = vadd.f32 %v3912, %v3913
    %v3915 = vadd.f32 %v2007, %v3907
    %v3916 = vadd.f32 %v2008, %v3914
    %v3917 = vsel %vm193, %v3915, 0.0
    %3918 = vadd.xlane.f32.xlu0 %v3917
    %v3919 = vpop.xlane.xlu0 %3918
    %v3920 = vsel %vm193, %v3916, 0.0
    %3921 = vadd.xlane.f32.xlu0 %v3920
    %v3922 = vpop.xlane.xlu0 %3921
    %v3923 = vmul.f32 %v3919, %v1976
    %v3924 = vmul.f32 %v3922, %v1976
    %v3925 = vsub.f32 %v3915, %v3923
    %v3926 = vsub.f32 %v3916, %v3924
    %v3927 = vmul.f32 %v3925, %v3925
    %v3928 = vmul.f32 %v3926, %v3926
    %v3929 = vsel %vm193, %v3927, 0.0
    %3930 = vadd.xlane.f32.xlu0 %v3929
    %v3931 = vpop.xlane.xlu0 %3930
    %v3932 = vsel %vm193, %v3928, 0.0
    %3933 = vadd.xlane.f32.xlu0 %v3932
    %v3934 = vpop.xlane.xlu0 %3933
    %v3935 = vmul.f32 %v3931, %v1976
    %v3936 = vmul.f32 %v3934, %v1976
    %v3937 = vadd.f32 %v3935, 1e-05
    %v3938 = vadd.f32 %v3936, 1e-05
    %v3939 = vrsqrt.pop %v3937
    %v3940 = vrsqrt.pop %v3938
    %v3941 = vmul.f32 %v3925, %v3939
    %v3942 = vmul.f32 %v3926, %v3940
    %v3943 = vlaneseq
    %v3944 = vshrl.u32 %v3943, 7
    %v3945 = vsub.s32 2, %v3944
    %v3946 = vrot.slane %v111, %v3945
    %v3947 = vmul.f32 %v3941, %v3946
    %v3948 = vmul.f32 %v3942, %v3946
    %v3949 = vlaneseq
    %v3950 = vshrl.u32 %v3949, 7
    %v3951 = vsub.s32 3, %v3950
    %v3952 = vrot.slane %v111, %v3951
    %v3953 = vadd.f32 %v3947, %v3952
    %v3954 = vadd.f32 %v3948, %v3952
    %v3955 = vld [vmem:[#allocation10] sm:$0xff]
    %v3956 = vld [vmem:[#allocation10 + $0x8] sm:$0xff]
    %v3957 = vld [vmem:[#allocation10 + $0x10] sm:$0xff]
    %v3958 = vld [vmem:[#allocation10 + $0x18] sm:$0xff]
    %v3959 = vlaneseq
    %v3960 = vshrl.u32 %v3959, 7
    %v3961 = vsub.s32 7, %v3960
    %v3962 = vrot.slane %v111, %v3961
    %v3964 = vsel %vm193, %v3953, 0
    %v3967 = vsel %vm193, %v3954, 0
    %3969 = vmatprep.subr.mxu0 0.0
    %3970 = vmatpush1.msra.mxu0 0.0
    %3971 = vmatprep.subr.mxu0 0.0
    %3972 = vmatpush1.msra.mxu0 0.0
    %3973 = vmatprep.subr.mxu0 0.0
    %3974 = vmatpush1.msra.mxu0 0.0
    %3975 = vmatprep.subr.mxu0 0.0
    %3976 = vmatpush1.msra.mxu0 0.0
    %3977 = vmatprep.subr.mxu0 0.0
    %3978 = vmatpush1.msra.mxu0 0.0
    %3979 = vmatprep.subr.mxu0 0.0
    %3980 = vmatpush1.msra.mxu0 0.0
    %3981 = vmatprep.subr.mxu0 0.0
    %3982 = vmatpush1.msra.mxu0 0.0
    %3983 = vmatprep.subr.mxu0 0.0
    %3984 = vmatpush1.msra.mxu0 0.0
    %3985 = vmatprep.subr.mxu0 0.0
    %3986 = vmatpush1.msra.mxu0 0.0
    %3987 = vmatprep.subr.mxu0 0.0
    %3988 = vmatpush1.msra.mxu0 0.0
    %3989 = vmatprep.subr.mxu0 0.0
    %3990 = vmatpush1.msra.mxu0 0.0
    %3991 = vmatprep.subr.mxu0 0.0
    %3992 = vmatpush1.msra.mxu0 0.0
    %3993 = vmatprep.subr.mxu0 0.0
    %3994 = vmatpush1.msra.mxu0 %v3958
    %3995 = vmatprep.subr.mxu0 0.0
    %3996 = vmatpush1.msra.mxu0 %v3957
    %3997 = vmatprep.subr.mxu0 0.0
    %3998 = vmatpush1.msra.mxu0 %v3956
    %3999 = vmatprep.subr.mxu0 0.0
    %4000 = vmatpush1.msra.mxu0 %v3955
    %4001 = vmatprep.subr.mxu0 0.0
    %4002 = vmatpush2.msra.mxu0 0.0
    %4003 = vmatprep.subr.mxu0 0.0
    %4004 = vmatpush2.msra.mxu0 0.0
    %4005 = vmatprep.subr.mxu0 0.0
    %4006 = vmatpush2.msra.mxu0 0.0
    %4007 = vmatprep.subr.mxu0 0.0
    %4008 = vmatpush2.msra.mxu0 0.0
    %4009 = vmatprep.subr.mxu0 0.0
    %4010 = vmatpush2.msra.mxu0 0.0
    %4011 = vmatprep.subr.mxu0 0.0
    %4012 = vmatpush2.msra.mxu0 0.0
    %4013 = vmatprep.subr.mxu0 0.0
    %4014 = vmatpush2.msra.mxu0 0.0
    %4015 = vmatprep.subr.mxu0 0.0
    %4016 = vmatpush2.msra.mxu0 0.0
    %4017 = vmatprep.subr.mxu0 0.0
    %4018 = vmatpush2.msra.mxu0 0.0
    %4019 = vmatprep.subr.mxu0 0.0
    %4020 = vmatpush2.msra.mxu0 0.0
    %4021 = vmatprep.subr.mxu0 0.0
    %4022 = vmatpush2.msra.mxu0 0.0
    %4023 = vmatprep.subr.mxu0 0.0
    %4024 = vmatpush2.msra.mxu0 0.0
    %4025 = vmatprep.subr.mxu0 0.0
    %4026 = vmatpush2.msra.mxu0 0.0
    %4027 = vmatprep.subr.mxu0 0.0
    %4028 = vmatpush2.msra.mxu0 0.0
    %4029 = vmatprep.subr.mxu0 0.0
    %4030 = vmatpush2.msra.mxu0 0.0
    %4031 = vmatprep.subr.mxu0 0.0
    %4032 = vmatpush2.msra.mxu0 0.0
    %4033 = vmatprep.mubr.f32.mxu0 0.0
    %4034 = vmatmul.mubr.f32.gmra.mxu0 %v3964
    %v4035 = vpop.f32.mrf.mxu0
    %v4036 = vadd.f32 %v3962, %v4035
    %v4037 = vpop.f32.mrf.mxu0
    %4038 = vmatprep.mubr.f32.mxu0 0.0
    %4039 = vmatmul.mubr.f32.gmra.mxu0 %v3967
    %v4040 = vpop.f32.mrf.mxu0
    %v4041 = vadd.f32 %v3962, %v4040
    %v4042 = vpop.f32.mrf.mxu0
    %4043 = vdwg.mxu0
    %v4044 = vmax.f32 %v4036, 0.0
    %v4045 = vmax.f32 %v4041, 0.0
    %v4046 = vld [vmem:[%s9] sm:$0xff]
    %v4047 = vld [vmem:[%s9 + $0x8] sm:$0xff]
    %v4048 = vld [vmem:[%s9 + $0x10] sm:$0xff]
    %v4049 = vld [vmem:[%s9 + $0x18] sm:$0xff]
    %v4050 = vld [vmem:[%s9 + $0x20] sm:$0xff]
    %v4051 = vld [vmem:[%s9 + $0x28] sm:$0xff]
    %v4052 = vld [vmem:[%s9 + $0x30] sm:$0xff]
    %v4053 = vld [vmem:[%s9 + $0x38] sm:$0xff]
    %v4054 = vlaneseq
    %v4055 = vshrl.u32 %v4054, 7
    %v4056 = vsub.s32 6, %v4055
    %v4057 = vrot.slane %v111, %v4056
    %vm4058 = vcmask 523264
    %v4060 = vsel %vm4058, %v4044, 0
    %v4063 = vsel %vm4058, %v4045, 0
    %4065 = vmatprep.subr.mxu0 0.0
    %4066 = vmatpush1.msra.mxu0 0.0
    %4067 = vmatprep.subr.mxu0 0.0
    %4068 = vmatpush1.msra.mxu0 0.0
    %4069 = vmatprep.subr.mxu0 0.0
    %4070 = vmatpush1.msra.mxu0 0.0
    %4071 = vmatprep.subr.mxu0 0.0
    %4072 = vmatpush1.msra.mxu0 0.0
    %4073 = vmatprep.subr.mxu0 0.0
    %4074 = vmatpush1.msra.mxu0 0.0
    %4075 = vmatprep.subr.mxu0 0.0
    %4076 = vmatpush1.msra.mxu0 0.0
    %4077 = vmatprep.subr.mxu0 0.0
    %4078 = vmatpush1.msra.mxu0 0.0
    %4079 = vmatprep.subr.mxu0 0.0
    %4080 = vmatpush1.msra.mxu0 0.0
    %4081 = vmatprep.subr.mxu0 0.0
    %4082 = vmatpush1.msra.mxu0 %v4053
    %4083 = vmatprep.subr.mxu0 0.0
    %4084 = vmatpush1.msra.mxu0 %v4052
    %4085 = vmatprep.subr.mxu0 0.0
    %4086 = vmatpush1.msra.mxu0 %v4051
    %4087 = vmatprep.subr.mxu0 0.0
    %4088 = vmatpush1.msra.mxu0 %v4050
    %4089 = vmatprep.subr.mxu0 0.0
    %4090 = vmatpush1.msra.mxu0 %v4049
    %4091 = vmatprep.subr.mxu0 0.0
    %4092 = vmatpush1.msra.mxu0 %v4048
    %4093 = vmatprep.subr.mxu0 0.0
    %4094 = vmatpush1.msra.mxu0 %v4047
    %4095 = vmatprep.subr.mxu0 0.0
    %4096 = vmatpush1.msra.mxu0 %v4046
    %4097 = vmatprep.subr.mxu0 0.0
    %4098 = vmatpush2.msra.mxu0 0.0
    %4099 = vmatprep.subr.mxu0 0.0
    %4100 = vmatpush2.msra.mxu0 0.0
    %4101 = vmatprep.subr.mxu0 0.0
    %4102 = vmatpush2.msra.mxu0 0.0
    %4103 = vmatprep.subr.mxu0 0.0
    %4104 = vmatpush2.msra.mxu0 0.0
    %4105 = vmatprep.subr.mxu0 0.0
    %4106 = vmatpush2.msra.mxu0 0.0
    %4107 = vmatprep.subr.mxu0 0.0
    %4108 = vmatpush2.msra.mxu0 0.0
    %4109 = vmatprep.subr.mxu0 0.0
    %4110 = vmatpush2.msra.mxu0 0.0
    %4111 = vmatprep.subr.mxu0 0.0
    %4112 = vmatpush2.msra.mxu0 0.0
    %4113 = vmatprep.subr.mxu0 0.0
    %4114 = vmatpush2.msra.mxu0 0.0
    %4115 = vmatprep.subr.mxu0 0.0
    %4116 = vmatpush2.msra.mxu0 0.0
    %4117 = vmatprep.subr.mxu0 0.0
    %4118 = vmatpush2.msra.mxu0 0.0
    %4119 = vmatprep.subr.mxu0 0.0
    %4120 = vmatpush2.msra.mxu0 0.0
    %4121 = vmatprep.subr.mxu0 0.0
    %4122 = vmatpush2.msra.mxu0 0.0
    %4123 = vmatprep.subr.mxu0 0.0
    %4124 = vmatpush2.msra.mxu0 0.0
    %4125 = vmatprep.subr.mxu0 0.0
    %4126 = vmatpush2.msra.mxu0 0.0
    %4127 = vmatprep.subr.mxu0 0.0
    %4128 = vmatpush2.msra.mxu0 0.0
    %4129 = vmatprep.mubr.f32.mxu0 0.0
    %4130 = vmatmul.mubr.f32.gmra.mxu0 %v4060
    %v4131 = vpop.f32.mrf.mxu0
    %v4132 = vadd.f32 %v4057, %v4131
    %v4133 = vpop.f32.mrf.mxu0
    %4134 = vmatprep.mubr.f32.mxu0 0.0
    %4135 = vmatmul.mubr.f32.gmra.mxu0 %v4063
    %v4136 = vpop.f32.mrf.mxu0
    %v4137 = vadd.f32 %v4057, %v4136
    %v4138 = vpop.f32.mrf.mxu0
    %4139 = vdwg.mxu0
    %v4140 = vadd.f32 %v3953, %v4132
    %v4141 = vadd.f32 %v3954, %v4137
    %v4142 = vsel %vm193, %v4140, 0.0
    %4143 = vadd.xlane.f32.xlu0 %v4142
    %v4144 = vpop.xlane.xlu0 %4143
    %v4145 = vsel %vm193, %v4141, 0.0
    %4146 = vadd.xlane.f32.xlu0 %v4145
    %v4147 = vpop.xlane.xlu0 %4146
    %v4148 = vmul.f32 %v4144, %v1976
    %v4149 = vmul.f32 %v4147, %v1976
    %v4150 = vsub.f32 %v4140, %v4148
    %v4151 = vsub.f32 %v4141, %v4149
    %v4152 = vmul.f32 %v4150, %v4150
    %v4153 = vmul.f32 %v4151, %v4151
    %v4154 = vsel %vm193, %v4152, 0.0
    %4155 = vadd.xlane.f32.xlu0 %v4154
    %v4156 = vpop.xlane.xlu0 %4155
    %v4157 = vsel %vm193, %v4153, 0.0
    %4158 = vadd.xlane.f32.xlu0 %v4157
    %v4159 = vpop.xlane.xlu0 %4158
    %v4160 = vmul.f32 %v4156, %v1976
    %v4161 = vmul.f32 %v4159, %v1976
    %v4162 = vadd.f32 %v4160, 1e-05
    %v4163 = vadd.f32 %v4161, 1e-05
    %v4164 = vrsqrt.pop %v4162
    %v4165 = vrsqrt.pop %v4163
    %v4166 = vmul.f32 %v4150, %v4164
    %v4167 = vmul.f32 %v4151, %v4165
    %v4168 = vlaneseq
    %v4169 = vshrl.u32 %v4168, 7
    %v4170 = vsub.s32 4, %v4169
    %v4171 = vrot.slane %v111, %v4170
    %v4172 = vmul.f32 %v4166, %v4171
    %v4173 = vmul.f32 %v4167, %v4171
    %v4174 = vlaneseq
    %v4175 = vshrl.u32 %v4174, 7
    %v4176 = vsub.s32 5, %v4175
    %v4177 = vrot.slane %v111, %v4176
    %v4178 = vadd.f32 %v4172, %v4177
    %v4179 = vadd.f32 %v4173, %v4177
    %4180 = vst.msk [vmem:[#allocation11] sm:$0xff] %vm193, %v4178
    %4181 = vst.msk [vmem:[#allocation11 + $0x8] sm:$0xff] %vm193, %v4179
    // Predicated region
    $region66: #{tpu_custom_call.1} parent=1 // pred_check
      _
    $region67: #{tpu_custom_call.1} parent=1 // pred_check_branch
      %4183 = sbr.rel (0) target = $region69
    $region68: #{tpu_custom_call.1} parent=1 // pred_region
      %s4185 = ssub.s32 256, 256
      %4186 = vsyncadd [#allocation4], %s4185
      %s4187 = sshll.u32 [#allocation11], 4
      %s4188 = int_to_ptr.vmem [resolvable:$true] %s4187
      %4193 = dma.vmem_to_hbm [thread:$0]  %s4188, 256, %s11, [#allocation4], 128, 128, 8
    $region69: #{tpu_custom_call.1} parent=1 // pred_fallthru
      _
    // Predicated region
    $region70: #{tpu_custom_call.1} parent=1 // pred_check
      _
    $region71: #{tpu_custom_call.1} parent=1 // pred_check_branch
      %4195 = sbr.rel (0) target = $region73
    $region72: #{tpu_custom_call.1} parent=1 // pred_region
      %4196 = dma.done [#allocation4], 256
    $region73: #{tpu_custom_call.1} parent=1 // pred_fallthru
      _
    %4197 = vsyncpa [#allocation3], 1
    %4198 = vsyncpa [#allocation6], 1
    %4199 = vsyncpa [#allocation9], 1
    %4200 = vsyncpa [#allocation4], 1

</llo_original>
